<compile_context>
chip_gen: v6e
topology: v6e:2x2x1
jax: 0.10.0
libtpu: 0.0.40
codegen_flags: <defaults>
</compile_context>

<pallas_src>
import numpy as np
import jax
import jax.numpy as jnp
from jax.experimental import pallas as pl
from jax.experimental.pallas import tpu as pltpu

BN_EPS = 1e-5
IN_HW = 32   # input spatial size (square)
IN_C = 3     # input channels

# (mode, k, stride, pad, cin, cout, pool=(kernel,stride) or None, has_bn)
LAYERS = (
    ("conv",  3, 3, 1, 3,  32, (2, 2), True),   # Conv2d(3,32,3,s3,p1)  +ReLU+BN+MaxPool(2,2)
    ("conv",  3, 2, 1, 32, 64, (2, 1), True),   # Conv2d(32,64,3,s2,p1) +ReLU+BN+MaxPool(2,1)
    ("tconv", 3, 2, 0, 64, 32, None,   True),   # ConvT(64,32,3,s2)     +ReLU+BN
    ("tconv", 5, 3, 1, 32, 16, None,   True),   # ConvT(32,16,5,s3,p1)  +ReLU+BN
    ("tconv", 2, 2, 1, 16, 3,  None,   False),  # ConvT(16,3,2,s2,p1)   +Tanh
)

_PARAM_NAMES = (
    ("enc_conv1_w",  "enc_conv1_b",  "enc_bn1_scale", "enc_bn1_shift"),
    ("enc_conv2_w",  "enc_conv2_b",  "enc_bn2_scale", "enc_bn2_shift"),
    ("dec_tconv1_w", "dec_tconv1_b", "dec_bn1_scale", "dec_bn1_shift"),
    ("dec_tconv2_w", "dec_tconv2_b", "dec_bn2_scale", "dec_bn2_shift"),
    ("dec_tconv3_w", "dec_tconv3_b", None,            None),
)


# ------------------------------ fused kernel --------------------------------

def _fused_forward_kernel(*refs):
    """refs = (x_ref, [rh, mw, aux] per layer ..., o_ref).

    x_ref : (1, H0, W0*C0)            one batch element, channels fastest.
    rh    : (k, Ho, Hd_in)            one-hot row selection per kernel-row tap.
    mw    : (k, Wd_in*Cin, Wo*Cout)   column selection fused with weights.
    aux   : (3, Wo*Cout)=[bias;scale;shift]  or (1, Wo*Cout)=[bias] (last layer).
    o_ref : (1, Ho_last, Wo_last*Cout_last)
    """
    x_ref, o_ref = refs[0], refs[-1]
    layer_refs = refs[1:-1]

    a = x_ref[0]                                      # (H, W*C) f32 in VMEM
    r = 0
    for (mode, k, stride, pad, cin, cout, pool, has_bn) in LAYERS:
        rh_ref, mw_ref, aux_ref = layer_refs[r], layer_refs[r + 1], layer_refs[r + 2]
        r += 3

        # Conv / ConvTranspose as  sum_i RH_i @ A @ MW_i  (implicit im2col,
        # implicit zero padding, sub-pixel ConvTranspose scatter — all folded
        # into host-built matrices -> two small MXU matmuls per kernel row).
        acc = None
        for i in range(k):
            t = jnp.dot(rh_ref[i], a, preferred_element_type=jnp.float32)
            t = jnp.dot(t, mw_ref[i], preferred_element_type=jnp.float32)
            acc = t if acc is None else acc + t

        bias = aux_ref[0:1, :]                        # (1, Wo*Cout), row broadcast
        if has_bn:
            a = jnp.maximum(acc + bias, 0.0) * aux_ref[1:2, :] + aux_ref[2:3, :]
        else:
            a = jnp.tanh(acc + bias)

        if pool is not None:
            # Fused MaxPool2d(kernel=2): dense stride-1 2x2 max map via two
            # shifted element-wise maxima; the pool *stride* is folded into
            # the next layer's selection matrices on the host.
            h, wc = a.shape
            rows = jnp.maximum(a[: h - 1, :], a[1:, :])
            a = jnp.maximum(rows[:, : wc - cout], rows[:, cout:])

    o_ref[0] = a


# -------------------------- host-side matrix prep ---------------------------

def _one_hot_selection(mode, hl_in, step_in, hd_in, k, stride, pad, ho):
    """(k, ho, hd_in) one-hot tap-selection matrices (numpy constants).

    conv : sel[i,oh,hd]=1  iff hl = stride*oh + i - pad is in [0, hl_in)
                               and hd == step_in*hl
    tconv: sel[i,oh,hd]=1  iff exists hl in [0, hl_in) with
                               oh == stride*hl + i - pad and hd == step_in*hl
    `step_in` > 1 folds the stride of a preceding MaxPool (whose dense
    stride-1 max map is what the kernel actually holds).
    """
    m = np.zeros((k, ho, hd_in), np.float32)
    for i in range(k):
        if mode == "conv":
            for oh in range(ho):
                hl = stride * oh + i - pad
                if 0 <= hl < hl_in:
                    m[i, oh, step_in * hl] = 1.0
        else:
            for hl in range(hl_in):
                oh = stride * hl + i - pad
                if 0 <= oh < ho:
                    m[i, oh, step_in * hl] = 1.0
    return m


def _layer_matrices(mode, w_kkio, hl_in, step_in, hd_in, stride, pad):
    """w_kkio: (k, k, cin, cout).  Returns rh (k, ho, hd_in),
    mw (k, hd_in*cin, ho*cout), ho.  Square kernels/strides/pads assumed."""
    k, _, cin, cout = w_kkio.shape
    if mode == "conv":
        ho = (hl_in + 2 * pad - k) // stride + 1
    else:
        ho = (hl_in - 1) * stride - 2 * pad + k
    sel = jnp.asarray(
        _one_hot_selection(mode, hl_in, step_in, hd_in, k, stride, pad, ho))
    # mw[i, wd, ci, ow, co] = sum_j sel[j, ow, wd] * w[i, j, ci, co]
    mw = jnp.einsum("jow,ijcd->iwcod", sel, w_kkio.astype(jnp.float32))
    mw = mw.reshape(k, hd_in * cin, ho * cout)
    return sel, mw, ho


def _tile_row(v, wo):
    """Per-channel vector -> (1, wo*C) row matching the (w, c) lane layout."""
    return jnp.tile(v.astype(jnp.float32), (wo,)).reshape(1, -1)


def prepare_inputs(params):
    """Builds the flat tuple of kernel operands (selection/weight matrices and
    fused bias/BN rows) from PyTorch-layout parameters.  Called once."""
    flat = []
    hl, step, hd, c = IN_HW, 1, IN_HW, IN_C
    for cfg, names in zip(LAYERS, _PARAM_NAMES):
        mode, k, stride, pad, cin, cout, pool, has_bn = cfg
        w_name, b_name, sc_name, sh_name = names
        assert cin == c
        w = params[w_name]
        if mode == "conv":     # (cout, cin, kh, kw) -> (kh, kw, cin, cout)
            wk = jnp.transpose(w, (2, 3, 1, 0))
        else:                  # (cin, cout, kh, kw) -> (kh, kw, cin, cout)
            wk = jnp.transpose(w, (2, 3, 0, 1))
        rh, mw, ho = _layer_matrices(mode, wk, hl, step, hd, stride, pad)
        rows = [_tile_row(params[b_name], ho)]
        if has_bn:
            rows += [_tile_row(params[sc_name], ho), _tile_row(params[sh_name], ho)]
        aux = jnp.concatenate(rows, axis=0)
        flat += [rh, mw, aux]
        hl, step, hd, c = ho, 1, ho, cout
        if pool is not None:
            pk, ps = pool
            assert pk == 2
            hl = (hl - pk) // ps + 1   # logical pooled size (floor mode)
            hd = hd - 1                # dense stride-1 max-map size
            step = ps                  # pool stride folded into next layer
    return tuple(flat)


# ------------------------------ forward pass --------------------------------

def autoencoder_forward(prepared, x_nchw):
    n, c, h, w = x_nchw.shape
    x = jnp.transpose(x_nchw, (0, 2, 3, 1)).reshape(n, h, w * c).astype(jnp.float32)

    out_c = LAYERS[-1][5]
    out_h = prepared[-3].shape[1]     # rows of last rh   (28)
    out_wc = prepared[-2].shape[2]    # cols of last mw   (28*3)
    out_w = out_wc // out_c

    def bcast_spec(arr):
        nd = arr.ndim
        return pl.BlockSpec(arr.shape, lambda b, _nd=nd: (0,) * _nd)

    in_specs = [pl.BlockSpec((1, h, w * c), lambda b: (b, 0, 0))]
    in_specs += [bcast_spec(a) for a in prepared]
    out_specs = pl.BlockSpec((1, out_h, out_wc), lambda b: (b, 0, 0))

    y = pl.pallas_call(
        _fused_forward_kernel,
        out_shape=jax.ShapeDtypeStruct((n, out_h, out_wc), jnp.float32),
        grid=(n,),
        in_specs=in_specs,
        out_specs=out_specs,
        compiler_params=pltpu.CompilerParams(
            dimension_semantics=("parallel",)),
    )(x, *prepared)

    y = y.reshape(n, out_h, out_w, out_c)
    return jnp.transpose(y, (0, 3, 1, 2))   # NHWC -> NCHW


# --------------------------- parameter creation -----------------------------

def _bn_affine(key, c):
    k1, k2, k3, k4 = jax.random.split(key, 4)
    gamma = 1.0 + 0.1 * jax.random.normal(k1, (c,), jnp.float32)
    beta = 0.1 * jax.random.normal(k2, (c,), jnp.float32)
    running_mean = 0.1 * jax.random.normal(k3, (c,), jnp.float32)
    running_var = jax.random.uniform(k4, (c,), jnp.float32, 0.5, 1.5)
    scale = gamma / jnp.sqrt(running_var + BN_EPS)
    shift = beta - running_mean * scale
    return scale, shift


def init_params(key):
    ks = jax.random.split(key, 11)

    def conv_w(k, cout, cin, kh, kw):
        fan_in = cin * kh * kw
        return jax.random.normal(k, (cout, cin, kh, kw), jnp.float32) / jnp.sqrt(fan_in)

    def tconv_w(k, cin, cout, kh, kw):
        fan_in = cin * kh * kw
        return jax.random.normal(k, (cin, cout, kh, kw), jnp.float32) / jnp.sqrt(fan_in)

    def bias(k, c):
        return 0.1 * jax.random.normal(k, (c,), jnp.float32)

    p = {}
    # encoder
    p["enc_conv1_w"] = conv_w(ks[0], 32, 3, 3, 3)
    p["enc_conv1_b"] = bias(ks[1], 32)
    p["enc_bn1_scale"], p["enc_bn1_shift"] = _bn_affine(ks[2], 32)
    p["enc_conv2_w"] = conv_w(ks[3], 64, 32, 3, 3)
    p["enc_conv2_b"] = bias(ks[4], 64)
    p["enc_bn2_scale"], p["enc_bn2_shift"] = _bn_affine(ks[5], 64)
    # decoder
    p["dec_tconv1_w"] = tconv_w(ks[6], 64, 32, 3, 3)
    p["dec_tconv1_b"] = bias(ks[7], 32)
    p["dec_bn1_scale"], p["dec_bn1_shift"] = _bn_affine(ks[8], 32)
    p["dec_tconv2_w"] = tconv_w(ks[9], 32, 16, 5, 5)
    p["dec_tconv2_b"] = bias(ks[10], 16)
    k2 = jax.random.split(ks[10], 4)
    p["dec_bn2_scale"], p["dec_bn2_shift"] = _bn_affine(k2[0], 16)
    p["dec_tconv3_w"] = tconv_w(k2[1], 16, 3, 2, 2)
    p["dec_tconv3_b"] = bias(k2[2], 3)
    return p


# ---------------------------------- main -------------------------------------

if __name__ == "__main__":
    key = jax.random.PRNGKey(0)
    pkey, xkey = jax.random.split(key)
    params = init_params(pkey)
    prepared = prepare_inputs(params)

    # Input consistent with the module: NCHW, 3 input channels, 32x32 spatial.
    x = jax.random.normal(xkey, (2, 3, 32, 32), jnp.float32)

    fwd = jax.jit(autoencoder_forward)
    y = fwd(prepared, x)
    jax.block_until_ready(y)

    # 32x32 input -> encoder 2x2x64 -> decoder 28x28x3 (matches PyTorch arithmetic).
    assert y.shape == (2, 3, 28, 28), y.shape
    assert bool(jnp.all(jnp.isfinite(y)))
    assert bool(jnp.all(jnp.abs(y) <= 1.0 + 1e-6))  # tanh output range
    print("KERNEL_OK")
</pallas_src>

<mosaic_0001>
module attributes {stable_mosaic.version = 11 : i64} {
  func.func @_fused_forward_kernel(%arg0: i32, %arg1: memref<1x32x96xf32, #tpu.memory_space<vmem>>, %arg2: memref<3x11x32xf32, #tpu.memory_space<vmem>>, %arg3: memref<3x96x352xf32, #tpu.memory_space<vmem>>, %arg4: memref<3x352xf32, #tpu.memory_space<vmem>>, %arg5: memref<3x3x10xf32, #tpu.memory_space<vmem>>, %arg6: memref<3x320x192xf32, #tpu.memory_space<vmem>>, %arg7: memref<3x192xf32, #tpu.memory_space<vmem>>, %arg8: memref<3x5x2xf32, #tpu.memory_space<vmem>>, %arg9: memref<3x128x160xf32, #tpu.memory_space<vmem>>, %arg10: memref<3x160xf32, #tpu.memory_space<vmem>>, %arg11: memref<5x15x5xf32, #tpu.memory_space<vmem>>, %arg12: memref<5x160x240xf32, #tpu.memory_space<vmem>>, %arg13: memref<3x240xf32, #tpu.memory_space<vmem>>, %arg14: memref<2x28x15xf32, #tpu.memory_space<vmem>>, %arg15: memref<2x240x84xf32, #tpu.memory_space<vmem>>, %arg16: memref<1x84xf32, #tpu.memory_space<vmem>>, %arg17: memref<1x28x84xf32, #tpu.memory_space<vmem>>) attributes {dimension_semantics = [#tpu.dimension_semantics<parallel>], iteration_bounds = array<i64: 2>, scalar_prefetch = 0 : i64, scratch_operands = 0 : i64, tpu.core_type = #tpu.core_type<tc>, window_params = [{transform_indices = @transform_0, window_bounds = array<i64: 1, 32, 96>}, {pipeline_mode = #tpu.pipeline_mode<synchronous>, transform_indices = @transform_1, window_bounds = array<i64: 3, 11, 32>}, {pipeline_mode = #tpu.pipeline_mode<synchronous>, transform_indices = @transform_2, window_bounds = array<i64: 3, 96, 352>}, {pipeline_mode = #tpu.pipeline_mode<synchronous>, transform_indices = @transform_3, window_bounds = array<i64: 3, 352>}, {pipeline_mode = #tpu.pipeline_mode<synchronous>, transform_indices = @transform_4, window_bounds = array<i64: 3, 3, 10>}, {pipeline_mode = #tpu.pipeline_mode<synchronous>, transform_indices = @transform_5, window_bounds = array<i64: 3, 320, 192>}, {pipeline_mode = #tpu.pipeline_mode<synchronous>, transform_indices = @transform_6, window_bounds = array<i64: 3, 192>}, {pipeline_mode = #tpu.pipeline_mode<synchronous>, transform_indices = @transform_7, window_bounds = array<i64: 3, 5, 2>}, {pipeline_mode = #tpu.pipeline_mode<synchronous>, transform_indices = @transform_8, window_bounds = array<i64: 3, 128, 160>}, {pipeline_mode = #tpu.pipeline_mode<synchronous>, transform_indices = @transform_9, window_bounds = array<i64: 3, 160>}, {pipeline_mode = #tpu.pipeline_mode<synchronous>, transform_indices = @transform_10, window_bounds = array<i64: 5, 15, 5>}, {pipeline_mode = #tpu.pipeline_mode<synchronous>, transform_indices = @transform_11, window_bounds = array<i64: 5, 160, 240>}, {pipeline_mode = #tpu.pipeline_mode<synchronous>, transform_indices = @transform_12, window_bounds = array<i64: 3, 240>}, {pipeline_mode = #tpu.pipeline_mode<synchronous>, transform_indices = @transform_13, window_bounds = array<i64: 2, 28, 15>}, {pipeline_mode = #tpu.pipeline_mode<synchronous>, transform_indices = @transform_14, window_bounds = array<i64: 2, 240, 84>}, {pipeline_mode = #tpu.pipeline_mode<synchronous>, transform_indices = @transform_15, window_bounds = array<i64: 1, 84>}, {transform_indices = @transform_16, window_bounds = array<i64: 1, 28, 84>}]} {
    %c0 = arith.constant 0 : index
    %c0_0 = arith.constant 0 : index
    %c0_1 = arith.constant 0 : index
    %0 = vector.load %arg1[%c0, %c0_0, %c0_1] : memref<1x32x96xf32, #tpu.memory_space<vmem>>, vector<1x32x96xf32>
    %1 = vector.shape_cast %0 : vector<1x32x96xf32> to vector<32x96xf32>
    %c0_2 = arith.constant 0 : index
    %c0_3 = arith.constant 0 : index
    %c0_4 = arith.constant 0 : index
    %2 = vector.load %arg2[%c0_2, %c0_3, %c0_4] : memref<3x11x32xf32, #tpu.memory_space<vmem>>, vector<1x11x32xf32>
    %3 = vector.shape_cast %2 : vector<1x11x32xf32> to vector<11x32xf32>
    %cst = arith.constant dense<0.000000e+00> : vector<11x96xf32>
    %4 = tpu.matmul %3, %1, %cst {dimension_numbers = #tpu.dot_dimension_numbers<[1], [0], [0], [1], [0, 0, 1, 1], [], []>} : vector<11x32xf32>, vector<32x96xf32>, vector<11x96xf32> -> vector<11x96xf32>
    %c0_5 = arith.constant 0 : index
    %c0_6 = arith.constant 0 : index
    %c0_7 = arith.constant 0 : index
    %5 = vector.load %arg3[%c0_5, %c0_6, %c0_7] : memref<3x96x352xf32, #tpu.memory_space<vmem>>, vector<1x96x352xf32>
    %6 = vector.shape_cast %5 : vector<1x96x352xf32> to vector<96x352xf32>
    %cst_8 = arith.constant dense<0.000000e+00> : vector<11x352xf32>
    %7 = tpu.matmul %4, %6, %cst_8 {dimension_numbers = #tpu.dot_dimension_numbers<[1], [0], [0], [1], [0, 0, 1, 1], [], []>} : vector<11x96xf32>, vector<96x352xf32>, vector<11x352xf32> -> vector<11x352xf32>
    %c1 = arith.constant 1 : index
    %c0_9 = arith.constant 0 : index
    %c0_10 = arith.constant 0 : index
    %8 = vector.load %arg2[%c1, %c0_9, %c0_10] : memref<3x11x32xf32, #tpu.memory_space<vmem>>, vector<1x11x32xf32>
    %9 = vector.shape_cast %8 : vector<1x11x32xf32> to vector<11x32xf32>
    %cst_11 = arith.constant dense<0.000000e+00> : vector<11x96xf32>
    %10 = tpu.matmul %9, %1, %cst_11 {dimension_numbers = #tpu.dot_dimension_numbers<[1], [0], [0], [1], [0, 0, 1, 1], [], []>} : vector<11x32xf32>, vector<32x96xf32>, vector<11x96xf32> -> vector<11x96xf32>
    %c1_12 = arith.constant 1 : index
    %c0_13 = arith.constant 0 : index
    %c0_14 = arith.constant 0 : index
    %11 = vector.load %arg3[%c1_12, %c0_13, %c0_14] : memref<3x96x352xf32, #tpu.memory_space<vmem>>, vector<1x96x352xf32>
    %12 = vector.shape_cast %11 : vector<1x96x352xf32> to vector<96x352xf32>
    %cst_15 = arith.constant dense<0.000000e+00> : vector<11x352xf32>
    %13 = tpu.matmul %10, %12, %cst_15 {dimension_numbers = #tpu.dot_dimension_numbers<[1], [0], [0], [1], [0, 0, 1, 1], [], []>} : vector<11x96xf32>, vector<96x352xf32>, vector<11x352xf32> -> vector<11x352xf32>
    %14 = arith.addf %7, %13 : vector<11x352xf32>
    %c2 = arith.constant 2 : index
    %c0_16 = arith.constant 0 : index
    %c0_17 = arith.constant 0 : index
    %15 = vector.load %arg2[%c2, %c0_16, %c0_17] : memref<3x11x32xf32, #tpu.memory_space<vmem>>, vector<1x11x32xf32>
    %16 = vector.shape_cast %15 : vector<1x11x32xf32> to vector<11x32xf32>
    %cst_18 = arith.constant dense<0.000000e+00> : vector<11x96xf32>
    %17 = tpu.matmul %16, %1, %cst_18 {dimension_numbers = #tpu.dot_dimension_numbers<[1], [0], [0], [1], [0, 0, 1, 1], [], []>} : vector<11x32xf32>, vector<32x96xf32>, vector<11x96xf32> -> vector<11x96xf32>
    %c2_19 = arith.constant 2 : index
    %c0_20 = arith.constant 0 : index
    %c0_21 = arith.constant 0 : index
    %18 = vector.load %arg3[%c2_19, %c0_20, %c0_21] : memref<3x96x352xf32, #tpu.memory_space<vmem>>, vector<1x96x352xf32>
    %19 = vector.shape_cast %18 : vector<1x96x352xf32> to vector<96x352xf32>
    %cst_22 = arith.constant dense<0.000000e+00> : vector<11x352xf32>
    %20 = tpu.matmul %17, %19, %cst_22 {dimension_numbers = #tpu.dot_dimension_numbers<[1], [0], [0], [1], [0, 0, 1, 1], [], []>} : vector<11x96xf32>, vector<96x352xf32>, vector<11x352xf32> -> vector<11x352xf32>
    %21 = arith.addf %14, %20 : vector<11x352xf32>
    %c0_23 = arith.constant 0 : index
    %c0_24 = arith.constant 0 : index
    %22 = vector.load %arg4[%c0_23, %c0_24] : memref<3x352xf32, #tpu.memory_space<vmem>>, vector<1x352xf32>
    %23 = vector.broadcast %22 : vector<1x352xf32> to vector<11x352xf32>
    %24 = arith.addf %21, %23 : vector<11x352xf32>
    %cst_25 = arith.constant 0.000000e+00 : f32
    %25 = vector.broadcast %cst_25 : f32 to vector<11x352xf32>
    %26 = arith.maximumf %24, %25 : vector<11x352xf32>
    %c1_26 = arith.constant 1 : index
    %c0_27 = arith.constant 0 : index
    %27 = vector.load %arg4[%c1_26, %c0_27] : memref<3x352xf32, #tpu.memory_space<vmem>>, vector<1x352xf32>
    %28 = vector.broadcast %27 : vector<1x352xf32> to vector<11x352xf32>
    %29 = arith.mulf %26, %28 : vector<11x352xf32>
    %c2_28 = arith.constant 2 : index
    %c0_29 = arith.constant 0 : index
    %30 = vector.load %arg4[%c2_28, %c0_29] : memref<3x352xf32, #tpu.memory_space<vmem>>, vector<1x352xf32>
    %31 = vector.broadcast %30 : vector<1x352xf32> to vector<11x352xf32>
    %32 = arith.addf %29, %31 : vector<11x352xf32>
    %33 = vector.extract_strided_slice %32 {offsets = [0, 0], sizes = [10, 352], strides = [1, 1]} : vector<11x352xf32> to vector<10x352xf32>
    %34 = vector.extract_strided_slice %32 {offsets = [1, 0], sizes = [10, 352], strides = [1, 1]} : vector<11x352xf32> to vector<10x352xf32>
    %35 = arith.maximumf %33, %34 : vector<10x352xf32>
    %36 = vector.extract_strided_slice %35 {offsets = [0, 0], sizes = [10, 320], strides = [1, 1]} : vector<10x352xf32> to vector<10x320xf32>
    %37 = vector.extract_strided_slice %35 {offsets = [0, 32], sizes = [10, 320], strides = [1, 1]} : vector<10x352xf32> to vector<10x320xf32>
    %38 = arith.maximumf %36, %37 : vector<10x320xf32>
    %c0_30 = arith.constant 0 : index
    %c0_31 = arith.constant 0 : index
    %c0_32 = arith.constant 0 : index
    %39 = vector.load %arg5[%c0_30, %c0_31, %c0_32] : memref<3x3x10xf32, #tpu.memory_space<vmem>>, vector<1x3x10xf32>
    %40 = vector.shape_cast %39 : vector<1x3x10xf32> to vector<3x10xf32>
    %cst_33 = arith.constant dense<0.000000e+00> : vector<3x320xf32>
    %41 = tpu.matmul %40, %38, %cst_33 {dimension_numbers = #tpu.dot_dimension_numbers<[1], [0], [0], [1], [0, 0, 1, 1], [], []>} : vector<3x10xf32>, vector<10x320xf32>, vector<3x320xf32> -> vector<3x320xf32>
    %c0_34 = arith.constant 0 : index
    %c0_35 = arith.constant 0 : index
    %c0_36 = arith.constant 0 : index
    %42 = vector.load %arg6[%c0_34, %c0_35, %c0_36] : memref<3x320x192xf32, #tpu.memory_space<vmem>>, vector<1x320x192xf32>
    %43 = vector.shape_cast %42 : vector<1x320x192xf32> to vector<320x192xf32>
    %cst_37 = arith.constant dense<0.000000e+00> : vector<3x192xf32>
    %44 = tpu.matmul %41, %43, %cst_37 {dimension_numbers = #tpu.dot_dimension_numbers<[1], [0], [0], [1], [0, 0, 1, 1], [], []>} : vector<3x320xf32>, vector<320x192xf32>, vector<3x192xf32> -> vector<3x192xf32>
    %c1_38 = arith.constant 1 : index
    %c0_39 = arith.constant 0 : index
    %c0_40 = arith.constant 0 : index
    %45 = vector.load %arg5[%c1_38, %c0_39, %c0_40] : memref<3x3x10xf32, #tpu.memory_space<vmem>>, vector<1x3x10xf32>
    %46 = vector.shape_cast %45 : vector<1x3x10xf32> to vector<3x10xf32>
    %cst_41 = arith.constant dense<0.000000e+00> : vector<3x320xf32>
    %47 = tpu.matmul %46, %38, %cst_41 {dimension_numbers = #tpu.dot_dimension_numbers<[1], [0], [0], [1], [0, 0, 1, 1], [], []>} : vector<3x10xf32>, vector<10x320xf32>, vector<3x320xf32> -> vector<3x320xf32>
    %c1_42 = arith.constant 1 : index
    %c0_43 = arith.constant 0 : index
    %c0_44 = arith.constant 0 : index
    %48 = vector.load %arg6[%c1_42, %c0_43, %c0_44] : memref<3x320x192xf32, #tpu.memory_space<vmem>>, vector<1x320x192xf32>
    %49 = vector.shape_cast %48 : vector<1x320x192xf32> to vector<320x192xf32>
    %cst_45 = arith.constant dense<0.000000e+00> : vector<3x192xf32>
    %50 = tpu.matmul %47, %49, %cst_45 {dimension_numbers = #tpu.dot_dimension_numbers<[1], [0], [0], [1], [0, 0, 1, 1], [], []>} : vector<3x320xf32>, vector<320x192xf32>, vector<3x192xf32> -> vector<3x192xf32>
    %51 = arith.addf %44, %50 : vector<3x192xf32>
    %c2_46 = arith.constant 2 : index
    %c0_47 = arith.constant 0 : index
    %c0_48 = arith.constant 0 : index
    %52 = vector.load %arg5[%c2_46, %c0_47, %c0_48] : memref<3x3x10xf32, #tpu.memory_space<vmem>>, vector<1x3x10xf32>
    %53 = vector.shape_cast %52 : vector<1x3x10xf32> to vector<3x10xf32>
    %cst_49 = arith.constant dense<0.000000e+00> : vector<3x320xf32>
    %54 = tpu.matmul %53, %38, %cst_49 {dimension_numbers = #tpu.dot_dimension_numbers<[1], [0], [0], [1], [0, 0, 1, 1], [], []>} : vector<3x10xf32>, vector<10x320xf32>, vector<3x320xf32> -> vector<3x320xf32>
    %c2_50 = arith.constant 2 : index
    %c0_51 = arith.constant 0 : index
    %c0_52 = arith.constant 0 : index
    %55 = vector.load %arg6[%c2_50, %c0_51, %c0_52] : memref<3x320x192xf32, #tpu.memory_space<vmem>>, vector<1x320x192xf32>
    %56 = vector.shape_cast %55 : vector<1x320x192xf32> to vector<320x192xf32>
    %cst_53 = arith.constant dense<0.000000e+00> : vector<3x192xf32>
    %57 = tpu.matmul %54, %56, %cst_53 {dimension_numbers = #tpu.dot_dimension_numbers<[1], [0], [0], [1], [0, 0, 1, 1], [], []>} : vector<3x320xf32>, vector<320x192xf32>, vector<3x192xf32> -> vector<3x192xf32>
    %58 = arith.addf %51, %57 : vector<3x192xf32>
    %c0_54 = arith.constant 0 : index
    %c0_55 = arith.constant 0 : index
    %59 = vector.load %arg7[%c0_54, %c0_55] : memref<3x192xf32, #tpu.memory_space<vmem>>, vector<1x192xf32>
    %60 = vector.broadcast %59 : vector<1x192xf32> to vector<3x192xf32>
    %61 = arith.addf %58, %60 : vector<3x192xf32>
    %cst_56 = arith.constant 0.000000e+00 : f32
    %62 = vector.broadcast %cst_56 : f32 to vector<3x192xf32>
    %63 = arith.maximumf %61, %62 : vector<3x192xf32>
    %c1_57 = arith.constant 1 : index
    %c0_58 = arith.constant 0 : index
    %64 = vector.load %arg7[%c1_57, %c0_58] : memref<3x192xf32, #tpu.memory_space<vmem>>, vector<1x192xf32>
    %65 = vector.broadcast %64 : vector<1x192xf32> to vector<3x192xf32>
    %66 = arith.mulf %63, %65 : vector<3x192xf32>
    %c2_59 = arith.constant 2 : index
    %c0_60 = arith.constant 0 : index
    %67 = vector.load %arg7[%c2_59, %c0_60] : memref<3x192xf32, #tpu.memory_space<vmem>>, vector<1x192xf32>
    %68 = vector.broadcast %67 : vector<1x192xf32> to vector<3x192xf32>
    %69 = arith.addf %66, %68 : vector<3x192xf32>
    %70 = vector.extract_strided_slice %69 {offsets = [0, 0], sizes = [2, 192], strides = [1, 1]} : vector<3x192xf32> to vector<2x192xf32>
    %71 = vector.extract_strided_slice %69 {offsets = [1, 0], sizes = [2, 192], strides = [1, 1]} : vector<3x192xf32> to vector<2x192xf32>
    %72 = arith.maximumf %70, %71 : vector<2x192xf32>
    %73 = vector.extract_strided_slice %72 {offsets = [0, 0], sizes = [2, 128], strides = [1, 1]} : vector<2x192xf32> to vector<2x128xf32>
    %74 = vector.extract_strided_slice %72 {offsets = [0, 64], sizes = [2, 128], strides = [1, 1]} : vector<2x192xf32> to vector<2x128xf32>
    %75 = arith.maximumf %73, %74 : vector<2x128xf32>
    %c0_61 = arith.constant 0 : index
    %c0_62 = arith.constant 0 : index
    %c0_63 = arith.constant 0 : index
    %76 = vector.load %arg8[%c0_61, %c0_62, %c0_63] : memref<3x5x2xf32, #tpu.memory_space<vmem>>, vector<1x5x2xf32>
    %77 = vector.shape_cast %76 : vector<1x5x2xf32> to vector<5x2xf32>
    %cst_64 = arith.constant dense<0.000000e+00> : vector<5x128xf32>
    %78 = tpu.matmul %77, %75, %cst_64 {dimension_numbers = #tpu.dot_dimension_numbers<[1], [0], [0], [1], [0, 0, 1, 1], [], []>} : vector<5x2xf32>, vector<2x128xf32>, vector<5x128xf32> -> vector<5x128xf32>
    %c0_65 = arith.constant 0 : index
    %c0_66 = arith.constant 0 : index
    %c0_67 = arith.constant 0 : index
    %79 = vector.load %arg9[%c0_65, %c0_66, %c0_67] : memref<3x128x160xf32, #tpu.memory_space<vmem>>, vector<1x128x160xf32>
    %80 = vector.shape_cast %79 : vector<1x128x160xf32> to vector<128x160xf32>
    %cst_68 = arith.constant dense<0.000000e+00> : vector<5x160xf32>
    %81 = tpu.matmul %78, %80, %cst_68 {dimension_numbers = #tpu.dot_dimension_numbers<[1], [0], [0], [1], [0, 0, 1, 1], [], []>} : vector<5x128xf32>, vector<128x160xf32>, vector<5x160xf32> -> vector<5x160xf32>
    %c1_69 = arith.constant 1 : index
    %c0_70 = arith.constant 0 : index
    %c0_71 = arith.constant 0 : index
    %82 = vector.load %arg8[%c1_69, %c0_70, %c0_71] : memref<3x5x2xf32, #tpu.memory_space<vmem>>, vector<1x5x2xf32>
    %83 = vector.shape_cast %82 : vector<1x5x2xf32> to vector<5x2xf32>
    %cst_72 = arith.constant dense<0.000000e+00> : vector<5x128xf32>
    %84 = tpu.matmul %83, %75, %cst_72 {dimension_numbers = #tpu.dot_dimension_numbers<[1], [0], [0], [1], [0, 0, 1, 1], [], []>} : vector<5x2xf32>, vector<2x128xf32>, vector<5x128xf32> -> vector<5x128xf32>
    %c1_73 = arith.constant 1 : index
    %c0_74 = arith.constant 0 : index
    %c0_75 = arith.constant 0 : index
    %85 = vector.load %arg9[%c1_73, %c0_74, %c0_75] : memref<3x128x160xf32, #tpu.memory_space<vmem>>, vector<1x128x160xf32>
    %86 = vector.shape_cast %85 : vector<1x128x160xf32> to vector<128x160xf32>
    %cst_76 = arith.constant dense<0.000000e+00> : vector<5x160xf32>
    %87 = tpu.matmul %84, %86, %cst_76 {dimension_numbers = #tpu.dot_dimension_numbers<[1], [0], [0], [1], [0, 0, 1, 1], [], []>} : vector<5x128xf32>, vector<128x160xf32>, vector<5x160xf32> -> vector<5x160xf32>
    %88 = arith.addf %81, %87 : vector<5x160xf32>
    %c2_77 = arith.constant 2 : index
    %c0_78 = arith.constant 0 : index
    %c0_79 = arith.constant 0 : index
    %89 = vector.load %arg8[%c2_77, %c0_78, %c0_79] : memref<3x5x2xf32, #tpu.memory_space<vmem>>, vector<1x5x2xf32>
    %90 = vector.shape_cast %89 : vector<1x5x2xf32> to vector<5x2xf32>
    %cst_80 = arith.constant dense<0.000000e+00> : vector<5x128xf32>
    %91 = tpu.matmul %90, %75, %cst_80 {dimension_numbers = #tpu.dot_dimension_numbers<[1], [0], [0], [1], [0, 0, 1, 1], [], []>} : vector<5x2xf32>, vector<2x128xf32>, vector<5x128xf32> -> vector<5x128xf32>
    %c2_81 = arith.constant 2 : index
    %c0_82 = arith.constant 0 : index
    %c0_83 = arith.constant 0 : index
    %92 = vector.load %arg9[%c2_81, %c0_82, %c0_83] : memref<3x128x160xf32, #tpu.memory_space<vmem>>, vector<1x128x160xf32>
    %93 = vector.shape_cast %92 : vector<1x128x160xf32> to vector<128x160xf32>
    %cst_84 = arith.constant dense<0.000000e+00> : vector<5x160xf32>
    %94 = tpu.matmul %91, %93, %cst_84 {dimension_numbers = #tpu.dot_dimension_numbers<[1], [0], [0], [1], [0, 0, 1, 1], [], []>} : vector<5x128xf32>, vector<128x160xf32>, vector<5x160xf32> -> vector<5x160xf32>
    %95 = arith.addf %88, %94 : vector<5x160xf32>
    %c0_85 = arith.constant 0 : index
    %c0_86 = arith.constant 0 : index
    %96 = vector.load %arg10[%c0_85, %c0_86] : memref<3x160xf32, #tpu.memory_space<vmem>>, vector<1x160xf32>
    %97 = vector.broadcast %96 : vector<1x160xf32> to vector<5x160xf32>
    %98 = arith.addf %95, %97 : vector<5x160xf32>
    %cst_87 = arith.constant 0.000000e+00 : f32
    %99 = vector.broadcast %cst_87 : f32 to vector<5x160xf32>
    %100 = arith.maximumf %98, %99 : vector<5x160xf32>
    %c1_88 = arith.constant 1 : index
    %c0_89 = arith.constant 0 : index
    %101 = vector.load %arg10[%c1_88, %c0_89] : memref<3x160xf32, #tpu.memory_space<vmem>>, vector<1x160xf32>
    %102 = vector.broadcast %101 : vector<1x160xf32> to vector<5x160xf32>
    %103 = arith.mulf %100, %102 : vector<5x160xf32>
    %c2_90 = arith.constant 2 : index
    %c0_91 = arith.constant 0 : index
    %104 = vector.load %arg10[%c2_90, %c0_91] : memref<3x160xf32, #tpu.memory_space<vmem>>, vector<1x160xf32>
    %105 = vector.broadcast %104 : vector<1x160xf32> to vector<5x160xf32>
    %106 = arith.addf %103, %105 : vector<5x160xf32>
    %c0_92 = arith.constant 0 : index
    %c0_93 = arith.constant 0 : index
    %c0_94 = arith.constant 0 : index
    %107 = vector.load %arg11[%c0_92, %c0_93, %c0_94] : memref<5x15x5xf32, #tpu.memory_space<vmem>>, vector<1x15x5xf32>
    %108 = vector.shape_cast %107 : vector<1x15x5xf32> to vector<15x5xf32>
    %cst_95 = arith.constant dense<0.000000e+00> : vector<15x160xf32>
    %109 = tpu.matmul %108, %106, %cst_95 {dimension_numbers = #tpu.dot_dimension_numbers<[1], [0], [0], [1], [0, 0, 1, 1], [], []>} : vector<15x5xf32>, vector<5x160xf32>, vector<15x160xf32> -> vector<15x160xf32>
    %c0_96 = arith.constant 0 : index
    %c0_97 = arith.constant 0 : index
    %c0_98 = arith.constant 0 : index
    %110 = vector.load %arg12[%c0_96, %c0_97, %c0_98] : memref<5x160x240xf32, #tpu.memory_space<vmem>>, vector<1x160x240xf32>
    %111 = vector.shape_cast %110 : vector<1x160x240xf32> to vector<160x240xf32>
    %cst_99 = arith.constant dense<0.000000e+00> : vector<15x240xf32>
    %112 = tpu.matmul %109, %111, %cst_99 {dimension_numbers = #tpu.dot_dimension_numbers<[1], [0], [0], [1], [0, 0, 1, 1], [], []>} : vector<15x160xf32>, vector<160x240xf32>, vector<15x240xf32> -> vector<15x240xf32>
    %c1_100 = arith.constant 1 : index
    %c0_101 = arith.constant 0 : index
    %c0_102 = arith.constant 0 : index
    %113 = vector.load %arg11[%c1_100, %c0_101, %c0_102] : memref<5x15x5xf32, #tpu.memory_space<vmem>>, vector<1x15x5xf32>
    %114 = vector.shape_cast %113 : vector<1x15x5xf32> to vector<15x5xf32>
    %cst_103 = arith.constant dense<0.000000e+00> : vector<15x160xf32>
    %115 = tpu.matmul %114, %106, %cst_103 {dimension_numbers = #tpu.dot_dimension_numbers<[1], [0], [0], [1], [0, 0, 1, 1], [], []>} : vector<15x5xf32>, vector<5x160xf32>, vector<15x160xf32> -> vector<15x160xf32>
    %c1_104 = arith.constant 1 : index
    %c0_105 = arith.constant 0 : index
    %c0_106 = arith.constant 0 : index
    %116 = vector.load %arg12[%c1_104, %c0_105, %c0_106] : memref<5x160x240xf32, #tpu.memory_space<vmem>>, vector<1x160x240xf32>
    %117 = vector.shape_cast %116 : vector<1x160x240xf32> to vector<160x240xf32>
    %cst_107 = arith.constant dense<0.000000e+00> : vector<15x240xf32>
    %118 = tpu.matmul %115, %117, %cst_107 {dimension_numbers = #tpu.dot_dimension_numbers<[1], [0], [0], [1], [0, 0, 1, 1], [], []>} : vector<15x160xf32>, vector<160x240xf32>, vector<15x240xf32> -> vector<15x240xf32>
    %119 = arith.addf %112, %118 : vector<15x240xf32>
    %c2_108 = arith.constant 2 : index
    %c0_109 = arith.constant 0 : index
    %c0_110 = arith.constant 0 : index
    %120 = vector.load %arg11[%c2_108, %c0_109, %c0_110] : memref<5x15x5xf32, #tpu.memory_space<vmem>>, vector<1x15x5xf32>
    %121 = vector.shape_cast %120 : vector<1x15x5xf32> to vector<15x5xf32>
    %cst_111 = arith.constant dense<0.000000e+00> : vector<15x160xf32>
    %122 = tpu.matmul %121, %106, %cst_111 {dimension_numbers = #tpu.dot_dimension_numbers<[1], [0], [0], [1], [0, 0, 1, 1], [], []>} : vector<15x5xf32>, vector<5x160xf32>, vector<15x160xf32> -> vector<15x160xf32>
    %c2_112 = arith.constant 2 : index
    %c0_113 = arith.constant 0 : index
    %c0_114 = arith.constant 0 : index
    %123 = vector.load %arg12[%c2_112, %c0_113, %c0_114] : memref<5x160x240xf32, #tpu.memory_space<vmem>>, vector<1x160x240xf32>
    %124 = vector.shape_cast %123 : vector<1x160x240xf32> to vector<160x240xf32>
    %cst_115 = arith.constant dense<0.000000e+00> : vector<15x240xf32>
    %125 = tpu.matmul %122, %124, %cst_115 {dimension_numbers = #tpu.dot_dimension_numbers<[1], [0], [0], [1], [0, 0, 1, 1], [], []>} : vector<15x160xf32>, vector<160x240xf32>, vector<15x240xf32> -> vector<15x240xf32>
    %126 = arith.addf %119, %125 : vector<15x240xf32>
    %c3 = arith.constant 3 : index
    %c0_116 = arith.constant 0 : index
    %c0_117 = arith.constant 0 : index
    %127 = vector.load %arg11[%c3, %c0_116, %c0_117] : memref<5x15x5xf32, #tpu.memory_space<vmem>>, vector<1x15x5xf32>
    %128 = vector.shape_cast %127 : vector<1x15x5xf32> to vector<15x5xf32>
    %cst_118 = arith.constant dense<0.000000e+00> : vector<15x160xf32>
    %129 = tpu.matmul %128, %106, %cst_118 {dimension_numbers = #tpu.dot_dimension_numbers<[1], [0], [0], [1], [0, 0, 1, 1], [], []>} : vector<15x5xf32>, vector<5x160xf32>, vector<15x160xf32> -> vector<15x160xf32>
    %c3_119 = arith.constant 3 : index
    %c0_120 = arith.constant 0 : index
    %c0_121 = arith.constant 0 : index
    %130 = vector.load %arg12[%c3_119, %c0_120, %c0_121] : memref<5x160x240xf32, #tpu.memory_space<vmem>>, vector<1x160x240xf32>
    %131 = vector.shape_cast %130 : vector<1x160x240xf32> to vector<160x240xf32>
    %cst_122 = arith.constant dense<0.000000e+00> : vector<15x240xf32>
    %132 = tpu.matmul %129, %131, %cst_122 {dimension_numbers = #tpu.dot_dimension_numbers<[1], [0], [0], [1], [0, 0, 1, 1], [], []>} : vector<15x160xf32>, vector<160x240xf32>, vector<15x240xf32> -> vector<15x240xf32>
    %133 = arith.addf %126, %132 : vector<15x240xf32>
    %c4 = arith.constant 4 : index
    %c0_123 = arith.constant 0 : index
    %c0_124 = arith.constant 0 : index
    %134 = vector.load %arg11[%c4, %c0_123, %c0_124] : memref<5x15x5xf32, #tpu.memory_space<vmem>>, vector<1x15x5xf32>
    %135 = vector.shape_cast %134 : vector<1x15x5xf32> to vector<15x5xf32>
    %cst_125 = arith.constant dense<0.000000e+00> : vector<15x160xf32>
    %136 = tpu.matmul %135, %106, %cst_125 {dimension_numbers = #tpu.dot_dimension_numbers<[1], [0], [0], [1], [0, 0, 1, 1], [], []>} : vector<15x5xf32>, vector<5x160xf32>, vector<15x160xf32> -> vector<15x160xf32>
    %c4_126 = arith.constant 4 : index
    %c0_127 = arith.constant 0 : index
    %c0_128 = arith.constant 0 : index
    %137 = vector.load %arg12[%c4_126, %c0_127, %c0_128] : memref<5x160x240xf32, #tpu.memory_space<vmem>>, vector<1x160x240xf32>
    %138 = vector.shape_cast %137 : vector<1x160x240xf32> to vector<160x240xf32>
    %cst_129 = arith.constant dense<0.000000e+00> : vector<15x240xf32>
    %139 = tpu.matmul %136, %138, %cst_129 {dimension_numbers = #tpu.dot_dimension_numbers<[1], [0], [0], [1], [0, 0, 1, 1], [], []>} : vector<15x160xf32>, vector<160x240xf32>, vector<15x240xf32> -> vector<15x240xf32>
    %140 = arith.addf %133, %139 : vector<15x240xf32>
    %c0_130 = arith.constant 0 : index
    %c0_131 = arith.constant 0 : index
    %141 = vector.load %arg13[%c0_130, %c0_131] : memref<3x240xf32, #tpu.memory_space<vmem>>, vector<1x240xf32>
    %142 = vector.broadcast %141 : vector<1x240xf32> to vector<15x240xf32>
    %143 = arith.addf %140, %142 : vector<15x240xf32>
    %cst_132 = arith.constant 0.000000e+00 : f32
    %144 = vector.broadcast %cst_132 : f32 to vector<15x240xf32>
    %145 = arith.maximumf %143, %144 : vector<15x240xf32>
    %c1_133 = arith.constant 1 : index
    %c0_134 = arith.constant 0 : index
    %146 = vector.load %arg13[%c1_133, %c0_134] : memref<3x240xf32, #tpu.memory_space<vmem>>, vector<1x240xf32>
    %147 = vector.broadcast %146 : vector<1x240xf32> to vector<15x240xf32>
    %148 = arith.mulf %145, %147 : vector<15x240xf32>
    %c2_135 = arith.constant 2 : index
    %c0_136 = arith.constant 0 : index
    %149 = vector.load %arg13[%c2_135, %c0_136] : memref<3x240xf32, #tpu.memory_space<vmem>>, vector<1x240xf32>
    %150 = vector.broadcast %149 : vector<1x240xf32> to vector<15x240xf32>
    %151 = arith.addf %148, %150 : vector<15x240xf32>
    %c0_137 = arith.constant 0 : index
    %c0_138 = arith.constant 0 : index
    %c0_139 = arith.constant 0 : index
    %152 = vector.load %arg14[%c0_137, %c0_138, %c0_139] : memref<2x28x15xf32, #tpu.memory_space<vmem>>, vector<1x28x15xf32>
    %153 = vector.shape_cast %152 : vector<1x28x15xf32> to vector<28x15xf32>
    %cst_140 = arith.constant dense<0.000000e+00> : vector<28x240xf32>
    %154 = tpu.matmul %153, %151, %cst_140 {dimension_numbers = #tpu.dot_dimension_numbers<[1], [0], [0], [1], [0, 0, 1, 1], [], []>} : vector<28x15xf32>, vector<15x240xf32>, vector<28x240xf32> -> vector<28x240xf32>
    %c0_141 = arith.constant 0 : index
    %c0_142 = arith.constant 0 : index
    %c0_143 = arith.constant 0 : index
    %155 = vector.load %arg15[%c0_141, %c0_142, %c0_143] : memref<2x240x84xf32, #tpu.memory_space<vmem>>, vector<1x240x84xf32>
    %156 = vector.shape_cast %155 : vector<1x240x84xf32> to vector<240x84xf32>
    %cst_144 = arith.constant dense<0.000000e+00> : vector<28x84xf32>
    %157 = tpu.matmul %154, %156, %cst_144 {dimension_numbers = #tpu.dot_dimension_numbers<[1], [0], [0], [1], [0, 0, 1, 1], [], []>} : vector<28x240xf32>, vector<240x84xf32>, vector<28x84xf32> -> vector<28x84xf32>
    %c1_145 = arith.constant 1 : index
    %c0_146 = arith.constant 0 : index
    %c0_147 = arith.constant 0 : index
    %158 = vector.load %arg14[%c1_145, %c0_146, %c0_147] : memref<2x28x15xf32, #tpu.memory_space<vmem>>, vector<1x28x15xf32>
    %159 = vector.shape_cast %158 : vector<1x28x15xf32> to vector<28x15xf32>
    %cst_148 = arith.constant dense<0.000000e+00> : vector<28x240xf32>
    %160 = tpu.matmul %159, %151, %cst_148 {dimension_numbers = #tpu.dot_dimension_numbers<[1], [0], [0], [1], [0, 0, 1, 1], [], []>} : vector<28x15xf32>, vector<15x240xf32>, vector<28x240xf32> -> vector<28x240xf32>
    %c1_149 = arith.constant 1 : index
    %c0_150 = arith.constant 0 : index
    %c0_151 = arith.constant 0 : index
    %161 = vector.load %arg15[%c1_149, %c0_150, %c0_151] : memref<2x240x84xf32, #tpu.memory_space<vmem>>, vector<1x240x84xf32>
    %162 = vector.shape_cast %161 : vector<1x240x84xf32> to vector<240x84xf32>
    %cst_152 = arith.constant dense<0.000000e+00> : vector<28x84xf32>
    %163 = tpu.matmul %160, %162, %cst_152 {dimension_numbers = #tpu.dot_dimension_numbers<[1], [0], [0], [1], [0, 0, 1, 1], [], []>} : vector<28x240xf32>, vector<240x84xf32>, vector<28x84xf32> -> vector<28x84xf32>
    %164 = arith.addf %157, %163 : vector<28x84xf32>
    %c0_153 = arith.constant 0 : index
    %c0_154 = arith.constant 0 : index
    %165 = vector.load %arg16[%c0_153, %c0_154] : memref<1x84xf32, #tpu.memory_space<vmem>>, vector<1x84xf32>
    %166 = vector.broadcast %165 : vector<1x84xf32> to vector<28x84xf32>
    %167 = arith.addf %164, %166 : vector<28x84xf32>
    %168 = math.tanh %167 : vector<28x84xf32>
    %c0_155 = arith.constant 0 : index
    %c0_156 = arith.constant 0 : index
    %c0_157 = arith.constant 0 : index
    %169 = vector.load %arg17[%c0_155, %c0_156, %c0_157] : memref<1x28x84xf32, #tpu.memory_space<vmem>>, vector<1x28x84xf32>
    %170 = vector.shape_cast %169 : vector<1x28x84xf32> to vector<28x84xf32>
    %171 = vector.shape_cast %168 : vector<28x84xf32> to vector<1x28x84xf32>
    tpu.vector_store %arg17[%c0_155, %c0_156, %c0_157], %171 {strides = array<i32>} : memref<1x28x84xf32, #tpu.memory_space<vmem>>, vector<1x28x84xf32>,
    return
  }
  func.func @transform_0(%arg0: i32) -> (i32, i32, i32) {
    %c0_i32 = arith.constant 0 : i32
    %c0_i32_0 = arith.constant 0 : i32
    %c0_i32_1 = arith.constant 0 : i32
    return %arg0, %c0_i32, %c0_i32_0 : i32, i32, i32
  }
  func.func @transform_1(%arg0: i32) -> (i32, i32, i32) {
    %c0_i32 = arith.constant 0 : i32
    %c0_i32_0 = arith.constant 0 : i32
    %c0_i32_1 = arith.constant 0 : i32
    %c0_i32_2 = arith.constant 0 : i32
    return %c0_i32, %c0_i32_0, %c0_i32_1 : i32, i32, i32
  }
  func.func @transform_2(%arg0: i32) -> (i32, i32, i32) {
    %c0_i32 = arith.constant 0 : i32
    %c0_i32_0 = arith.constant 0 : i32
    %c0_i32_1 = arith.constant 0 : i32
    %c0_i32_2 = arith.constant 0 : i32
    return %c0_i32, %c0_i32_0, %c0_i32_1 : i32, i32, i32
  }
  func.func @transform_3(%arg0: i32) -> (i32, i32) {
    %c0_i32 = arith.constant 0 : i32
    %c0_i32_0 = arith.constant 0 : i32
    %c0_i32_1 = arith.constant 0 : i32
    return %c0_i32, %c0_i32_0 : i32, i32
  }
  func.func @transform_4(%arg0: i32) -> (i32, i32, i32) {
    %c0_i32 = arith.constant 0 : i32
    %c0_i32_0 = arith.constant 0 : i32
    %c0_i32_1 = arith.constant 0 : i32
    %c0_i32_2 = arith.constant 0 : i32
    return %c0_i32, %c0_i32_0, %c0_i32_1 : i32, i32, i32
  }
  func.func @transform_5(%arg0: i32) -> (i32, i32, i32) {
    %c0_i32 = arith.constant 0 : i32
    %c0_i32_0 = arith.constant 0 : i32
    %c0_i32_1 = arith.constant 0 : i32
    %c0_i32_2 = arith.constant 0 : i32
    return %c0_i32, %c0_i32_0, %c0_i32_1 : i32, i32, i32
  }
  func.func @transform_6(%arg0: i32) -> (i32, i32) {
    %c0_i32 = arith.constant 0 : i32
    %c0_i32_0 = arith.constant 0 : i32
    %c0_i32_1 = arith.constant 0 : i32
    return %c0_i32, %c0_i32_0 : i32, i32
  }
  func.func @transform_7(%arg0: i32) -> (i32, i32, i32) {
    %c0_i32 = arith.constant 0 : i32
    %c0_i32_0 = arith.constant 0 : i32
    %c0_i32_1 = arith.constant 0 : i32
    %c0_i32_2 = arith.constant 0 : i32
    return %c0_i32, %c0_i32_0, %c0_i32_1 : i32, i32, i32
  }
  func.func @transform_8(%arg0: i32) -> (i32, i32, i32) {
    %c0_i32 = arith.constant 0 : i32
    %c0_i32_0 = arith.constant 0 : i32
    %c0_i32_1 = arith.constant 0 : i32
    %c0_i32_2 = arith.constant 0 : i32
    return %c0_i32, %c0_i32_0, %c0_i32_1 : i32, i32, i32
  }
  func.func @transform_9(%arg0: i32) -> (i32, i32) {
    %c0_i32 = arith.constant 0 : i32
    %c0_i32_0 = arith.constant 0 : i32
    %c0_i32_1 = arith.constant 0 : i32
    return %c0_i32, %c0_i32_0 : i32, i32
  }
  func.func @transform_10(%arg0: i32) -> (i32, i32, i32) {
    %c0_i32 = arith.constant 0 : i32
    %c0_i32_0 = arith.constant 0 : i32
    %c0_i32_1 = arith.constant 0 : i32
    %c0_i32_2 = arith.constant 0 : i32
    return %c0_i32, %c0_i32_0, %c0_i32_1 : i32, i32, i32
  }
  func.func @transform_11(%arg0: i32) -> (i32, i32, i32) {
    %c0_i32 = arith.constant 0 : i32
    %c0_i32_0 = arith.constant 0 : i32
    %c0_i32_1 = arith.constant 0 : i32
    %c0_i32_2 = arith.constant 0 : i32
    return %c0_i32, %c0_i32_0, %c0_i32_1 : i32, i32, i32
  }
  func.func @transform_12(%arg0: i32) -> (i32, i32) {
    %c0_i32 = arith.constant 0 : i32
    %c0_i32_0 = arith.constant 0 : i32
    %c0_i32_1 = arith.constant 0 : i32
    return %c0_i32, %c0_i32_0 : i32, i32
  }
  func.func @transform_13(%arg0: i32) -> (i32, i32, i32) {
    %c0_i32 = arith.constant 0 : i32
    %c0_i32_0 = arith.constant 0 : i32
    %c0_i32_1 = arith.constant 0 : i32
    %c0_i32_2 = arith.constant 0 : i32
    return %c0_i32, %c0_i32_0, %c0_i32_1 : i32, i32, i32
  }
  func.func @transform_14(%arg0: i32) -> (i32, i32, i32) {
    %c0_i32 = arith.constant 0 : i32
    %c0_i32_0 = arith.constant 0 : i32
    %c0_i32_1 = arith.constant 0 : i32
    %c0_i32_2 = arith.constant 0 : i32
    return %c0_i32, %c0_i32_0, %c0_i32_1 : i32, i32, i32
  }
  func.func @transform_15(%arg0: i32) -> (i32, i32) {
    %c0_i32 = arith.constant 0 : i32
    %c0_i32_0 = arith.constant 0 : i32
    %c0_i32_1 = arith.constant 0 : i32
    return %c0_i32, %c0_i32_0 : i32, i32
  }
  func.func @transform_16(%arg0: i32) -> (i32, i32, i32) {
    %c0_i32 = arith.constant 0 : i32
    %c0_i32_0 = arith.constant 0 : i32
    %c0_i32_1 = arith.constant 0 : i32
    return %arg0, %c0_i32, %c0_i32_0 : i32, i32, i32
  }
}

</mosaic_0001>

<llo_original>
// kernel: autoencoder_forward.1
$region0: #{autoencoder_forward.1}
  #allocation0 [shape = 'u32[]', space=smem, size = 0x4, offset = 0x4, fixed_abs, tag = 'smem constant byte address 0x4 - core index']
  #allocation1 [shape = 'u32[144,128]{1,0:T(1,128)}', space=vmem, size = 0x12000, scoped, tag = 'internal scratch']
  %s0 = inlined_call_operand.vmem [shape: f32[2,32,96], index: 0, kind: input, shape index: {}]
  %s1 = inlined_call_operand.vmem [shape: f32[3,11,32], index: 1, kind: input, shape index: {}]
  %s2 = inlined_call_operand.vmem [shape: f32[3,96,352], index: 2, kind: input, shape index: {}]
  %s3 = inlined_call_operand.vmem [shape: f32[3,352], index: 3, kind: input, shape index: {}]
  %s4 = inlined_call_operand.vmem [shape: f32[3,3,10], index: 4, kind: input, shape index: {}]
  %s5 = inlined_call_operand.vmem [shape: f32[3,320,192], index: 5, kind: input, shape index: {}]
  %s6 = inlined_call_operand.vmem [shape: f32[3,192], index: 6, kind: input, shape index: {}]
  %s7 = inlined_call_operand.vmem [shape: f32[3,5,2], index: 7, kind: input, shape index: {}]
  %s8 = inlined_call_operand.vmem [shape: f32[3,128,160], index: 8, kind: input, shape index: {}]
  %s9 = inlined_call_operand.vmem [shape: f32[3,160], index: 9, kind: input, shape index: {}]
  %s10 = inlined_call_operand.vmem [shape: f32[5,15,5], index: 10, kind: input, shape index: {}]
  %s11 = inlined_call_operand.vmem [shape: f32[5,160,240], index: 11, kind: input, shape index: {}]
  %s12 = inlined_call_operand.vmem [shape: f32[3,240], index: 12, kind: input, shape index: {}]
  %s13 = inlined_call_operand.vmem [shape: f32[2,28,15], index: 13, kind: input, shape index: {}]
  %s14 = inlined_call_operand.vmem [shape: f32[2,240,84], index: 14, kind: input, shape index: {}]
  %s15 = inlined_call_operand.vmem [shape: f32[1,84], index: 15, kind: input, shape index: {}]
  %s16 = inlined_call_operand.vmem [shape: f32[2,28,84], index: 16, kind: output, shape index: {}]
  %s17 = sld [smem:[#allocation0]]
  $region97: #{autoencoder_forward.1} parent=0
    _
  %s19 = ssub.s32 1, %s17
  %s20 = scalar_select 0, %s19, %s17
  loop: start=0, step=1, limit=4
  $region2: #{autoencoder_forward.1} parent=0 // loop_pre_header
    _
  $region3: #{autoencoder_forward.1} parent=0 // loop_header
    %s22 = sphi 0, %s26
    %p23 = scmp.ge.s32.totalorder %s22, 4
    %s32 = sphi 0, %s34
    %s35 = sphi 0, %s32
    %s36 = sphi 0, %s35
    %s52 = sphi 0, %s36
    %s56 = sphi 0, %s56
    %s58 = sphi 0, %s56
    %s59 = sphi 0, %s58
    %s73 = sphi 0, %s59
    %s77 = sphi 0, %s77
    %s79 = sphi 0, %s77
    %s80 = sphi 0, %s79
    %s94 = sphi 0, %s80
    %s98 = sphi 0, %s98
    %s100 = sphi 0, %s98
    %s101 = sphi 0, %s100
    %s115 = sphi 0, %s101
    %s119 = sphi 0, %s119
    %s121 = sphi 0, %s119
    %s122 = sphi 0, %s121
    %s136 = sphi 0, %s122
    %s140 = sphi 0, %s140
    %s142 = sphi 0, %s140
    %s143 = sphi 0, %s142
    %s157 = sphi 0, %s143
    %s161 = sphi 0, %s161
    %s163 = sphi 0, %s161
    %s164 = sphi 0, %s163
    %s178 = sphi 0, %s164
    %s182 = sphi 0, %s182
    %s184 = sphi 0, %s182
    %s185 = sphi 0, %s184
    %s199 = sphi 0, %s185
    %s203 = sphi 0, %s203
    %s205 = sphi 0, %s203
    %s206 = sphi 0, %s205
    %s220 = sphi 0, %s206
    %s224 = sphi 0, %s224
    %s226 = sphi 0, %s224
    %s227 = sphi 0, %s226
    %s241 = sphi 0, %s227
    %s245 = sphi 0, %s245
    %s247 = sphi 0, %s245
    %s248 = sphi 0, %s247
    %s262 = sphi 0, %s248
    %s266 = sphi 0, %s266
    %s268 = sphi 0, %s266
    %s269 = sphi 0, %s268
    %s283 = sphi 0, %s269
    %s287 = sphi 0, %s287
    %s289 = sphi 0, %s287
    %s290 = sphi 0, %s289
    %s304 = sphi 0, %s290
    %s308 = sphi 0, %s308
    %s310 = sphi 0, %s308
    %s311 = sphi 0, %s310
    %s325 = sphi 0, %s311
    %s329 = sphi 0, %s329
    %s331 = sphi 0, %s329
    %s332 = sphi 0, %s331
    %s346 = sphi 0, %s332
    %s350 = sphi 0, %s350
    %s352 = sphi 0, %s350
    %s353 = sphi 0, %s352
    %s367 = sphi 0, %s353
    %s373 = sphi 0, %s375
    %s376 = sphi 0, %s373
    %s377 = sphi 0, %s376
    %s393 = sphi 0, %s377
  $region4: #{autoencoder_forward.1} parent=0 // loop_header_branch
    %25 = sbr.rel (%p23) target = $region8
  $region5: #{autoencoder_forward.1} parent=0 // loop_body
    %s27 = ssub.s32 %s22, 1
    %s28 = ssub.s32 %s22, 2
    %s29 = sadd.s32 %s22, 1
    %s30 = ssub.s32 %s22, %s29
    %p31 = scmp.eq.s32.totalorder %s30, 0
    %s33 = sadd.s32 %s32, 1
    %s34 = scalar_select %p31, %s32, %s33
    %p37 = pneg %p31
    %p38 = scmp.eq.s32.totalorder %s22, 1
    %p39 = por %p37, %p38
    %p40 = scmp.ne.s32.totalorder %s32, %s35
    %p41 = scmp.eq.s32.totalorder %s22, 0
    %p42 = por %p40, %p41
    %p43 = scmp.ne.s32.totalorder %s32, %s35
    %p44 = scmp.eq.s32.totalorder %s27, 1
    %p45 = por %p43, %p44
    %p46 = scmp.ne.s32.totalorder %s35, %s36
    %p47 = scmp.eq.s32.totalorder %s27, 0
    %p48 = por %p46, %p47
    %p49 = scmp.ne.s32.totalorder %s35, %s36
    %p50 = scmp.eq.s32.totalorder %s28, 1
    %p51 = por %p49, %p50
    %p53 = scmp.ne.s32.totalorder %s36, %s52
    %p54 = scmp.eq.s32.totalorder %s28, 0
    %p55 = por %p53, %p54
    %s57 = sadd.s32 %s56, 1
    %p60 = scmp.eq.s32.totalorder %s22, 1
    %p61 = scmp.ne.s32.totalorder %s56, %s58
    %p62 = scmp.eq.s32.totalorder %s22, 0
    %p63 = por %p61, %p62
    %p64 = scmp.ne.s32.totalorder %s56, %s58
    %p65 = scmp.eq.s32.totalorder %s27, 1
    %p66 = por %p64, %p65
    %p67 = scmp.ne.s32.totalorder %s58, %s59
    %p68 = scmp.eq.s32.totalorder %s27, 0
    %p69 = por %p67, %p68
    %p70 = scmp.ne.s32.totalorder %s58, %s59
    %p71 = scmp.eq.s32.totalorder %s28, 1
    %p72 = por %p70, %p71
    %p74 = scmp.ne.s32.totalorder %s59, %s73
    %p75 = scmp.eq.s32.totalorder %s28, 0
    %p76 = por %p74, %p75
    %s78 = sadd.s32 %s77, 1
    %p81 = scmp.eq.s32.totalorder %s22, 1
    %p82 = scmp.ne.s32.totalorder %s77, %s79
    %p83 = scmp.eq.s32.totalorder %s22, 0
    %p84 = por %p82, %p83
    %p85 = scmp.ne.s32.totalorder %s77, %s79
    %p86 = scmp.eq.s32.totalorder %s27, 1
    %p87 = por %p85, %p86
    %p88 = scmp.ne.s32.totalorder %s79, %s80
    %p89 = scmp.eq.s32.totalorder %s27, 0
    %p90 = por %p88, %p89
    %p91 = scmp.ne.s32.totalorder %s79, %s80
    %p92 = scmp.eq.s32.totalorder %s28, 1
    %p93 = por %p91, %p92
    %p95 = scmp.ne.s32.totalorder %s80, %s94
    %p96 = scmp.eq.s32.totalorder %s28, 0
    %p97 = por %p95, %p96
    %s99 = sadd.s32 %s98, 1
    %p102 = scmp.eq.s32.totalorder %s22, 1
    %p103 = scmp.ne.s32.totalorder %s98, %s100
    %p104 = scmp.eq.s32.totalorder %s22, 0
    %p105 = por %p103, %p104
    %p106 = scmp.ne.s32.totalorder %s98, %s100
    %p107 = scmp.eq.s32.totalorder %s27, 1
    %p108 = por %p106, %p107
    %p109 = scmp.ne.s32.totalorder %s100, %s101
    %p110 = scmp.eq.s32.totalorder %s27, 0
    %p111 = por %p109, %p110
    %p112 = scmp.ne.s32.totalorder %s100, %s101
    %p113 = scmp.eq.s32.totalorder %s28, 1
    %p114 = por %p112, %p113
    %p116 = scmp.ne.s32.totalorder %s101, %s115
    %p117 = scmp.eq.s32.totalorder %s28, 0
    %p118 = por %p116, %p117
    %s120 = sadd.s32 %s119, 1
    %p123 = scmp.eq.s32.totalorder %s22, 1
    %p124 = scmp.ne.s32.totalorder %s119, %s121
    %p125 = scmp.eq.s32.totalorder %s22, 0
    %p126 = por %p124, %p125
    %p127 = scmp.ne.s32.totalorder %s119, %s121
    %p128 = scmp.eq.s32.totalorder %s27, 1
    %p129 = por %p127, %p128
    %p130 = scmp.ne.s32.totalorder %s121, %s122
    %p131 = scmp.eq.s32.totalorder %s27, 0
    %p132 = por %p130, %p131
    %p133 = scmp.ne.s32.totalorder %s121, %s122
    %p134 = scmp.eq.s32.totalorder %s28, 1
    %p135 = por %p133, %p134
    %p137 = scmp.ne.s32.totalorder %s122, %s136
    %p138 = scmp.eq.s32.totalorder %s28, 0
    %p139 = por %p137, %p138
    %s141 = sadd.s32 %s140, 1
    %p144 = scmp.eq.s32.totalorder %s22, 1
    %p145 = scmp.ne.s32.totalorder %s140, %s142
    %p146 = scmp.eq.s32.totalorder %s22, 0
    %p147 = por %p145, %p146
    %p148 = scmp.ne.s32.totalorder %s140, %s142
    %p149 = scmp.eq.s32.totalorder %s27, 1
    %p150 = por %p148, %p149
    %p151 = scmp.ne.s32.totalorder %s142, %s143
    %p152 = scmp.eq.s32.totalorder %s27, 0
    %p153 = por %p151, %p152
    %p154 = scmp.ne.s32.totalorder %s142, %s143
    %p155 = scmp.eq.s32.totalorder %s28, 1
    %p156 = por %p154, %p155
    %p158 = scmp.ne.s32.totalorder %s143, %s157
    %p159 = scmp.eq.s32.totalorder %s28, 0
    %p160 = por %p158, %p159
    %s162 = sadd.s32 %s161, 1
    %p165 = scmp.eq.s32.totalorder %s22, 1
    %p166 = scmp.ne.s32.totalorder %s161, %s163
    %p167 = scmp.eq.s32.totalorder %s22, 0
    %p168 = por %p166, %p167
    %p169 = scmp.ne.s32.totalorder %s161, %s163
    %p170 = scmp.eq.s32.totalorder %s27, 1
    %p171 = por %p169, %p170
    %p172 = scmp.ne.s32.totalorder %s163, %s164
    %p173 = scmp.eq.s32.totalorder %s27, 0
    %p174 = por %p172, %p173
    %p175 = scmp.ne.s32.totalorder %s163, %s164
    %p176 = scmp.eq.s32.totalorder %s28, 1
    %p177 = por %p175, %p176
    %p179 = scmp.ne.s32.totalorder %s164, %s178
    %p180 = scmp.eq.s32.totalorder %s28, 0
    %p181 = por %p179, %p180
    %s183 = sadd.s32 %s182, 1
    %p186 = scmp.eq.s32.totalorder %s22, 1
    %p187 = scmp.ne.s32.totalorder %s182, %s184
    %p188 = scmp.eq.s32.totalorder %s22, 0
    %p189 = por %p187, %p188
    %p190 = scmp.ne.s32.totalorder %s182, %s184
    %p191 = scmp.eq.s32.totalorder %s27, 1
    %p192 = por %p190, %p191
    %p193 = scmp.ne.s32.totalorder %s184, %s185
    %p194 = scmp.eq.s32.totalorder %s27, 0
    %p195 = por %p193, %p194
    %p196 = scmp.ne.s32.totalorder %s184, %s185
    %p197 = scmp.eq.s32.totalorder %s28, 1
    %p198 = por %p196, %p197
    %p200 = scmp.ne.s32.totalorder %s185, %s199
    %p201 = scmp.eq.s32.totalorder %s28, 0
    %p202 = por %p200, %p201
    %s204 = sadd.s32 %s203, 1
    %p207 = scmp.eq.s32.totalorder %s22, 1
    %p208 = scmp.ne.s32.totalorder %s203, %s205
    %p209 = scmp.eq.s32.totalorder %s22, 0
    %p210 = por %p208, %p209
    %p211 = scmp.ne.s32.totalorder %s203, %s205
    %p212 = scmp.eq.s32.totalorder %s27, 1
    %p213 = por %p211, %p212
    %p214 = scmp.ne.s32.totalorder %s205, %s206
    %p215 = scmp.eq.s32.totalorder %s27, 0
    %p216 = por %p214, %p215
    %p217 = scmp.ne.s32.totalorder %s205, %s206
    %p218 = scmp.eq.s32.totalorder %s28, 1
    %p219 = por %p217, %p218
    %p221 = scmp.ne.s32.totalorder %s206, %s220
    %p222 = scmp.eq.s32.totalorder %s28, 0
    %p223 = por %p221, %p222
    %s225 = sadd.s32 %s224, 1
    %p228 = scmp.eq.s32.totalorder %s22, 1
    %p229 = scmp.ne.s32.totalorder %s224, %s226
    %p230 = scmp.eq.s32.totalorder %s22, 0
    %p231 = por %p229, %p230
    %p232 = scmp.ne.s32.totalorder %s224, %s226
    %p233 = scmp.eq.s32.totalorder %s27, 1
    %p234 = por %p232, %p233
    %p235 = scmp.ne.s32.totalorder %s226, %s227
    %p236 = scmp.eq.s32.totalorder %s27, 0
    %p237 = por %p235, %p236
    %p238 = scmp.ne.s32.totalorder %s226, %s227
    %p239 = scmp.eq.s32.totalorder %s28, 1
    %p240 = por %p238, %p239
    %p242 = scmp.ne.s32.totalorder %s227, %s241
    %p243 = scmp.eq.s32.totalorder %s28, 0
    %p244 = por %p242, %p243
    %s246 = sadd.s32 %s245, 1
    %p249 = scmp.eq.s32.totalorder %s22, 1
    %p250 = scmp.ne.s32.totalorder %s245, %s247
    %p251 = scmp.eq.s32.totalorder %s22, 0
    %p252 = por %p250, %p251
    %p253 = scmp.ne.s32.totalorder %s245, %s247
    %p254 = scmp.eq.s32.totalorder %s27, 1
    %p255 = por %p253, %p254
    %p256 = scmp.ne.s32.totalorder %s247, %s248
    %p257 = scmp.eq.s32.totalorder %s27, 0
    %p258 = por %p256, %p257
    %p259 = scmp.ne.s32.totalorder %s247, %s248
    %p260 = scmp.eq.s32.totalorder %s28, 1
    %p261 = por %p259, %p260
    %p263 = scmp.ne.s32.totalorder %s248, %s262
    %p264 = scmp.eq.s32.totalorder %s28, 0
    %p265 = por %p263, %p264
    %s267 = sadd.s32 %s266, 1
    %p270 = scmp.eq.s32.totalorder %s22, 1
    %p271 = scmp.ne.s32.totalorder %s266, %s268
    %p272 = scmp.eq.s32.totalorder %s22, 0
    %p273 = por %p271, %p272
    %p274 = scmp.ne.s32.totalorder %s266, %s268
    %p275 = scmp.eq.s32.totalorder %s27, 1
    %p276 = por %p274, %p275
    %p277 = scmp.ne.s32.totalorder %s268, %s269
    %p278 = scmp.eq.s32.totalorder %s27, 0
    %p279 = por %p277, %p278
    %p280 = scmp.ne.s32.totalorder %s268, %s269
    %p281 = scmp.eq.s32.totalorder %s28, 1
    %p282 = por %p280, %p281
    %p284 = scmp.ne.s32.totalorder %s269, %s283
    %p285 = scmp.eq.s32.totalorder %s28, 0
    %p286 = por %p284, %p285
    %s288 = sadd.s32 %s287, 1
    %p291 = scmp.eq.s32.totalorder %s22, 1
    %p292 = scmp.ne.s32.totalorder %s287, %s289
    %p293 = scmp.eq.s32.totalorder %s22, 0
    %p294 = por %p292, %p293
    %p295 = scmp.ne.s32.totalorder %s287, %s289
    %p296 = scmp.eq.s32.totalorder %s27, 1
    %p297 = por %p295, %p296
    %p298 = scmp.ne.s32.totalorder %s289, %s290
    %p299 = scmp.eq.s32.totalorder %s27, 0
    %p300 = por %p298, %p299
    %p301 = scmp.ne.s32.totalorder %s289, %s290
    %p302 = scmp.eq.s32.totalorder %s28, 1
    %p303 = por %p301, %p302
    %p305 = scmp.ne.s32.totalorder %s290, %s304
    %p306 = scmp.eq.s32.totalorder %s28, 0
    %p307 = por %p305, %p306
    %s309 = sadd.s32 %s308, 1
    %p312 = scmp.eq.s32.totalorder %s22, 1
    %p313 = scmp.ne.s32.totalorder %s308, %s310
    %p314 = scmp.eq.s32.totalorder %s22, 0
    %p315 = por %p313, %p314
    %p316 = scmp.ne.s32.totalorder %s308, %s310
    %p317 = scmp.eq.s32.totalorder %s27, 1
    %p318 = por %p316, %p317
    %p319 = scmp.ne.s32.totalorder %s310, %s311
    %p320 = scmp.eq.s32.totalorder %s27, 0
    %p321 = por %p319, %p320
    %p322 = scmp.ne.s32.totalorder %s310, %s311
    %p323 = scmp.eq.s32.totalorder %s28, 1
    %p324 = por %p322, %p323
    %p326 = scmp.ne.s32.totalorder %s311, %s325
    %p327 = scmp.eq.s32.totalorder %s28, 0
    %p328 = por %p326, %p327
    %s330 = sadd.s32 %s329, 1
    %p333 = scmp.eq.s32.totalorder %s22, 1
    %p334 = scmp.ne.s32.totalorder %s329, %s331
    %p335 = scmp.eq.s32.totalorder %s22, 0
    %p336 = por %p334, %p335
    %p337 = scmp.ne.s32.totalorder %s329, %s331
    %p338 = scmp.eq.s32.totalorder %s27, 1
    %p339 = por %p337, %p338
    %p340 = scmp.ne.s32.totalorder %s331, %s332
    %p341 = scmp.eq.s32.totalorder %s27, 0
    %p342 = por %p340, %p341
    %p343 = scmp.ne.s32.totalorder %s331, %s332
    %p344 = scmp.eq.s32.totalorder %s28, 1
    %p345 = por %p343, %p344
    %p347 = scmp.ne.s32.totalorder %s332, %s346
    %p348 = scmp.eq.s32.totalorder %s28, 0
    %p349 = por %p347, %p348
    %s351 = sadd.s32 %s350, 1
    %p354 = scmp.eq.s32.totalorder %s22, 1
    %p355 = scmp.ne.s32.totalorder %s350, %s352
    %p356 = scmp.eq.s32.totalorder %s22, 0
    %p357 = por %p355, %p356
    %p358 = scmp.ne.s32.totalorder %s350, %s352
    %p359 = scmp.eq.s32.totalorder %s27, 1
    %p360 = por %p358, %p359
    %p361 = scmp.ne.s32.totalorder %s352, %s353
    %p362 = scmp.eq.s32.totalorder %s27, 0
    %p363 = por %p361, %p362
    %p364 = scmp.ne.s32.totalorder %s352, %s353
    %p365 = scmp.eq.s32.totalorder %s28, 1
    %p366 = por %p364, %p365
    %p368 = scmp.ne.s32.totalorder %s353, %s367
    %p369 = scmp.eq.s32.totalorder %s28, 0
    %p370 = por %p368, %p369
    %s371 = ssub.s32 %s22, %s29
    %p372 = scmp.eq.s32.totalorder %s371, 0
    %s374 = sadd.s32 %s373, 1
    %s375 = scalar_select %p372, %s373, %s374
    %p378 = pneg %p372
    %p379 = scmp.eq.s32.totalorder %s22, 1
    %p380 = por %p378, %p379
    %p381 = scmp.ne.s32.totalorder %s373, %s376
    %p382 = scmp.eq.s32.totalorder %s22, 0
    %p383 = por %p381, %p382
    %p384 = scmp.ne.s32.totalorder %s373, %s376
    %p385 = scmp.eq.s32.totalorder %s27, 1
    %p386 = por %p384, %p385
    %p387 = scmp.ne.s32.totalorder %s376, %s377
    %p388 = scmp.eq.s32.totalorder %s27, 0
    %p389 = por %p387, %p388
    %p390 = scmp.ne.s32.totalorder %s376, %s377
    %p391 = scmp.eq.s32.totalorder %s28, 1
    %p392 = por %p390, %p391
    %p394 = scmp.ne.s32.totalorder %s377, %s393
    %p395 = scmp.eq.s32.totalorder %s28, 0
    %p396 = por %p394, %p395
    %p397 = scmp.le.s32.totalorder 1, %s22
    %p398 = scmp.lt.s32.totalorder %s22, 3
    %p399 = pnand %p397, %p398
    %p400 = pneg %p399
    // Predicated region
    $region9: #{autoencoder_forward.1} parent=5 // pred_check
      _
    $region10: #{autoencoder_forward.1} parent=5 // pred_check_branch
      %402 = sbr.rel (%p399) target = $region12
    $region11: #{autoencoder_forward.1} parent=5 // pred_region
      %s403 = ssub.s32 %s22, 1
      // Predicated region
      $region13: #{autoencoder_forward.1} parent=11 // pred_check
        %p404 = pneg %p69
      $region14: #{autoencoder_forward.1} parent=11 // pred_check_branch
        %406 = sbr.rel (%p404) target = $region16
      $region15: #{autoencoder_forward.1} parent=11 // pred_region
        _
      $region16: #{autoencoder_forward.1} parent=11 // pred_fallthru
        _
      // Predicated region
      $region17: #{autoencoder_forward.1} parent=11 // pred_check
        %p407 = pneg %p90
      $region18: #{autoencoder_forward.1} parent=11 // pred_check_branch
        %409 = sbr.rel (%p407) target = $region20
      $region19: #{autoencoder_forward.1} parent=11 // pred_region
        _
      $region20: #{autoencoder_forward.1} parent=11 // pred_fallthru
        _
      // Predicated region
      $region21: #{autoencoder_forward.1} parent=11 // pred_check
        %p410 = pneg %p111
      $region22: #{autoencoder_forward.1} parent=11 // pred_check_branch
        %412 = sbr.rel (%p410) target = $region24
      $region23: #{autoencoder_forward.1} parent=11 // pred_region
        _
      $region24: #{autoencoder_forward.1} parent=11 // pred_fallthru
        _
      // Predicated region
      $region25: #{autoencoder_forward.1} parent=11 // pred_check
        %p413 = pneg %p132
      $region26: #{autoencoder_forward.1} parent=11 // pred_check_branch
        %415 = sbr.rel (%p413) target = $region28
      $region27: #{autoencoder_forward.1} parent=11 // pred_region
        _
      $region28: #{autoencoder_forward.1} parent=11 // pred_fallthru
        _
      // Predicated region
      $region29: #{autoencoder_forward.1} parent=11 // pred_check
        %p416 = pneg %p153
      $region30: #{autoencoder_forward.1} parent=11 // pred_check_branch
        %418 = sbr.rel (%p416) target = $region32
      $region31: #{autoencoder_forward.1} parent=11 // pred_region
        _
      $region32: #{autoencoder_forward.1} parent=11 // pred_fallthru
        _
      // Predicated region
      $region33: #{autoencoder_forward.1} parent=11 // pred_check
        %p419 = pneg %p174
      $region34: #{autoencoder_forward.1} parent=11 // pred_check_branch
        %421 = sbr.rel (%p419) target = $region36
      $region35: #{autoencoder_forward.1} parent=11 // pred_region
        _
      $region36: #{autoencoder_forward.1} parent=11 // pred_fallthru
        _
      // Predicated region
      $region37: #{autoencoder_forward.1} parent=11 // pred_check
        %p422 = pneg %p195
      $region38: #{autoencoder_forward.1} parent=11 // pred_check_branch
        %424 = sbr.rel (%p422) target = $region40
      $region39: #{autoencoder_forward.1} parent=11 // pred_region
        _
      $region40: #{autoencoder_forward.1} parent=11 // pred_fallthru
        _
      // Predicated region
      $region41: #{autoencoder_forward.1} parent=11 // pred_check
        %p425 = pneg %p216
      $region42: #{autoencoder_forward.1} parent=11 // pred_check_branch
        %427 = sbr.rel (%p425) target = $region44
      $region43: #{autoencoder_forward.1} parent=11 // pred_region
        _
      $region44: #{autoencoder_forward.1} parent=11 // pred_fallthru
        _
      // Predicated region
      $region45: #{autoencoder_forward.1} parent=11 // pred_check
        %p428 = pneg %p237
      $region46: #{autoencoder_forward.1} parent=11 // pred_check_branch
        %430 = sbr.rel (%p428) target = $region48
      $region47: #{autoencoder_forward.1} parent=11 // pred_region
        _
      $region48: #{autoencoder_forward.1} parent=11 // pred_fallthru
        _
      // Predicated region
      $region49: #{autoencoder_forward.1} parent=11 // pred_check
        %p431 = pneg %p258
      $region50: #{autoencoder_forward.1} parent=11 // pred_check_branch
        %433 = sbr.rel (%p431) target = $region52
      $region51: #{autoencoder_forward.1} parent=11 // pred_region
        _
      $region52: #{autoencoder_forward.1} parent=11 // pred_fallthru
        _
      // Predicated region
      $region53: #{autoencoder_forward.1} parent=11 // pred_check
        %p434 = pneg %p279
      $region54: #{autoencoder_forward.1} parent=11 // pred_check_branch
        %436 = sbr.rel (%p434) target = $region56
      $region55: #{autoencoder_forward.1} parent=11 // pred_region
        _
      $region56: #{autoencoder_forward.1} parent=11 // pred_fallthru
        _
      // Predicated region
      $region57: #{autoencoder_forward.1} parent=11 // pred_check
        %p437 = pneg %p300
      $region58: #{autoencoder_forward.1} parent=11 // pred_check_branch
        %439 = sbr.rel (%p437) target = $region60
      $region59: #{autoencoder_forward.1} parent=11 // pred_region
        _
      $region60: #{autoencoder_forward.1} parent=11 // pred_fallthru
        _
      // Predicated region
      $region61: #{autoencoder_forward.1} parent=11 // pred_check
        %p440 = pneg %p321
      $region62: #{autoencoder_forward.1} parent=11 // pred_check_branch
        %442 = sbr.rel (%p440) target = $region64
      $region63: #{autoencoder_forward.1} parent=11 // pred_region
        _
      $region64: #{autoencoder_forward.1} parent=11 // pred_fallthru
        _
      // Predicated region
      $region65: #{autoencoder_forward.1} parent=11 // pred_check
        %p443 = pneg %p342
      $region66: #{autoencoder_forward.1} parent=11 // pred_check_branch
        %445 = sbr.rel (%p443) target = $region68
      $region67: #{autoencoder_forward.1} parent=11 // pred_region
        _
      $region68: #{autoencoder_forward.1} parent=11 // pred_fallthru
        _
      // Predicated region
      $region69: #{autoencoder_forward.1} parent=11 // pred_check
        %p446 = pneg %p363
      $region70: #{autoencoder_forward.1} parent=11 // pred_check_branch
        %448 = sbr.rel (%p446) target = $region72
      $region71: #{autoencoder_forward.1} parent=11 // pred_region
        _
      $region72: #{autoencoder_forward.1} parent=11 // pred_fallthru
        _
    $region12: #{autoencoder_forward.1} parent=5 // pred_fallthru
      _
    %p449 = scmp.lt.s32.totalorder %s22, 2
    // Predicated region
    $region73: #{autoencoder_forward.1} parent=5 // pred_check
      %p450 = pneg %p449
    $region74: #{autoencoder_forward.1} parent=5 // pred_check_branch
      %452 = sbr.rel (%p450) target = $region76
    $region75: #{autoencoder_forward.1} parent=5 // pred_region
      // Predicated region
      $region77: #{autoencoder_forward.1} parent=75 // pred_check
        %p453 = pneg %p42
      $region78: #{autoencoder_forward.1} parent=75 // pred_check_branch
        %455 = sbr.rel (%p453) target = $region80
      $region79: #{autoencoder_forward.1} parent=75 // pred_region
        %p456 = scmp.lt.s32.totalorder %s22, 1
        %s457 = scalar_select %p456, %s22, 1
        %s458 = smul.addr %s457, 4
        %s459 = smul.addr %s458, 8
        %s460 = scalar_lea.vmem %s0, %s459
      $region80: #{autoencoder_forward.1} parent=75 // pred_fallthru
        _
    $region76: #{autoencoder_forward.1} parent=5 // pred_fallthru
      _
    %p461 = scmp.le.s32.totalorder 1, %s22
    %p462 = scmp.lt.s32.totalorder %s22, 3
    %p463 = pnand %p461, %p462
    %p464 = pneg %p463
    // Predicated region
    $region81: #{autoencoder_forward.1} parent=5 // pred_check
      _
    $region82: #{autoencoder_forward.1} parent=5 // pred_check_branch
      %466 = sbr.rel (%p463) target = $region84
    $region83: #{autoencoder_forward.1} parent=5 // pred_region
      %s467 = ssub.s32 %s22, 1
      %p468 = scmp.lt.s32.totalorder %s27, 1
      %s469 = scalar_select %p468, %s27, 1
      %s470 = smul.addr %s469, 4
      %s471 = smul.addr %s470, 8
      %s472 = scalar_lea.vmem %s0, %s471
      %p473 = pneg %p48
      %p474 = pneg %p45
      %p475 = pneg %p69
      %p476 = pneg %p66
      %p477 = pneg %p90
      %p478 = pneg %p87
      %p479 = pneg %p111
      %p480 = pneg %p108
      %p481 = pneg %p132
      %p482 = pneg %p129
      %p483 = pneg %p153
      %p484 = pneg %p150
      %p485 = pneg %p174
      %p486 = pneg %p171
      %p487 = pneg %p195
      %p488 = pneg %p192
      %p489 = pneg %p216
      %p490 = pneg %p213
      %p491 = pneg %p237
      %p492 = pneg %p234
      %p493 = pneg %p258
      %p494 = pneg %p255
      %p495 = pneg %p279
      %p496 = pneg %p276
      %p497 = pneg %p300
      %p498 = pneg %p297
      %p499 = pneg %p321
      %p500 = pneg %p318
      %p501 = pneg %p342
      %p502 = pneg %p339
      %p503 = pneg %p363
      %p504 = pneg %p360
      %p505 = pneg %p389
      %p506 = pneg %p386
      %p507 = scmp.lt.s32.totalorder %s27, 1
      %s508 = scalar_select %p507, %s27, 1
      %s509 = smul.addr %s508, 4
      %s510 = smul.addr %s509, 8
      %s511 = scalar_lea.vmem %s16, %s510
      %p512 = scmp.lt.s32.totalorder %s27, 1
      %s513 = scalar_select %p512, %s27, 1
      %s514 = smul.addr %s513, 4
      %s515 = smul.addr %s514, 8
      %s516 = scalar_lea.vmem %s0, %s515
      %p517 = scmp.lt.s32.totalorder %s27, 1
      %s518 = scalar_select %p517, %s27, 1
      %s519 = smul.addr %s518, 4
      %s520 = smul.addr %s519, 8
      %s521 = scalar_lea.vmem %s16, %s520
      %v522 = vld [vmem:[%s516] sm:$0xff]
      %v523 = vld [vmem:[%s516 + $0x8] sm:$0xff]
      %v524 = vld [vmem:[%s516 + $0x10] sm:$0xff]
      %v525 = vld [vmem:[%s516 + $0x18] sm:$0xff]
      %v526 = vld [vmem:[%s1] sm:$0xff]
      %v527 = vld [vmem:[%s1 + $0x8] sm:$0x7]
      %vm528 = vcmask 261120
      %v530 = vsel %vm528, %v526, 0
      %v533 = vsel %vm528, %v527, 0
      %535 = vmatprep.subr.mxu0 0.0
      %536 = vmatpush1.msra.mxu0 0.0
      %537 = vmatprep.subr.mxu0 0.0
      %538 = vmatpush1.msra.mxu0 0.0
      %539 = vmatprep.subr.mxu0 0.0
      %540 = vmatpush1.msra.mxu0 0.0
      %541 = vmatprep.subr.mxu0 0.0
      %542 = vmatpush1.msra.mxu0 0.0
      %543 = vmatprep.subr.mxu0 0.0
      %544 = vmatpush1.msra.mxu0 0.0
      %545 = vmatprep.subr.mxu0 0.0
      %546 = vmatpush1.msra.mxu0 0.0
      %547 = vmatprep.subr.mxu0 0.0
      %548 = vmatpush1.msra.mxu0 0.0
      %549 = vmatprep.subr.mxu0 0.0
      %550 = vmatpush1.msra.mxu0 0.0
      %551 = vmatprep.subr.mxu0 0.0
      %552 = vmatpush1.msra.mxu0 0.0
      %553 = vmatprep.subr.mxu0 0.0
      %554 = vmatpush1.msra.mxu0 0.0
      %555 = vmatprep.subr.mxu0 0.0
      %556 = vmatpush1.msra.mxu0 0.0
      %557 = vmatprep.subr.mxu0 0.0
      %558 = vmatpush1.msra.mxu0 0.0
      %559 = vmatprep.subr.mxu0 0.0
      %560 = vmatpush1.msra.mxu0 %v525
      %561 = vmatprep.subr.mxu0 0.0
      %562 = vmatpush1.msra.mxu0 %v524
      %563 = vmatprep.subr.mxu0 0.0
      %564 = vmatpush1.msra.mxu0 %v523
      %565 = vmatprep.subr.mxu0 0.0
      %566 = vmatpush1.msra.mxu0 %v522
      %567 = vmatprep.subr.mxu0 0.0
      %568 = vmatpush2.msra.mxu0 0.0
      %569 = vmatprep.subr.mxu0 0.0
      %570 = vmatpush2.msra.mxu0 0.0
      %571 = vmatprep.subr.mxu0 0.0
      %572 = vmatpush2.msra.mxu0 0.0
      %573 = vmatprep.subr.mxu0 0.0
      %574 = vmatpush2.msra.mxu0 0.0
      %575 = vmatprep.subr.mxu0 0.0
      %576 = vmatpush2.msra.mxu0 0.0
      %577 = vmatprep.subr.mxu0 0.0
      %578 = vmatpush2.msra.mxu0 0.0
      %579 = vmatprep.subr.mxu0 0.0
      %580 = vmatpush2.msra.mxu0 0.0
      %581 = vmatprep.subr.mxu0 0.0
      %582 = vmatpush2.msra.mxu0 0.0
      %583 = vmatprep.subr.mxu0 0.0
      %584 = vmatpush2.msra.mxu0 0.0
      %585 = vmatprep.subr.mxu0 0.0
      %586 = vmatpush2.msra.mxu0 0.0
      %587 = vmatprep.subr.mxu0 0.0
      %588 = vmatpush2.msra.mxu0 0.0
      %589 = vmatprep.subr.mxu0 0.0
      %590 = vmatpush2.msra.mxu0 0.0
      %591 = vmatprep.subr.mxu0 0.0
      %592 = vmatpush2.msra.mxu0 0.0
      %593 = vmatprep.subr.mxu0 0.0
      %594 = vmatpush2.msra.mxu0 0.0
      %595 = vmatprep.subr.mxu0 0.0
      %596 = vmatpush2.msra.mxu0 0.0
      %597 = vmatprep.subr.mxu0 0.0
      %598 = vmatpush2.msra.mxu0 0.0
      %599 = vmatprep.mubr.f32.mxu0 0.0
      %600 = vmatmul.mubr.f32.gmra.mxu0 %v530
      %v601 = vpop.f32.mrf.mxu0
      %v602 = vadd.f32 0.0, %v601
      %v603 = vpop.f32.mrf.mxu0
      %604 = vmatprep.mubr.f32.mxu0 0.0
      %605 = vmatmul.mubr.f32.gmra.mxu0 %v533
      %v606 = vpop.f32.mrf.mxu0
      %v607 = vadd.f32 0.0, %v606
      %v608 = vpop.f32.mrf.mxu0
      %609 = vdwg.mxu0
      %v610 = vld [vmem:[%s2] sm:$0xff]
      %v611 = vld [vmem:[%s2 + $0x8] sm:$0xff]
      %v612 = vld [vmem:[%s2 + $0x10] sm:$0xff]
      %v613 = vld [vmem:[%s2 + $0x18] sm:$0xff]
      %v614 = vld [vmem:[%s2 + $0x20] sm:$0xff]
      %v615 = vld [vmem:[%s2 + $0x28] sm:$0xff]
      %v616 = vld [vmem:[%s2 + $0x30] sm:$0xff]
      %v617 = vld [vmem:[%s2 + $0x38] sm:$0xff]
      %v618 = vld [vmem:[%s2 + $0x40] sm:$0xff]
      %v619 = vld [vmem:[%s2 + $0x48] sm:$0xff]
      %v620 = vld [vmem:[%s2 + $0x50] sm:$0xff]
      %v621 = vld [vmem:[%s2 + $0x58] sm:$0xff]
      %v622 = vld [vmem:[%s2 + $0x60] sm:$0xff]
      %v623 = vld [vmem:[%s2 + $0x68] sm:$0xff]
      %v624 = vld [vmem:[%s2 + $0x70] sm:$0xff]
      %v625 = vld [vmem:[%s2 + $0x78] sm:$0xff]
      %v626 = vld [vmem:[%s2 + $0x80] sm:$0xff]
      %v627 = vld [vmem:[%s2 + $0x88] sm:$0xff]
      %v628 = vld [vmem:[%s2 + $0x90] sm:$0xff]
      %v629 = vld [vmem:[%s2 + $0x98] sm:$0xff]
      %v630 = vld [vmem:[%s2 + $0xa0] sm:$0xff]
      %v631 = vld [vmem:[%s2 + $0xa8] sm:$0xff]
      %v632 = vld [vmem:[%s2 + $0xb0] sm:$0xff]
      %v633 = vld [vmem:[%s2 + $0xb8] sm:$0xff]
      %v634 = vld [vmem:[%s2 + $0xc0] sm:$0xff]
      %v635 = vld [vmem:[%s2 + $0xc8] sm:$0xff]
      %v636 = vld [vmem:[%s2 + $0xd0] sm:$0xff]
      %v637 = vld [vmem:[%s2 + $0xd8] sm:$0xff]
      %v638 = vld [vmem:[%s2 + $0xe0] sm:$0xff]
      %v639 = vld [vmem:[%s2 + $0xe8] sm:$0xff]
      %v640 = vld [vmem:[%s2 + $0xf0] sm:$0xff]
      %v641 = vld [vmem:[%s2 + $0xf8] sm:$0xff]
      %v642 = vld [vmem:[%s2 + $0x100] sm:$0xff]
      %v643 = vld [vmem:[%s2 + $0x108] sm:$0xff]
      %v644 = vld [vmem:[%s2 + $0x110] sm:$0xff]
      %v645 = vld [vmem:[%s2 + $0x118] sm:$0xff]
      %s646 = scalar_lea.vmem %s1, 16
      %v647 = vld [vmem:[%s646] sm:$0xff]
      %v648 = vld [vmem:[%s646 + $0x8] sm:$0x7]
      %v650 = vsel %vm528, %v647, 0
      %v653 = vsel %vm528, %v648, 0
      %655 = vmatprep.subr.mxu0 0.0
      %656 = vmatpush1.msra.mxu0 0.0
      %657 = vmatprep.subr.mxu0 0.0
      %658 = vmatpush1.msra.mxu0 0.0
      %659 = vmatprep.subr.mxu0 0.0
      %660 = vmatpush1.msra.mxu0 0.0
      %661 = vmatprep.subr.mxu0 0.0
      %662 = vmatpush1.msra.mxu0 0.0
      %663 = vmatprep.subr.mxu0 0.0
      %664 = vmatpush1.msra.mxu0 0.0
      %665 = vmatprep.subr.mxu0 0.0
      %666 = vmatpush1.msra.mxu0 0.0
      %667 = vmatprep.subr.mxu0 0.0
      %668 = vmatpush1.msra.mxu0 0.0
      %669 = vmatprep.subr.mxu0 0.0
      %670 = vmatpush1.msra.mxu0 0.0
      %671 = vmatprep.subr.mxu0 0.0
      %672 = vmatpush1.msra.mxu0 0.0
      %673 = vmatprep.subr.mxu0 0.0
      %674 = vmatpush1.msra.mxu0 0.0
      %675 = vmatprep.subr.mxu0 0.0
      %676 = vmatpush1.msra.mxu0 0.0
      %677 = vmatprep.subr.mxu0 0.0
      %678 = vmatpush1.msra.mxu0 0.0
      %679 = vmatprep.subr.mxu0 0.0
      %680 = vmatpush1.msra.mxu0 %v525
      %681 = vmatprep.subr.mxu0 0.0
      %682 = vmatpush1.msra.mxu0 %v524
      %683 = vmatprep.subr.mxu0 0.0
      %684 = vmatpush1.msra.mxu0 %v523
      %685 = vmatprep.subr.mxu0 0.0
      %686 = vmatpush1.msra.mxu0 %v522
      %687 = vmatprep.subr.mxu0 0.0
      %688 = vmatpush2.msra.mxu0 0.0
      %689 = vmatprep.subr.mxu0 0.0
      %690 = vmatpush2.msra.mxu0 0.0
      %691 = vmatprep.subr.mxu0 0.0
      %692 = vmatpush2.msra.mxu0 0.0
      %693 = vmatprep.subr.mxu0 0.0
      %694 = vmatpush2.msra.mxu0 0.0
      %695 = vmatprep.subr.mxu0 0.0
      %696 = vmatpush2.msra.mxu0 0.0
      %697 = vmatprep.subr.mxu0 0.0
      %698 = vmatpush2.msra.mxu0 0.0
      %699 = vmatprep.subr.mxu0 0.0
      %700 = vmatpush2.msra.mxu0 0.0
      %701 = vmatprep.subr.mxu0 0.0
      %702 = vmatpush2.msra.mxu0 0.0
      %703 = vmatprep.subr.mxu0 0.0
      %704 = vmatpush2.msra.mxu0 0.0
      %705 = vmatprep.subr.mxu0 0.0
      %706 = vmatpush2.msra.mxu0 0.0
      %707 = vmatprep.subr.mxu0 0.0
      %708 = vmatpush2.msra.mxu0 0.0
      %709 = vmatprep.subr.mxu0 0.0
      %710 = vmatpush2.msra.mxu0 0.0
      %711 = vmatprep.subr.mxu0 0.0
      %712 = vmatpush2.msra.mxu0 0.0
      %713 = vmatprep.subr.mxu0 0.0
      %714 = vmatpush2.msra.mxu0 0.0
      %715 = vmatprep.subr.mxu0 0.0
      %716 = vmatpush2.msra.mxu0 0.0
      %717 = vmatprep.subr.mxu0 0.0
      %718 = vmatpush2.msra.mxu0 0.0
      %719 = vmatprep.mubr.f32.mxu0 0.0
      %720 = vmatmul.mubr.f32.gmra.mxu0 %v650
      %v721 = vpop.f32.mrf.mxu0
      %v722 = vadd.f32 0.0, %v721
      %v723 = vpop.f32.mrf.mxu0
      %724 = vmatprep.mubr.f32.mxu0 0.0
      %725 = vmatmul.mubr.f32.gmra.mxu0 %v653
      %v726 = vpop.f32.mrf.mxu0
      %v727 = vadd.f32 0.0, %v726
      %v728 = vpop.f32.mrf.mxu0
      %729 = vdwg.mxu0
      %s730 = scalar_lea.vmem %s2, 288
      %v731 = vld [vmem:[%s730] sm:$0xff]
      %v732 = vld [vmem:[%s730 + $0x8] sm:$0xff]
      %v733 = vld [vmem:[%s730 + $0x10] sm:$0xff]
      %v734 = vld [vmem:[%s730 + $0x18] sm:$0xff]
      %v735 = vld [vmem:[%s730 + $0x20] sm:$0xff]
      %v736 = vld [vmem:[%s730 + $0x28] sm:$0xff]
      %v737 = vld [vmem:[%s730 + $0x30] sm:$0xff]
      %v738 = vld [vmem:[%s730 + $0x38] sm:$0xff]
      %v739 = vld [vmem:[%s730 + $0x40] sm:$0xff]
      %v740 = vld [vmem:[%s730 + $0x48] sm:$0xff]
      %v741 = vld [vmem:[%s730 + $0x50] sm:$0xff]
      %v742 = vld [vmem:[%s730 + $0x58] sm:$0xff]
      %v743 = vld [vmem:[%s730 + $0x60] sm:$0xff]
      %v744 = vld [vmem:[%s730 + $0x68] sm:$0xff]
      %v745 = vld [vmem:[%s730 + $0x70] sm:$0xff]
      %v746 = vld [vmem:[%s730 + $0x78] sm:$0xff]
      %v747 = vld [vmem:[%s730 + $0x80] sm:$0xff]
      %v748 = vld [vmem:[%s730 + $0x88] sm:$0xff]
      %v749 = vld [vmem:[%s730 + $0x90] sm:$0xff]
      %v750 = vld [vmem:[%s730 + $0x98] sm:$0xff]
      %v751 = vld [vmem:[%s730 + $0xa0] sm:$0xff]
      %v752 = vld [vmem:[%s730 + $0xa8] sm:$0xff]
      %v753 = vld [vmem:[%s730 + $0xb0] sm:$0xff]
      %v754 = vld [vmem:[%s730 + $0xb8] sm:$0xff]
      %v755 = vld [vmem:[%s730 + $0xc0] sm:$0xff]
      %v756 = vld [vmem:[%s730 + $0xc8] sm:$0xff]
      %v757 = vld [vmem:[%s730 + $0xd0] sm:$0xff]
      %v758 = vld [vmem:[%s730 + $0xd8] sm:$0xff]
      %v759 = vld [vmem:[%s730 + $0xe0] sm:$0xff]
      %v760 = vld [vmem:[%s730 + $0xe8] sm:$0xff]
      %v761 = vld [vmem:[%s730 + $0xf0] sm:$0xff]
      %v762 = vld [vmem:[%s730 + $0xf8] sm:$0xff]
      %v763 = vld [vmem:[%s730 + $0x100] sm:$0xff]
      %v764 = vld [vmem:[%s730 + $0x108] sm:$0xff]
      %v765 = vld [vmem:[%s730 + $0x110] sm:$0xff]
      %v766 = vld [vmem:[%s730 + $0x118] sm:$0xff]
      %vm767 = vcmask 785408
      %v769 = vsel %vm767, %v722, 0
      %v772 = vsel %vm767, %v727, 0
      %774 = vmatprep.subr.mxu0 0.0
      %775 = vmatpush1.msra.mxu0 0.0
      %776 = vmatprep.subr.mxu0 0.0
      %777 = vmatpush1.msra.mxu0 0.0
      %778 = vmatprep.subr.mxu0 0.0
      %779 = vmatpush1.msra.mxu0 0.0
      %780 = vmatprep.subr.mxu0 0.0
      %781 = vmatpush1.msra.mxu0 0.0
      %782 = vmatprep.subr.mxu0 %v765
      %783 = vmatpush1.msra.mxu0 %v764
      %784 = vmatprep.subr.mxu0 %v762
      %785 = vmatpush1.msra.mxu0 %v761
      %786 = vmatprep.subr.mxu0 %v759
      %787 = vmatpush1.msra.mxu0 %v758
      %788 = vmatprep.subr.mxu0 %v756
      %789 = vmatpush1.msra.mxu0 %v755
      %790 = vmatprep.subr.mxu0 %v753
      %791 = vmatpush1.msra.mxu0 %v752
      %792 = vmatprep.subr.mxu0 %v750
      %793 = vmatpush1.msra.mxu0 %v749
      %794 = vmatprep.subr.mxu0 %v747
      %795 = vmatpush1.msra.mxu0 %v746
      %796 = vmatprep.subr.mxu0 %v744
      %797 = vmatpush1.msra.mxu0 %v743
      %798 = vmatprep.subr.mxu0 %v741
      %799 = vmatpush1.msra.mxu0 %v740
      %800 = vmatprep.subr.mxu0 %v738
      %801 = vmatpush1.msra.mxu0 %v737
      %802 = vmatprep.subr.mxu0 %v735
      %803 = vmatpush1.msra.mxu0 %v734
      %804 = vmatprep.subr.mxu0 %v732
      %805 = vmatpush1.msra.mxu0 %v731
      %806 = vmatprep.subr.mxu0 0.0
      %807 = vmatpush2.msra.mxu0 0.0
      %808 = vmatprep.subr.mxu0 0.0
      %809 = vmatpush2.msra.mxu0 0.0
      %810 = vmatprep.subr.mxu0 0.0
      %811 = vmatpush2.msra.mxu0 0.0
      %812 = vmatprep.subr.mxu0 0.0
      %813 = vmatpush2.msra.mxu0 0.0
      %814 = vmatprep.subr.mxu0 0.0
      %815 = vmatpush2.msra.mxu0 0.0
      %816 = vmatprep.subr.mxu0 0.0
      %817 = vmatpush2.msra.mxu0 0.0
      %818 = vmatprep.subr.mxu0 0.0
      %819 = vmatpush2.msra.mxu0 0.0
      %820 = vmatprep.subr.mxu0 0.0
      %821 = vmatpush2.msra.mxu0 0.0
      %822 = vmatprep.subr.mxu0 0.0
      %823 = vmatpush2.msra.mxu0 0.0
      %824 = vmatprep.subr.mxu0 0.0
      %825 = vmatpush2.msra.mxu0 0.0
      %826 = vmatprep.subr.mxu0 0.0
      %827 = vmatpush2.msra.mxu0 0.0
      %828 = vmatprep.subr.mxu0 0.0
      %829 = vmatpush2.msra.mxu0 0.0
      %830 = vmatprep.subr.mxu0 0.0
      %831 = vmatpush2.msra.mxu0 0.0
      %832 = vmatprep.subr.mxu0 0.0
      %833 = vmatpush2.msra.mxu0 0.0
      %834 = vmatprep.subr.mxu0 0.0
      %835 = vmatpush2.msra.mxu0 0.0
      %836 = vmatprep.subr.mxu0 0.0
      %837 = vmatpush2.msra.mxu0 0.0
      %838 = vmatprep.mubr.f32.mxu0 0.0
      %839 = vmatmul.mubr.f32.gmra.mxu0 %v769
      %v840 = vpop.f32.mrf.mxu0
      %v841 = vadd.f32 0.0, %v840
      %v842 = vpop.f32.mrf.mxu0
      %v843 = vadd.f32 0.0, %v842
      %844 = vmatprep.mubr.f32.mxu0 0.0
      %845 = vmatmul.mubr.f32.gmra.mxu0 %v772
      %v846 = vpop.f32.mrf.mxu0
      %v847 = vadd.f32 0.0, %v846
      %v848 = vpop.f32.mrf.mxu0
      %v849 = vadd.f32 0.0, %v848
      %850 = vdwg.mxu0
      %851 = vmatprep.subr.mxu0 0.0
      %852 = vmatpush1.msra.mxu0 0.0
      %853 = vmatprep.subr.mxu0 0.0
      %854 = vmatpush1.msra.mxu0 0.0
      %855 = vmatprep.subr.mxu0 0.0
      %856 = vmatpush1.msra.mxu0 0.0
      %857 = vmatprep.subr.mxu0 0.0
      %858 = vmatpush1.msra.mxu0 0.0
      %859 = vmatprep.subr.mxu0 0.0
      %860 = vmatpush1.msra.mxu0 %v766
      %861 = vmatprep.subr.mxu0 0.0
      %862 = vmatpush1.msra.mxu0 %v763
      %863 = vmatprep.subr.mxu0 0.0
      %864 = vmatpush1.msra.mxu0 %v760
      %865 = vmatprep.subr.mxu0 0.0
      %866 = vmatpush1.msra.mxu0 %v757
      %867 = vmatprep.subr.mxu0 0.0
      %868 = vmatpush1.msra.mxu0 %v754
      %869 = vmatprep.subr.mxu0 0.0
      %870 = vmatpush1.msra.mxu0 %v751
      %871 = vmatprep.subr.mxu0 0.0
      %872 = vmatpush1.msra.mxu0 %v748
      %873 = vmatprep.subr.mxu0 0.0
      %874 = vmatpush1.msra.mxu0 %v745
      %875 = vmatprep.subr.mxu0 0.0
      %876 = vmatpush1.msra.mxu0 %v742
      %877 = vmatprep.subr.mxu0 0.0
      %878 = vmatpush1.msra.mxu0 %v739
      %879 = vmatprep.subr.mxu0 0.0
      %880 = vmatpush1.msra.mxu0 %v736
      %881 = vmatprep.subr.mxu0 0.0
      %882 = vmatpush1.msra.mxu0 %v733
      %883 = vmatprep.subr.mxu0 0.0
      %884 = vmatpush2.msra.mxu0 0.0
      %885 = vmatprep.subr.mxu0 0.0
      %886 = vmatpush2.msra.mxu0 0.0
      %887 = vmatprep.subr.mxu0 0.0
      %888 = vmatpush2.msra.mxu0 0.0
      %889 = vmatprep.subr.mxu0 0.0
      %890 = vmatpush2.msra.mxu0 0.0
      %891 = vmatprep.subr.mxu0 0.0
      %892 = vmatpush2.msra.mxu0 0.0
      %893 = vmatprep.subr.mxu0 0.0
      %894 = vmatpush2.msra.mxu0 0.0
      %895 = vmatprep.subr.mxu0 0.0
      %896 = vmatpush2.msra.mxu0 0.0
      %897 = vmatprep.subr.mxu0 0.0
      %898 = vmatpush2.msra.mxu0 0.0
      %899 = vmatprep.subr.mxu0 0.0
      %900 = vmatpush2.msra.mxu0 0.0
      %901 = vmatprep.subr.mxu0 0.0
      %902 = vmatpush2.msra.mxu0 0.0
      %903 = vmatprep.subr.mxu0 0.0
      %904 = vmatpush2.msra.mxu0 0.0
      %905 = vmatprep.subr.mxu0 0.0
      %906 = vmatpush2.msra.mxu0 0.0
      %907 = vmatprep.subr.mxu0 0.0
      %908 = vmatpush2.msra.mxu0 0.0
      %909 = vmatprep.subr.mxu0 0.0
      %910 = vmatpush2.msra.mxu0 0.0
      %911 = vmatprep.subr.mxu0 0.0
      %912 = vmatpush2.msra.mxu0 0.0
      %913 = vmatprep.subr.mxu0 0.0
      %914 = vmatpush2.msra.mxu0 0.0
      %915 = vmatprep.mubr.f32.mxu0 0.0
      %916 = vmatmul.mubr.f32.gmra.mxu0 %v769
      %v917 = vpop.f32.mrf.mxu0
      %v918 = vadd.f32 0.0, %v917
      %v919 = vpop.f32.mrf.mxu0
      %920 = vmatprep.mubr.f32.mxu0 0.0
      %921 = vmatmul.mubr.f32.gmra.mxu0 %v772
      %v922 = vpop.f32.mrf.mxu0
      %v923 = vadd.f32 0.0, %v922
      %v924 = vpop.f32.mrf.mxu0
      %925 = vdwg.mxu0
      %v927 = vsel %vm767, %v602, 0
      %v930 = vsel %vm767, %v607, 0
      %932 = vmatprep.subr.mxu0 0.0
      %933 = vmatpush1.msra.mxu0 0.0
      %934 = vmatprep.subr.mxu0 0.0
      %935 = vmatpush1.msra.mxu0 0.0
      %936 = vmatprep.subr.mxu0 0.0
      %937 = vmatpush1.msra.mxu0 0.0
      %938 = vmatprep.subr.mxu0 0.0
      %939 = vmatpush1.msra.mxu0 0.0
      %940 = vmatprep.subr.mxu0 %v644
      %941 = vmatpush1.msra.mxu0 %v643
      %942 = vmatprep.subr.mxu0 %v641
      %943 = vmatpush1.msra.mxu0 %v640
      %944 = vmatprep.subr.mxu0 %v638
      %945 = vmatpush1.msra.mxu0 %v637
      %946 = vmatprep.subr.mxu0 %v635
      %947 = vmatpush1.msra.mxu0 %v634
      %948 = vmatprep.subr.mxu0 %v632
      %949 = vmatpush1.msra.mxu0 %v631
      %950 = vmatprep.subr.mxu0 %v629
      %951 = vmatpush1.msra.mxu0 %v628
      %952 = vmatprep.subr.mxu0 %v626
      %953 = vmatpush1.msra.mxu0 %v625
      %954 = vmatprep.subr.mxu0 %v623
      %955 = vmatpush1.msra.mxu0 %v622
      %956 = vmatprep.subr.mxu0 %v620
      %957 = vmatpush1.msra.mxu0 %v619
      %958 = vmatprep.subr.mxu0 %v617
      %959 = vmatpush1.msra.mxu0 %v616
      %960 = vmatprep.subr.mxu0 %v614
      %961 = vmatpush1.msra.mxu0 %v613
      %962 = vmatprep.subr.mxu0 %v611
      %963 = vmatpush1.msra.mxu0 %v610
      %964 = vmatprep.subr.mxu0 0.0
      %965 = vmatpush2.msra.mxu0 0.0
      %966 = vmatprep.subr.mxu0 0.0
      %967 = vmatpush2.msra.mxu0 0.0
      %968 = vmatprep.subr.mxu0 0.0
      %969 = vmatpush2.msra.mxu0 0.0
      %970 = vmatprep.subr.mxu0 0.0
      %971 = vmatpush2.msra.mxu0 0.0
      %972 = vmatprep.subr.mxu0 0.0
      %973 = vmatpush2.msra.mxu0 0.0
      %974 = vmatprep.subr.mxu0 0.0
      %975 = vmatpush2.msra.mxu0 0.0
      %976 = vmatprep.subr.mxu0 0.0
      %977 = vmatpush2.msra.mxu0 0.0
      %978 = vmatprep.subr.mxu0 0.0
      %979 = vmatpush2.msra.mxu0 0.0
      %980 = vmatprep.subr.mxu0 0.0
      %981 = vmatpush2.msra.mxu0 0.0
      %982 = vmatprep.subr.mxu0 0.0
      %983 = vmatpush2.msra.mxu0 0.0
      %984 = vmatprep.subr.mxu0 0.0
      %985 = vmatpush2.msra.mxu0 0.0
      %986 = vmatprep.subr.mxu0 0.0
      %987 = vmatpush2.msra.mxu0 0.0
      %988 = vmatprep.subr.mxu0 0.0
      %989 = vmatpush2.msra.mxu0 0.0
      %990 = vmatprep.subr.mxu0 0.0
      %991 = vmatpush2.msra.mxu0 0.0
      %992 = vmatprep.subr.mxu0 0.0
      %993 = vmatpush2.msra.mxu0 0.0
      %994 = vmatprep.subr.mxu0 0.0
      %995 = vmatpush2.msra.mxu0 0.0
      %996 = vmatprep.mubr.f32.mxu0 0.0
      %997 = vmatmul.mubr.f32.gmra.mxu0 %v927
      %v998 = vpop.f32.mrf.mxu0
      %v999 = vadd.f32 %v841, %v998
      %v1000 = vpop.f32.mrf.mxu0
      %v1001 = vadd.f32 %v843, %v1000
      %1002 = vmatprep.mubr.f32.mxu0 0.0
      %1003 = vmatmul.mubr.f32.gmra.mxu0 %v930
      %v1004 = vpop.f32.mrf.mxu0
      %v1005 = vadd.f32 %v847, %v1004
      %v1006 = vpop.f32.mrf.mxu0
      %v1007 = vadd.f32 %v849, %v1006
      %1008 = vdwg.mxu0
      %1009 = vmatprep.subr.mxu0 0.0
      %1010 = vmatpush1.msra.mxu0 0.0
      %1011 = vmatprep.subr.mxu0 0.0
      %1012 = vmatpush1.msra.mxu0 0.0
      %1013 = vmatprep.subr.mxu0 0.0
      %1014 = vmatpush1.msra.mxu0 0.0
      %1015 = vmatprep.subr.mxu0 0.0
      %1016 = vmatpush1.msra.mxu0 0.0
      %1017 = vmatprep.subr.mxu0 0.0
      %1018 = vmatpush1.msra.mxu0 %v645
      %1019 = vmatprep.subr.mxu0 0.0
      %1020 = vmatpush1.msra.mxu0 %v642
      %1021 = vmatprep.subr.mxu0 0.0
      %1022 = vmatpush1.msra.mxu0 %v639
      %1023 = vmatprep.subr.mxu0 0.0
      %1024 = vmatpush1.msra.mxu0 %v636
      %1025 = vmatprep.subr.mxu0 0.0
      %1026 = vmatpush1.msra.mxu0 %v633
      %1027 = vmatprep.subr.mxu0 0.0
      %1028 = vmatpush1.msra.mxu0 %v630
      %1029 = vmatprep.subr.mxu0 0.0
      %1030 = vmatpush1.msra.mxu0 %v627
      %1031 = vmatprep.subr.mxu0 0.0
      %1032 = vmatpush1.msra.mxu0 %v624
      %1033 = vmatprep.subr.mxu0 0.0
      %1034 = vmatpush1.msra.mxu0 %v621
      %1035 = vmatprep.subr.mxu0 0.0
      %1036 = vmatpush1.msra.mxu0 %v618
      %1037 = vmatprep.subr.mxu0 0.0
      %1038 = vmatpush1.msra.mxu0 %v615
      %1039 = vmatprep.subr.mxu0 0.0
      %1040 = vmatpush1.msra.mxu0 %v612
      %1041 = vmatprep.subr.mxu0 0.0
      %1042 = vmatpush2.msra.mxu0 0.0
      %1043 = vmatprep.subr.mxu0 0.0
      %1044 = vmatpush2.msra.mxu0 0.0
      %1045 = vmatprep.subr.mxu0 0.0
      %1046 = vmatpush2.msra.mxu0 0.0
      %1047 = vmatprep.subr.mxu0 0.0
      %1048 = vmatpush2.msra.mxu0 0.0
      %1049 = vmatprep.subr.mxu0 0.0
      %1050 = vmatpush2.msra.mxu0 0.0
      %1051 = vmatprep.subr.mxu0 0.0
      %1052 = vmatpush2.msra.mxu0 0.0
      %1053 = vmatprep.subr.mxu0 0.0
      %1054 = vmatpush2.msra.mxu0 0.0
      %1055 = vmatprep.subr.mxu0 0.0
      %1056 = vmatpush2.msra.mxu0 0.0
      %1057 = vmatprep.subr.mxu0 0.0
      %1058 = vmatpush2.msra.mxu0 0.0
      %1059 = vmatprep.subr.mxu0 0.0
      %1060 = vmatpush2.msra.mxu0 0.0
      %1061 = vmatprep.subr.mxu0 0.0
      %1062 = vmatpush2.msra.mxu0 0.0
      %1063 = vmatprep.subr.mxu0 0.0
      %1064 = vmatpush2.msra.mxu0 0.0
      %1065 = vmatprep.subr.mxu0 0.0
      %1066 = vmatpush2.msra.mxu0 0.0
      %1067 = vmatprep.subr.mxu0 0.0
      %1068 = vmatpush2.msra.mxu0 0.0
      %1069 = vmatprep.subr.mxu0 0.0
      %1070 = vmatpush2.msra.mxu0 0.0
      %1071 = vmatprep.subr.mxu0 0.0
      %1072 = vmatpush2.msra.mxu0 0.0
      %1073 = vmatprep.mubr.f32.mxu0 0.0
      %1074 = vmatmul.mubr.f32.gmra.mxu0 %v927
      %v1075 = vpop.f32.mrf.mxu0
      %v1076 = vadd.f32 %v918, %v1075
      %v1077 = vpop.f32.mrf.mxu0
      %1078 = vmatprep.mubr.f32.mxu0 0.0
      %1079 = vmatmul.mubr.f32.gmra.mxu0 %v930
      %v1080 = vpop.f32.mrf.mxu0
      %v1081 = vadd.f32 %v923, %v1080
      %v1082 = vpop.f32.mrf.mxu0
      %1083 = vdwg.mxu0
      %s1084 = scalar_lea.vmem %s1, 32
      %v1085 = vld [vmem:[%s1084] sm:$0xff]
      %v1086 = vld [vmem:[%s1084 + $0x8] sm:$0x7]
      %v1088 = vsel %vm528, %v1085, 0
      %v1091 = vsel %vm528, %v1086, 0
      %1093 = vmatprep.subr.mxu0 0.0
      %1094 = vmatpush1.msra.mxu0 0.0
      %1095 = vmatprep.subr.mxu0 0.0
      %1096 = vmatpush1.msra.mxu0 0.0
      %1097 = vmatprep.subr.mxu0 0.0
      %1098 = vmatpush1.msra.mxu0 0.0
      %1099 = vmatprep.subr.mxu0 0.0
      %1100 = vmatpush1.msra.mxu0 0.0
      %1101 = vmatprep.subr.mxu0 0.0
      %1102 = vmatpush1.msra.mxu0 0.0
      %1103 = vmatprep.subr.mxu0 0.0
      %1104 = vmatpush1.msra.mxu0 0.0
      %1105 = vmatprep.subr.mxu0 0.0
      %1106 = vmatpush1.msra.mxu0 0.0
      %1107 = vmatprep.subr.mxu0 0.0
      %1108 = vmatpush1.msra.mxu0 0.0
      %1109 = vmatprep.subr.mxu0 0.0
      %1110 = vmatpush1.msra.mxu0 0.0
      %1111 = vmatprep.subr.mxu0 0.0
      %1112 = vmatpush1.msra.mxu0 0.0
      %1113 = vmatprep.subr.mxu0 0.0
      %1114 = vmatpush1.msra.mxu0 0.0
      %1115 = vmatprep.subr.mxu0 0.0
      %1116 = vmatpush1.msra.mxu0 0.0
      %1117 = vmatprep.subr.mxu0 0.0
      %1118 = vmatpush1.msra.mxu0 %v525
      %1119 = vmatprep.subr.mxu0 0.0
      %1120 = vmatpush1.msra.mxu0 %v524
      %1121 = vmatprep.subr.mxu0 0.0
      %1122 = vmatpush1.msra.mxu0 %v523
      %1123 = vmatprep.subr.mxu0 0.0
      %1124 = vmatpush1.msra.mxu0 %v522
      %1125 = vmatprep.subr.mxu0 0.0
      %1126 = vmatpush2.msra.mxu0 0.0
      %1127 = vmatprep.subr.mxu0 0.0
      %1128 = vmatpush2.msra.mxu0 0.0
      %1129 = vmatprep.subr.mxu0 0.0
      %1130 = vmatpush2.msra.mxu0 0.0
      %1131 = vmatprep.subr.mxu0 0.0
      %1132 = vmatpush2.msra.mxu0 0.0
      %1133 = vmatprep.subr.mxu0 0.0
      %1134 = vmatpush2.msra.mxu0 0.0
      %1135 = vmatprep.subr.mxu0 0.0
      %1136 = vmatpush2.msra.mxu0 0.0
      %1137 = vmatprep.subr.mxu0 0.0
      %1138 = vmatpush2.msra.mxu0 0.0
      %1139 = vmatprep.subr.mxu0 0.0
      %1140 = vmatpush2.msra.mxu0 0.0
      %1141 = vmatprep.subr.mxu0 0.0
      %1142 = vmatpush2.msra.mxu0 0.0
      %1143 = vmatprep.subr.mxu0 0.0
      %1144 = vmatpush2.msra.mxu0 0.0
      %1145 = vmatprep.subr.mxu0 0.0
      %1146 = vmatpush2.msra.mxu0 0.0
      %1147 = vmatprep.subr.mxu0 0.0
      %1148 = vmatpush2.msra.mxu0 0.0
      %1149 = vmatprep.subr.mxu0 0.0
      %1150 = vmatpush2.msra.mxu0 0.0
      %1151 = vmatprep.subr.mxu0 0.0
      %1152 = vmatpush2.msra.mxu0 0.0
      %1153 = vmatprep.subr.mxu0 0.0
      %1154 = vmatpush2.msra.mxu0 0.0
      %1155 = vmatprep.subr.mxu0 0.0
      %1156 = vmatpush2.msra.mxu0 0.0
      %1157 = vmatprep.mubr.f32.mxu0 0.0
      %1158 = vmatmul.mubr.f32.gmra.mxu0 %v1088
      %v1159 = vpop.f32.mrf.mxu0
      %v1160 = vadd.f32 0.0, %v1159
      %v1161 = vpop.f32.mrf.mxu0
      %1162 = vmatprep.mubr.f32.mxu0 0.0
      %1163 = vmatmul.mubr.f32.gmra.mxu0 %v1091
      %v1164 = vpop.f32.mrf.mxu0
      %v1165 = vadd.f32 0.0, %v1164
      %v1166 = vpop.f32.mrf.mxu0
      %1167 = vdwg.mxu0
      %s1168 = scalar_lea.vmem %s2, 576
      %v1169 = vld [vmem:[%s1168] sm:$0xff]
      %v1170 = vld [vmem:[%s1168 + $0x8] sm:$0xff]
      %v1171 = vld [vmem:[%s1168 + $0x10] sm:$0xff]
      %v1172 = vld [vmem:[%s1168 + $0x18] sm:$0xff]
      %v1173 = vld [vmem:[%s1168 + $0x20] sm:$0xff]
      %v1174 = vld [vmem:[%s1168 + $0x28] sm:$0xff]
      %v1175 = vld [vmem:[%s1168 + $0x30] sm:$0xff]
      %v1176 = vld [vmem:[%s1168 + $0x38] sm:$0xff]
      %v1177 = vld [vmem:[%s1168 + $0x40] sm:$0xff]
      %v1178 = vld [vmem:[%s1168 + $0x48] sm:$0xff]
      %v1179 = vld [vmem:[%s1168 + $0x50] sm:$0xff]
      %v1180 = vld [vmem:[%s1168 + $0x58] sm:$0xff]
      %v1181 = vld [vmem:[%s1168 + $0x60] sm:$0xff]
      %v1182 = vld [vmem:[%s1168 + $0x68] sm:$0xff]
      %v1183 = vld [vmem:[%s1168 + $0x70] sm:$0xff]
      %v1184 = vld [vmem:[%s1168 + $0x78] sm:$0xff]
      %v1185 = vld [vmem:[%s1168 + $0x80] sm:$0xff]
      %v1186 = vld [vmem:[%s1168 + $0x88] sm:$0xff]
      %v1187 = vld [vmem:[%s1168 + $0x90] sm:$0xff]
      %v1188 = vld [vmem:[%s1168 + $0x98] sm:$0xff]
      %v1189 = vld [vmem:[%s1168 + $0xa0] sm:$0xff]
      %v1190 = vld [vmem:[%s1168 + $0xa8] sm:$0xff]
      %v1191 = vld [vmem:[%s1168 + $0xb0] sm:$0xff]
      %v1192 = vld [vmem:[%s1168 + $0xb8] sm:$0xff]
      %v1193 = vld [vmem:[%s1168 + $0xc0] sm:$0xff]
      %v1194 = vld [vmem:[%s1168 + $0xc8] sm:$0xff]
      %v1195 = vld [vmem:[%s1168 + $0xd0] sm:$0xff]
      %v1196 = vld [vmem:[%s1168 + $0xd8] sm:$0xff]
      %v1197 = vld [vmem:[%s1168 + $0xe0] sm:$0xff]
      %v1198 = vld [vmem:[%s1168 + $0xe8] sm:$0xff]
      %v1199 = vld [vmem:[%s1168 + $0xf0] sm:$0xff]
      %v1200 = vld [vmem:[%s1168 + $0xf8] sm:$0xff]
      %v1201 = vld [vmem:[%s1168 + $0x100] sm:$0xff]
      %v1202 = vld [vmem:[%s1168 + $0x108] sm:$0xff]
      %v1203 = vld [vmem:[%s1168 + $0x110] sm:$0xff]
      %v1204 = vld [vmem:[%s1168 + $0x118] sm:$0xff]
      %v1206 = vsel %vm767, %v1160, 0
      %v1209 = vsel %vm767, %v1165, 0
      %1211 = vmatprep.subr.mxu0 0.0
      %1212 = vmatpush1.msra.mxu0 0.0
      %1213 = vmatprep.subr.mxu0 0.0
      %1214 = vmatpush1.msra.mxu0 0.0
      %1215 = vmatprep.subr.mxu0 0.0
      %1216 = vmatpush1.msra.mxu0 0.0
      %1217 = vmatprep.subr.mxu0 0.0
      %1218 = vmatpush1.msra.mxu0 0.0
      %1219 = vmatprep.subr.mxu0 %v1203
      %1220 = vmatpush1.msra.mxu0 %v1202
      %1221 = vmatprep.subr.mxu0 %v1200
      %1222 = vmatpush1.msra.mxu0 %v1199
      %1223 = vmatprep.subr.mxu0 %v1197
      %1224 = vmatpush1.msra.mxu0 %v1196
      %1225 = vmatprep.subr.mxu0 %v1194
      %1226 = vmatpush1.msra.mxu0 %v1193
      %1227 = vmatprep.subr.mxu0 %v1191
      %1228 = vmatpush1.msra.mxu0 %v1190
      %1229 = vmatprep.subr.mxu0 %v1188
      %1230 = vmatpush1.msra.mxu0 %v1187
      %1231 = vmatprep.subr.mxu0 %v1185
      %1232 = vmatpush1.msra.mxu0 %v1184
      %1233 = vmatprep.subr.mxu0 %v1182
      %1234 = vmatpush1.msra.mxu0 %v1181
      %1235 = vmatprep.subr.mxu0 %v1179
      %1236 = vmatpush1.msra.mxu0 %v1178
      %1237 = vmatprep.subr.mxu0 %v1176
      %1238 = vmatpush1.msra.mxu0 %v1175
      %1239 = vmatprep.subr.mxu0 %v1173
      %1240 = vmatpush1.msra.mxu0 %v1172
      %1241 = vmatprep.subr.mxu0 %v1170
      %1242 = vmatpush1.msra.mxu0 %v1169
      %1243 = vmatprep.subr.mxu0 0.0
      %1244 = vmatpush2.msra.mxu0 0.0
      %1245 = vmatprep.subr.mxu0 0.0
      %1246 = vmatpush2.msra.mxu0 0.0
      %1247 = vmatprep.subr.mxu0 0.0
      %1248 = vmatpush2.msra.mxu0 0.0
      %1249 = vmatprep.subr.mxu0 0.0
      %1250 = vmatpush2.msra.mxu0 0.0
      %1251 = vmatprep.subr.mxu0 0.0
      %1252 = vmatpush2.msra.mxu0 0.0
      %1253 = vmatprep.subr.mxu0 0.0
      %1254 = vmatpush2.msra.mxu0 0.0
      %1255 = vmatprep.subr.mxu0 0.0
      %1256 = vmatpush2.msra.mxu0 0.0
      %1257 = vmatprep.subr.mxu0 0.0
      %1258 = vmatpush2.msra.mxu0 0.0
      %1259 = vmatprep.subr.mxu0 0.0
      %1260 = vmatpush2.msra.mxu0 0.0
      %1261 = vmatprep.subr.mxu0 0.0
      %1262 = vmatpush2.msra.mxu0 0.0
      %1263 = vmatprep.subr.mxu0 0.0
      %1264 = vmatpush2.msra.mxu0 0.0
      %1265 = vmatprep.subr.mxu0 0.0
      %1266 = vmatpush2.msra.mxu0 0.0
      %1267 = vmatprep.subr.mxu0 0.0
      %1268 = vmatpush2.msra.mxu0 0.0
      %1269 = vmatprep.subr.mxu0 0.0
      %1270 = vmatpush2.msra.mxu0 0.0
      %1271 = vmatprep.subr.mxu0 0.0
      %1272 = vmatpush2.msra.mxu0 0.0
      %1273 = vmatprep.subr.mxu0 0.0
      %1274 = vmatpush2.msra.mxu0 0.0
      %1275 = vmatprep.mubr.f32.mxu0 0.0
      %1276 = vmatmul.mubr.f32.gmra.mxu0 %v1206
      %v1277 = vpop.f32.mrf.mxu0
      %v1278 = vadd.f32 0.0, %v1277
      %v1279 = vpop.f32.mrf.mxu0
      %v1280 = vadd.f32 0.0, %v1279
      %1281 = vmatprep.mubr.f32.mxu0 0.0
      %1282 = vmatmul.mubr.f32.gmra.mxu0 %v1209
      %v1283 = vpop.f32.mrf.mxu0
      %v1284 = vadd.f32 0.0, %v1283
      %v1285 = vpop.f32.mrf.mxu0
      %v1286 = vadd.f32 0.0, %v1285
      %1287 = vdwg.mxu0
      %1288 = vmatprep.subr.mxu0 0.0
      %1289 = vmatpush1.msra.mxu0 0.0
      %1290 = vmatprep.subr.mxu0 0.0
      %1291 = vmatpush1.msra.mxu0 0.0
      %1292 = vmatprep.subr.mxu0 0.0
      %1293 = vmatpush1.msra.mxu0 0.0
      %1294 = vmatprep.subr.mxu0 0.0
      %1295 = vmatpush1.msra.mxu0 0.0
      %1296 = vmatprep.subr.mxu0 0.0
      %1297 = vmatpush1.msra.mxu0 %v1204
      %1298 = vmatprep.subr.mxu0 0.0
      %1299 = vmatpush1.msra.mxu0 %v1201
      %1300 = vmatprep.subr.mxu0 0.0
      %1301 = vmatpush1.msra.mxu0 %v1198
      %1302 = vmatprep.subr.mxu0 0.0
      %1303 = vmatpush1.msra.mxu0 %v1195
      %1304 = vmatprep.subr.mxu0 0.0
      %1305 = vmatpush1.msra.mxu0 %v1192
      %1306 = vmatprep.subr.mxu0 0.0
      %1307 = vmatpush1.msra.mxu0 %v1189
      %1308 = vmatprep.subr.mxu0 0.0
      %1309 = vmatpush1.msra.mxu0 %v1186
      %1310 = vmatprep.subr.mxu0 0.0
      %1311 = vmatpush1.msra.mxu0 %v1183
      %1312 = vmatprep.subr.mxu0 0.0
      %1313 = vmatpush1.msra.mxu0 %v1180
      %1314 = vmatprep.subr.mxu0 0.0
      %1315 = vmatpush1.msra.mxu0 %v1177
      %1316 = vmatprep.subr.mxu0 0.0
      %1317 = vmatpush1.msra.mxu0 %v1174
      %1318 = vmatprep.subr.mxu0 0.0
      %1319 = vmatpush1.msra.mxu0 %v1171
      %1320 = vmatprep.subr.mxu0 0.0
      %1321 = vmatpush2.msra.mxu0 0.0
      %1322 = vmatprep.subr.mxu0 0.0
      %1323 = vmatpush2.msra.mxu0 0.0
      %1324 = vmatprep.subr.mxu0 0.0
      %1325 = vmatpush2.msra.mxu0 0.0
      %1326 = vmatprep.subr.mxu0 0.0
      %1327 = vmatpush2.msra.mxu0 0.0
      %1328 = vmatprep.subr.mxu0 0.0
      %1329 = vmatpush2.msra.mxu0 0.0
      %1330 = vmatprep.subr.mxu0 0.0
      %1331 = vmatpush2.msra.mxu0 0.0
      %1332 = vmatprep.subr.mxu0 0.0
      %1333 = vmatpush2.msra.mxu0 0.0
      %1334 = vmatprep.subr.mxu0 0.0
      %1335 = vmatpush2.msra.mxu0 0.0
      %1336 = vmatprep.subr.mxu0 0.0
      %1337 = vmatpush2.msra.mxu0 0.0
      %1338 = vmatprep.subr.mxu0 0.0
      %1339 = vmatpush2.msra.mxu0 0.0
      %1340 = vmatprep.subr.mxu0 0.0
      %1341 = vmatpush2.msra.mxu0 0.0
      %1342 = vmatprep.subr.mxu0 0.0
      %1343 = vmatpush2.msra.mxu0 0.0
      %1344 = vmatprep.subr.mxu0 0.0
      %1345 = vmatpush2.msra.mxu0 0.0
      %1346 = vmatprep.subr.mxu0 0.0
      %1347 = vmatpush2.msra.mxu0 0.0
      %1348 = vmatprep.subr.mxu0 0.0
      %1349 = vmatpush2.msra.mxu0 0.0
      %1350 = vmatprep.subr.mxu0 0.0
      %1351 = vmatpush2.msra.mxu0 0.0
      %1352 = vmatprep.mubr.f32.mxu0 0.0
      %1353 = vmatmul.mubr.f32.gmra.mxu0 %v1206
      %v1354 = vpop.f32.mrf.mxu0
      %v1355 = vadd.f32 0.0, %v1354
      %v1356 = vpop.f32.mrf.mxu0
      %1357 = vmatprep.mubr.f32.mxu0 0.0
      %1358 = vmatmul.mubr.f32.gmra.mxu0 %v1209
      %v1359 = vpop.f32.mrf.mxu0
      %v1360 = vadd.f32 0.0, %v1359
      %v1361 = vpop.f32.mrf.mxu0
      %1362 = vdwg.mxu0
      %v1363 = vadd.f32 %v999, %v1278
      %v1364 = vadd.f32 %v1001, %v1280
      %v1365 = vadd.f32 %v1076, %v1355
      %v1366 = vadd.f32 %v1005, %v1284
      %v1367 = vadd.f32 %v1007, %v1286
      %v1368 = vadd.f32 %v1081, %v1360
      %v1369 = vld [vmem:[%s3] ss:$4 sm:$0x7]
      %v1371 = vlaneseq
      %v1372 = vshrl.u32 %v1371, 7
      %v1373 = vsub.s32 0, %v1372
      %v1374 = vrot.slane %v1369, %v1373
      %v1375 = vlaneseq
      %v1376 = vshrl.u32 %v1375, 7
      %v1377 = vsub.s32 1, %v1376
      %v1378 = vrot.slane %v1369, %v1377
      %v1379 = vlaneseq
      %v1380 = vshrl.u32 %v1379, 7
      %v1381 = vsub.s32 2, %v1380
      %v1382 = vrot.slane %v1369, %v1381
      %v1386 = vadd.f32 %v1363, %v1374
      %v1387 = vadd.f32 %v1364, %v1378
      %v1388 = vadd.f32 %v1365, %v1382
      %v1389 = vadd.f32 %v1366, %v1374
      %v1390 = vadd.f32 %v1367, %v1378
      %v1391 = vadd.f32 %v1368, %v1382
      %v1392 = vmax.f32 %v1386, 0.0
      %v1393 = vmax.f32 %v1387, 0.0
      %v1394 = vmax.f32 %v1388, 0.0
      %v1395 = vmax.f32 %v1389, 0.0
      %v1396 = vmax.f32 %v1390, 0.0
      %v1397 = vmax.f32 %v1391, 0.0
      %s1398 = scalar_lea.vmem %s3, 1
      %v1399 = vld [vmem:[%s1398] ss:$4 sm:$0x7]
      %v1401 = vlaneseq
      %v1402 = vshrl.u32 %v1401, 7
      %v1403 = vsub.s32 0, %v1402
      %v1404 = vrot.slane %v1399, %v1403
      %v1405 = vlaneseq
      %v1406 = vshrl.u32 %v1405, 7
      %v1407 = vsub.s32 1, %v1406
      %v1408 = vrot.slane %v1399, %v1407
      %v1409 = vlaneseq
      %v1410 = vshrl.u32 %v1409, 7
      %v1411 = vsub.s32 2, %v1410
      %v1412 = vrot.slane %v1399, %v1411
      %v1416 = vmul.f32 %v1392, %v1404
      %v1417 = vmul.f32 %v1393, %v1408
      %v1418 = vmul.f32 %v1394, %v1412
      %v1419 = vmul.f32 %v1395, %v1404
      %v1420 = vmul.f32 %v1396, %v1408
      %v1421 = vmul.f32 %v1397, %v1412
      %s1422 = scalar_lea.vmem %s3, 2
      %v1423 = vld [vmem:[%s1422] ss:$4 sm:$0x7]
      %v1425 = vlaneseq
      %v1426 = vshrl.u32 %v1425, 7
      %v1427 = vsub.s32 0, %v1426
      %v1428 = vrot.slane %v1423, %v1427
      %v1429 = vlaneseq
      %v1430 = vshrl.u32 %v1429, 7
      %v1431 = vsub.s32 1, %v1430
      %v1432 = vrot.slane %v1423, %v1431
      %v1433 = vlaneseq
      %v1434 = vshrl.u32 %v1433, 7
      %v1435 = vsub.s32 2, %v1434
      %v1436 = vrot.slane %v1423, %v1435
      %v1440 = vadd.f32 %v1416, %v1428
      %v1441 = vadd.f32 %v1417, %v1432
      %v1442 = vadd.f32 %v1418, %v1436
      %v1443 = vadd.f32 %v1419, %v1428
      %v1444 = vadd.f32 %v1420, %v1432
      %v1445 = vadd.f32 %v1421, %v1436
      %vm1452 = vcmask 1046528
      %v1453 = vrot.slane %v1440, 1
      %v1454 = vrot.slane %v1443, 1
      %v1455 = vsel %vm1452, %v1453, %v1454
      %v1456 = vrot.slane %v1441, 1
      %v1457 = vrot.slane %v1444, 1
      %v1458 = vsel %vm1452, %v1456, %v1457
      %v1459 = vrot.slane %v1442, 1
      %v1460 = vrot.slane %v1445, 1
      %v1461 = vsel %vm1452, %v1459, %v1460
      %v1468 = vmax.f32 %v1440, %v1455
      %v1469 = vmax.f32 %v1441, %v1458
      %v1470 = vmax.f32 %v1442, %v1461
      %v1471 = vmax.f32 %v1443, %v1454
      %v1472 = vmax.f32 %v1444, %v1457
      %v1473 = vmax.f32 %v1445, %v1460
      %1480 = vrot.lane.b32.xlu0 %v1468, 96
      %v1481 = vpop.permute.xlu0 %1480
      %1482 = vrot.lane.b32.xlu0 %v1469, 96
      %v1483 = vpop.permute.xlu0 %1482
      %1484 = vrot.lane.b32.xlu0 %v1470, 96
      %v1485 = vpop.permute.xlu0 %1484
      %1486 = vrot.lane.b32.xlu0 %v1471, 96
      %v1487 = vpop.permute.xlu0 %1486
      %1488 = vrot.lane.b32.xlu0 %v1472, 96
      %v1489 = vpop.permute.xlu0 %1488
      %1490 = vrot.lane.b32.xlu0 %v1473, 96
      %v1491 = vpop.permute.xlu0 %1490
      %v1492 = vsel %vm767, %v1481, %v1483
      %v1493 = vsel %vm767, %v1483, %v1485
      %v1494 = vsel %vm767, %v1487, %v1489
      %v1495 = vsel %vm767, %v1489, %v1491
      %v1502 = vmax.f32 %v1468, %v1492
      %v1503 = vmax.f32 %v1469, %v1493
      %v1504 = vmax.f32 %v1470, %v1485
      %v1505 = vmax.f32 %v1471, %v1494
      %v1506 = vmax.f32 %v1472, %v1495
      %v1507 = vmax.f32 %v1473, %v1491
      %v1508 = vld [vmem:[%s4] sm:$0x7]
      %vm1509 = vcmask 80896
      %v1511 = vsel %vm1509, %v1508, 0
      %vm1513 = vcmask 1041408
      %v1515 = vsel %vm1513, %v1505, 0
      %v1518 = vsel %vm1513, %v1506, 0
      %v1521 = vsel %vm1513, %v1507, 0
      %1523 = vmatprep.subr.mxu0 0.0
      %1524 = vmatpush1.msra.mxu0 0.0
      %1525 = vmatprep.subr.mxu0 0.0
      %1526 = vmatpush1.msra.mxu0 0.0
      %1527 = vmatprep.subr.mxu0 0.0
      %1528 = vmatpush1.msra.mxu0 0.0
      %1529 = vmatprep.subr.mxu0 0.0
      %1530 = vmatpush1.msra.mxu0 0.0
      %1531 = vmatprep.subr.mxu0 0.0
      %1532 = vmatpush1.msra.mxu0 0.0
      %1533 = vmatprep.subr.mxu0 0.0
      %1534 = vmatpush1.msra.mxu0 0.0
      %1535 = vmatprep.subr.mxu0 0.0
      %1536 = vmatpush1.msra.mxu0 0.0
      %1537 = vmatprep.subr.mxu0 0.0
      %1538 = vmatpush1.msra.mxu0 0.0
      %1539 = vmatprep.subr.mxu0 0.0
      %1540 = vmatpush1.msra.mxu0 0.0
      %1541 = vmatprep.subr.mxu0 0.0
      %1542 = vmatpush1.msra.mxu0 0.0
      %1543 = vmatprep.subr.mxu0 0.0
      %1544 = vmatpush1.msra.mxu0 0.0
      %1545 = vmatprep.subr.mxu0 0.0
      %1546 = vmatpush1.msra.mxu0 0.0
      %1547 = vmatprep.subr.mxu0 0.0
      %1548 = vmatpush1.msra.mxu0 0.0
      %1549 = vmatprep.subr.mxu0 0.0
      %1550 = vmatpush1.msra.mxu0 0.0
      %1551 = vmatprep.subr.mxu0 %v1518
      %1552 = vmatpush1.msra.mxu0 %v1515
      %1553 = vmatprep.subr.mxu0 %v1503
      %1554 = vmatpush1.msra.mxu0 %v1502
      %1555 = vmatprep.subr.mxu0 0.0
      %1556 = vmatpush2.msra.mxu0 0.0
      %1557 = vmatprep.subr.mxu0 0.0
      %1558 = vmatpush2.msra.mxu0 0.0
      %1559 = vmatprep.subr.mxu0 0.0
      %1560 = vmatpush2.msra.mxu0 0.0
      %1561 = vmatprep.subr.mxu0 0.0
      %1562 = vmatpush2.msra.mxu0 0.0
      %1563 = vmatprep.subr.mxu0 0.0
      %1564 = vmatpush2.msra.mxu0 0.0
      %1565 = vmatprep.subr.mxu0 0.0
      %1566 = vmatpush2.msra.mxu0 0.0
      %1567 = vmatprep.subr.mxu0 0.0
      %1568 = vmatpush2.msra.mxu0 0.0
      %1569 = vmatprep.subr.mxu0 0.0
      %1570 = vmatpush2.msra.mxu0 0.0
      %1571 = vmatprep.subr.mxu0 0.0
      %1572 = vmatpush2.msra.mxu0 0.0
      %1573 = vmatprep.subr.mxu0 0.0
      %1574 = vmatpush2.msra.mxu0 0.0
      %1575 = vmatprep.subr.mxu0 0.0
      %1576 = vmatpush2.msra.mxu0 0.0
      %1577 = vmatprep.subr.mxu0 0.0
      %1578 = vmatpush2.msra.mxu0 0.0
      %1579 = vmatprep.subr.mxu0 0.0
      %1580 = vmatpush2.msra.mxu0 0.0
      %1581 = vmatprep.subr.mxu0 0.0
      %1582 = vmatpush2.msra.mxu0 0.0
      %1583 = vmatprep.subr.mxu0 0.0
      %1584 = vmatpush2.msra.mxu0 0.0
      %1585 = vmatprep.subr.mxu0 0.0
      %1586 = vmatpush2.msra.mxu0 0.0
      %1587 = vmatprep.mubr.f32.mxu0 0.0
      %1588 = vmatmul.mubr.f32.gmra.mxu0 %v1511
      %v1589 = vpop.f32.mrf.mxu0
      %v1590 = vadd.f32 0.0, %v1589
      %v1591 = vpop.f32.mrf.mxu0
      %v1592 = vadd.f32 0.0, %v1591
      %1593 = vdwg.mxu0
      %1594 = vmatprep.subr.mxu0 0.0
      %1595 = vmatpush1.msra.mxu0 0.0
      %1596 = vmatprep.subr.mxu0 0.0
      %1597 = vmatpush1.msra.mxu0 0.0
      %1598 = vmatprep.subr.mxu0 0.0
      %1599 = vmatpush1.msra.mxu0 0.0
      %1600 = vmatprep.subr.mxu0 0.0
      %1601 = vmatpush1.msra.mxu0 0.0
      %1602 = vmatprep.subr.mxu0 0.0
      %1603 = vmatpush1.msra.mxu0 0.0
      %1604 = vmatprep.subr.mxu0 0.0
      %1605 = vmatpush1.msra.mxu0 0.0
      %1606 = vmatprep.subr.mxu0 0.0
      %1607 = vmatpush1.msra.mxu0 0.0
      %1608 = vmatprep.subr.mxu0 0.0
      %1609 = vmatpush1.msra.mxu0 0.0
      %1610 = vmatprep.subr.mxu0 0.0
      %1611 = vmatpush1.msra.mxu0 0.0
      %1612 = vmatprep.subr.mxu0 0.0
      %1613 = vmatpush1.msra.mxu0 0.0
      %1614 = vmatprep.subr.mxu0 0.0
      %1615 = vmatpush1.msra.mxu0 0.0
      %1616 = vmatprep.subr.mxu0 0.0
      %1617 = vmatpush1.msra.mxu0 0.0
      %1618 = vmatprep.subr.mxu0 0.0
      %1619 = vmatpush1.msra.mxu0 0.0
      %1620 = vmatprep.subr.mxu0 0.0
      %1621 = vmatpush1.msra.mxu0 0.0
      %1622 = vmatprep.subr.mxu0 0.0
      %1623 = vmatpush1.msra.mxu0 %v1521
      %1624 = vmatprep.subr.mxu0 0.0
      %1625 = vmatpush1.msra.mxu0 %v1504
      %1626 = vmatprep.subr.mxu0 0.0
      %1627 = vmatpush2.msra.mxu0 0.0
      %1628 = vmatprep.subr.mxu0 0.0
      %1629 = vmatpush2.msra.mxu0 0.0
      %1630 = vmatprep.subr.mxu0 0.0
      %1631 = vmatpush2.msra.mxu0 0.0
      %1632 = vmatprep.subr.mxu0 0.0
      %1633 = vmatpush2.msra.mxu0 0.0
      %1634 = vmatprep.subr.mxu0 0.0
      %1635 = vmatpush2.msra.mxu0 0.0
      %1636 = vmatprep.subr.mxu0 0.0
      %1637 = vmatpush2.msra.mxu0 0.0
      %1638 = vmatprep.subr.mxu0 0.0
      %1639 = vmatpush2.msra.mxu0 0.0
      %1640 = vmatprep.subr.mxu0 0.0
      %1641 = vmatpush2.msra.mxu0 0.0
      %1642 = vmatprep.subr.mxu0 0.0
      %1643 = vmatpush2.msra.mxu0 0.0
      %1644 = vmatprep.subr.mxu0 0.0
      %1645 = vmatpush2.msra.mxu0 0.0
      %1646 = vmatprep.subr.mxu0 0.0
      %1647 = vmatpush2.msra.mxu0 0.0
      %1648 = vmatprep.subr.mxu0 0.0
      %1649 = vmatpush2.msra.mxu0 0.0
      %1650 = vmatprep.subr.mxu0 0.0
      %1651 = vmatpush2.msra.mxu0 0.0
      %1652 = vmatprep.subr.mxu0 0.0
      %1653 = vmatpush2.msra.mxu0 0.0
      %1654 = vmatprep.subr.mxu0 0.0
      %1655 = vmatpush2.msra.mxu0 0.0
      %1656 = vmatprep.subr.mxu0 0.0
      %1657 = vmatpush2.msra.mxu0 0.0
      %1658 = vmatprep.mubr.f32.mxu0 0.0
      %1659 = vmatmul.mubr.f32.gmra.mxu0 %v1511
      %v1660 = vpop.f32.mrf.mxu0
      %v1661 = vadd.f32 0.0, %v1660
      %v1662 = vpop.f32.mrf.mxu0
      %1663 = vdwg.mxu0
      %v1664 = vld [vmem:[%s5] sm:$0xff]
      %v1665 = vld [vmem:[%s5 + $0x8] sm:$0xff]
      %v1666 = vld [vmem:[%s5 + $0x10] sm:$0xff]
      %v1667 = vld [vmem:[%s5 + $0x18] sm:$0xff]
      %v1668 = vld [vmem:[%s5 + $0x20] sm:$0xff]
      %v1669 = vld [vmem:[%s5 + $0x28] sm:$0xff]
      %v1670 = vld [vmem:[%s5 + $0x30] sm:$0xff]
      %v1671 = vld [vmem:[%s5 + $0x38] sm:$0xff]
      %v1672 = vld [vmem:[%s5 + $0x40] sm:$0xff]
      %v1673 = vld [vmem:[%s5 + $0x48] sm:$0xff]
      %v1674 = vld [vmem:[%s5 + $0x50] sm:$0xff]
      %v1675 = vld [vmem:[%s5 + $0x58] sm:$0xff]
      %v1676 = vld [vmem:[%s5 + $0x60] sm:$0xff]
      %v1677 = vld [vmem:[%s5 + $0x68] sm:$0xff]
      %v1678 = vld [vmem:[%s5 + $0x70] sm:$0xff]
      %v1679 = vld [vmem:[%s5 + $0x78] sm:$0xff]
      %v1680 = vld [vmem:[%s5 + $0x80] sm:$0xff]
      %v1681 = vld [vmem:[%s5 + $0x88] sm:$0xff]
      %v1682 = vld [vmem:[%s5 + $0x90] sm:$0xff]
      %v1683 = vld [vmem:[%s5 + $0x98] sm:$0xff]
      %v1684 = vld [vmem:[%s5 + $0xa0] sm:$0xff]
      %v1685 = vld [vmem:[%s5 + $0xa8] sm:$0xff]
      %v1686 = vld [vmem:[%s5 + $0xb0] sm:$0xff]
      %v1687 = vld [vmem:[%s5 + $0xb8] sm:$0xff]
      %v1688 = vld [vmem:[%s5 + $0xc0] sm:$0xff]
      %v1689 = vld [vmem:[%s5 + $0xc8] sm:$0xff]
      %v1690 = vld [vmem:[%s5 + $0xd0] sm:$0xff]
      %v1691 = vld [vmem:[%s5 + $0xd8] sm:$0xff]
      %v1692 = vld [vmem:[%s5 + $0xe0] sm:$0xff]
      %v1693 = vld [vmem:[%s5 + $0xe8] sm:$0xff]
      %v1694 = vld [vmem:[%s5 + $0xf0] sm:$0xff]
      %v1695 = vld [vmem:[%s5 + $0xf8] sm:$0xff]
      %v1696 = vld [vmem:[%s5 + $0x100] sm:$0xff]
      %v1697 = vld [vmem:[%s5 + $0x108] sm:$0xff]
      %v1698 = vld [vmem:[%s5 + $0x110] sm:$0xff]
      %v1699 = vld [vmem:[%s5 + $0x118] sm:$0xff]
      %v1700 = vld [vmem:[%s5 + $0x120] sm:$0xff]
      %v1701 = vld [vmem:[%s5 + $0x128] sm:$0xff]
      %v1702 = vld [vmem:[%s5 + $0x130] sm:$0xff]
      %v1703 = vld [vmem:[%s5 + $0x138] sm:$0xff]
      %v1704 = vld [vmem:[%s5 + $0x140] sm:$0xff]
      %v1705 = vld [vmem:[%s5 + $0x148] sm:$0xff]
      %v1706 = vld [vmem:[%s5 + $0x150] sm:$0xff]
      %v1707 = vld [vmem:[%s5 + $0x158] sm:$0xff]
      %v1708 = vld [vmem:[%s5 + $0x160] sm:$0xff]
      %v1709 = vld [vmem:[%s5 + $0x168] sm:$0xff]
      %v1710 = vld [vmem:[%s5 + $0x170] sm:$0xff]
      %v1711 = vld [vmem:[%s5 + $0x178] sm:$0xff]
      %v1712 = vld [vmem:[%s5 + $0x180] sm:$0xff]
      %v1713 = vld [vmem:[%s5 + $0x188] sm:$0xff]
      %v1714 = vld [vmem:[%s5 + $0x190] sm:$0xff]
      %v1715 = vld [vmem:[%s5 + $0x198] sm:$0xff]
      %v1716 = vld [vmem:[%s5 + $0x1a0] sm:$0xff]
      %v1717 = vld [vmem:[%s5 + $0x1a8] sm:$0xff]
      %v1718 = vld [vmem:[%s5 + $0x1b0] sm:$0xff]
      %v1719 = vld [vmem:[%s5 + $0x1b8] sm:$0xff]
      %v1720 = vld [vmem:[%s5 + $0x1c0] sm:$0xff]
      %v1721 = vld [vmem:[%s5 + $0x1c8] sm:$0xff]
      %v1722 = vld [vmem:[%s5 + $0x1d0] sm:$0xff]
      %v1723 = vld [vmem:[%s5 + $0x1d8] sm:$0xff]
      %v1724 = vld [vmem:[%s5 + $0x1e0] sm:$0xff]
      %v1725 = vld [vmem:[%s5 + $0x1e8] sm:$0xff]
      %v1726 = vld [vmem:[%s5 + $0x1f0] sm:$0xff]
      %v1727 = vld [vmem:[%s5 + $0x1f8] sm:$0xff]
      %v1728 = vld [vmem:[%s5 + $0x200] sm:$0xff]
      %v1729 = vld [vmem:[%s5 + $0x208] sm:$0xff]
      %v1730 = vld [vmem:[%s5 + $0x210] sm:$0xff]
      %v1731 = vld [vmem:[%s5 + $0x218] sm:$0xff]
      %v1732 = vld [vmem:[%s5 + $0x220] sm:$0xff]
      %v1733 = vld [vmem:[%s5 + $0x228] sm:$0xff]
      %v1734 = vld [vmem:[%s5 + $0x230] sm:$0xff]
      %v1735 = vld [vmem:[%s5 + $0x238] sm:$0xff]
      %v1736 = vld [vmem:[%s5 + $0x240] sm:$0xff]
      %v1737 = vld [vmem:[%s5 + $0x248] sm:$0xff]
      %v1738 = vld [vmem:[%s5 + $0x250] sm:$0xff]
      %v1739 = vld [vmem:[%s5 + $0x258] sm:$0xff]
      %v1740 = vld [vmem:[%s5 + $0x260] sm:$0xff]
      %v1741 = vld [vmem:[%s5 + $0x268] sm:$0xff]
      %v1742 = vld [vmem:[%s5 + $0x270] sm:$0xff]
      %v1743 = vld [vmem:[%s5 + $0x278] sm:$0xff]
      %s1744 = scalar_lea.vmem %s4, 4
      %v1745 = vld [vmem:[%s1744] sm:$0x7]
      %v1747 = vsel %vm1509, %v1745, 0
      %1749 = vmatprep.subr.mxu0 0.0
      %1750 = vmatpush1.msra.mxu0 0.0
      %1751 = vmatprep.subr.mxu0 0.0
      %1752 = vmatpush1.msra.mxu0 0.0
      %1753 = vmatprep.subr.mxu0 0.0
      %1754 = vmatpush1.msra.mxu0 0.0
      %1755 = vmatprep.subr.mxu0 0.0
      %1756 = vmatpush1.msra.mxu0 0.0
      %1757 = vmatprep.subr.mxu0 0.0
      %1758 = vmatpush1.msra.mxu0 0.0
      %1759 = vmatprep.subr.mxu0 0.0
      %1760 = vmatpush1.msra.mxu0 0.0
      %1761 = vmatprep.subr.mxu0 0.0
      %1762 = vmatpush1.msra.mxu0 0.0
      %1763 = vmatprep.subr.mxu0 0.0
      %1764 = vmatpush1.msra.mxu0 0.0
      %1765 = vmatprep.subr.mxu0 0.0
      %1766 = vmatpush1.msra.mxu0 0.0
      %1767 = vmatprep.subr.mxu0 0.0
      %1768 = vmatpush1.msra.mxu0 0.0
      %1769 = vmatprep.subr.mxu0 0.0
      %1770 = vmatpush1.msra.mxu0 0.0
      %1771 = vmatprep.subr.mxu0 0.0
      %1772 = vmatpush1.msra.mxu0 0.0
      %1773 = vmatprep.subr.mxu0 0.0
      %1774 = vmatpush1.msra.mxu0 0.0
      %1775 = vmatprep.subr.mxu0 0.0
      %1776 = vmatpush1.msra.mxu0 0.0
      %1777 = vmatprep.subr.mxu0 %v1518
      %1778 = vmatpush1.msra.mxu0 %v1515
      %1779 = vmatprep.subr.mxu0 %v1503
      %1780 = vmatpush1.msra.mxu0 %v1502
      %1781 = vmatprep.subr.mxu0 0.0
      %1782 = vmatpush2.msra.mxu0 0.0
      %1783 = vmatprep.subr.mxu0 0.0
      %1784 = vmatpush2.msra.mxu0 0.0
      %1785 = vmatprep.subr.mxu0 0.0
      %1786 = vmatpush2.msra.mxu0 0.0
      %1787 = vmatprep.subr.mxu0 0.0
      %1788 = vmatpush2.msra.mxu0 0.0
      %1789 = vmatprep.subr.mxu0 0.0
      %1790 = vmatpush2.msra.mxu0 0.0
      %1791 = vmatprep.subr.mxu0 0.0
      %1792 = vmatpush2.msra.mxu0 0.0
      %1793 = vmatprep.subr.mxu0 0.0
      %1794 = vmatpush2.msra.mxu0 0.0
      %1795 = vmatprep.subr.mxu0 0.0
      %1796 = vmatpush2.msra.mxu0 0.0
      %1797 = vmatprep.subr.mxu0 0.0
      %1798 = vmatpush2.msra.mxu0 0.0
      %1799 = vmatprep.subr.mxu0 0.0
      %1800 = vmatpush2.msra.mxu0 0.0
      %1801 = vmatprep.subr.mxu0 0.0
      %1802 = vmatpush2.msra.mxu0 0.0
      %1803 = vmatprep.subr.mxu0 0.0
      %1804 = vmatpush2.msra.mxu0 0.0
      %1805 = vmatprep.subr.mxu0 0.0
      %1806 = vmatpush2.msra.mxu0 0.0
      %1807 = vmatprep.subr.mxu0 0.0
      %1808 = vmatpush2.msra.mxu0 0.0
      %1809 = vmatprep.subr.mxu0 0.0
      %1810 = vmatpush2.msra.mxu0 0.0
      %1811 = vmatprep.subr.mxu0 0.0
      %1812 = vmatpush2.msra.mxu0 0.0
      %1813 = vmatprep.mubr.f32.mxu0 0.0
      %1814 = vmatmul.mubr.f32.gmra.mxu0 %v1747
      %v1815 = vpop.f32.mrf.mxu0
      %v1816 = vadd.f32 0.0, %v1815
      %v1817 = vpop.f32.mrf.mxu0
      %v1818 = vadd.f32 0.0, %v1817
      %1819 = vdwg.mxu0
      %1820 = vmatprep.subr.mxu0 0.0
      %1821 = vmatpush1.msra.mxu0 0.0
      %1822 = vmatprep.subr.mxu0 0.0
      %1823 = vmatpush1.msra.mxu0 0.0
      %1824 = vmatprep.subr.mxu0 0.0
      %1825 = vmatpush1.msra.mxu0 0.0
      %1826 = vmatprep.subr.mxu0 0.0
      %1827 = vmatpush1.msra.mxu0 0.0
      %1828 = vmatprep.subr.mxu0 0.0
      %1829 = vmatpush1.msra.mxu0 0.0
      %1830 = vmatprep.subr.mxu0 0.0
      %1831 = vmatpush1.msra.mxu0 0.0
      %1832 = vmatprep.subr.mxu0 0.0
      %1833 = vmatpush1.msra.mxu0 0.0
      %1834 = vmatprep.subr.mxu0 0.0
      %1835 = vmatpush1.msra.mxu0 0.0
      %1836 = vmatprep.subr.mxu0 0.0
      %1837 = vmatpush1.msra.mxu0 0.0
      %1838 = vmatprep.subr.mxu0 0.0
      %1839 = vmatpush1.msra.mxu0 0.0
      %1840 = vmatprep.subr.mxu0 0.0
      %1841 = vmatpush1.msra.mxu0 0.0
      %1842 = vmatprep.subr.mxu0 0.0
      %1843 = vmatpush1.msra.mxu0 0.0
      %1844 = vmatprep.subr.mxu0 0.0
      %1845 = vmatpush1.msra.mxu0 0.0
      %1846 = vmatprep.subr.mxu0 0.0
      %1847 = vmatpush1.msra.mxu0 0.0
      %1848 = vmatprep.subr.mxu0 0.0
      %1849 = vmatpush1.msra.mxu0 %v1521
      %1850 = vmatprep.subr.mxu0 0.0
      %1851 = vmatpush1.msra.mxu0 %v1504
      %1852 = vmatprep.subr.mxu0 0.0
      %1853 = vmatpush2.msra.mxu0 0.0
      %1854 = vmatprep.subr.mxu0 0.0
      %1855 = vmatpush2.msra.mxu0 0.0
      %1856 = vmatprep.subr.mxu0 0.0
      %1857 = vmatpush2.msra.mxu0 0.0
      %1858 = vmatprep.subr.mxu0 0.0
      %1859 = vmatpush2.msra.mxu0 0.0
      %1860 = vmatprep.subr.mxu0 0.0
      %1861 = vmatpush2.msra.mxu0 0.0
      %1862 = vmatprep.subr.mxu0 0.0
      %1863 = vmatpush2.msra.mxu0 0.0
      %1864 = vmatprep.subr.mxu0 0.0
      %1865 = vmatpush2.msra.mxu0 0.0
      %1866 = vmatprep.subr.mxu0 0.0
      %1867 = vmatpush2.msra.mxu0 0.0
      %1868 = vmatprep.subr.mxu0 0.0
      %1869 = vmatpush2.msra.mxu0 0.0
      %1870 = vmatprep.subr.mxu0 0.0
      %1871 = vmatpush2.msra.mxu0 0.0
      %1872 = vmatprep.subr.mxu0 0.0
      %1873 = vmatpush2.msra.mxu0 0.0
      %1874 = vmatprep.subr.mxu0 0.0
      %1875 = vmatpush2.msra.mxu0 0.0
      %1876 = vmatprep.subr.mxu0 0.0
      %1877 = vmatpush2.msra.mxu0 0.0
      %1878 = vmatprep.subr.mxu0 0.0
      %1879 = vmatpush2.msra.mxu0 0.0
      %1880 = vmatprep.subr.mxu0 0.0
      %1881 = vmatpush2.msra.mxu0 0.0
      %1882 = vmatprep.subr.mxu0 0.0
      %1883 = vmatpush2.msra.mxu0 0.0
      %1884 = vmatprep.mubr.f32.mxu0 0.0
      %1885 = vmatmul.mubr.f32.gmra.mxu0 %v1747
      %v1886 = vpop.f32.mrf.mxu0
      %v1887 = vadd.f32 0.0, %v1886
      %v1888 = vpop.f32.mrf.mxu0
      %1889 = vdwg.mxu0
      %s1890 = scalar_lea.vmem %s5, 640
      %v1891 = vld [vmem:[%s1890] sm:$0xff]
      %v1892 = vld [vmem:[%s1890 + $0x8] sm:$0xff]
      %v1893 = vld [vmem:[%s1890 + $0x10] sm:$0xff]
      %v1894 = vld [vmem:[%s1890 + $0x18] sm:$0xff]
      %v1895 = vld [vmem:[%s1890 + $0x20] sm:$0xff]
      %v1896 = vld [vmem:[%s1890 + $0x28] sm:$0xff]
      %v1897 = vld [vmem:[%s1890 + $0x30] sm:$0xff]
      %v1898 = vld [vmem:[%s1890 + $0x38] sm:$0xff]
      %v1899 = vld [vmem:[%s1890 + $0x40] sm:$0xff]
      %v1900 = vld [vmem:[%s1890 + $0x48] sm:$0xff]
      %v1901 = vld [vmem:[%s1890 + $0x50] sm:$0xff]
      %v1902 = vld [vmem:[%s1890 + $0x58] sm:$0xff]
      %v1903 = vld [vmem:[%s1890 + $0x60] sm:$0xff]
      %v1904 = vld [vmem:[%s1890 + $0x68] sm:$0xff]
      %v1905 = vld [vmem:[%s1890 + $0x70] sm:$0xff]
      %v1906 = vld [vmem:[%s1890 + $0x78] sm:$0xff]
      %v1907 = vld [vmem:[%s1890 + $0x80] sm:$0xff]
      %v1908 = vld [vmem:[%s1890 + $0x88] sm:$0xff]
      %v1909 = vld [vmem:[%s1890 + $0x90] sm:$0xff]
      %v1910 = vld [vmem:[%s1890 + $0x98] sm:$0xff]
      %v1911 = vld [vmem:[%s1890 + $0xa0] sm:$0xff]
      %v1912 = vld [vmem:[%s1890 + $0xa8] sm:$0xff]
      %v1913 = vld [vmem:[%s1890 + $0xb0] sm:$0xff]
      %v1914 = vld [vmem:[%s1890 + $0xb8] sm:$0xff]
      %v1915 = vld [vmem:[%s1890 + $0xc0] sm:$0xff]
      %v1916 = vld [vmem:[%s1890 + $0xc8] sm:$0xff]
      %v1917 = vld [vmem:[%s1890 + $0xd0] sm:$0xff]
      %v1918 = vld [vmem:[%s1890 + $0xd8] sm:$0xff]
      %v1919 = vld [vmem:[%s1890 + $0xe0] sm:$0xff]
      %v1920 = vld [vmem:[%s1890 + $0xe8] sm:$0xff]
      %v1921 = vld [vmem:[%s1890 + $0xf0] sm:$0xff]
      %v1922 = vld [vmem:[%s1890 + $0xf8] sm:$0xff]
      %v1923 = vld [vmem:[%s1890 + $0x100] sm:$0xff]
      %v1924 = vld [vmem:[%s1890 + $0x108] sm:$0xff]
      %v1925 = vld [vmem:[%s1890 + $0x110] sm:$0xff]
      %v1926 = vld [vmem:[%s1890 + $0x118] sm:$0xff]
      %v1927 = vld [vmem:[%s1890 + $0x120] sm:$0xff]
      %v1928 = vld [vmem:[%s1890 + $0x128] sm:$0xff]
      %v1929 = vld [vmem:[%s1890 + $0x130] sm:$0xff]
      %v1930 = vld [vmem:[%s1890 + $0x138] sm:$0xff]
      %v1931 = vld [vmem:[%s1890 + $0x140] sm:$0xff]
      %v1932 = vld [vmem:[%s1890 + $0x148] sm:$0xff]
      %v1933 = vld [vmem:[%s1890 + $0x150] sm:$0xff]
      %v1934 = vld [vmem:[%s1890 + $0x158] sm:$0xff]
      %v1935 = vld [vmem:[%s1890 + $0x160] sm:$0xff]
      %v1936 = vld [vmem:[%s1890 + $0x168] sm:$0xff]
      %v1937 = vld [vmem:[%s1890 + $0x170] sm:$0xff]
      %v1938 = vld [vmem:[%s1890 + $0x178] sm:$0xff]
      %v1939 = vld [vmem:[%s1890 + $0x180] sm:$0xff]
      %v1940 = vld [vmem:[%s1890 + $0x188] sm:$0xff]
      %v1941 = vld [vmem:[%s1890 + $0x190] sm:$0xff]
      %v1942 = vld [vmem:[%s1890 + $0x198] sm:$0xff]
      %v1943 = vld [vmem:[%s1890 + $0x1a0] sm:$0xff]
      %v1944 = vld [vmem:[%s1890 + $0x1a8] sm:$0xff]
      %v1945 = vld [vmem:[%s1890 + $0x1b0] sm:$0xff]
      %v1946 = vld [vmem:[%s1890 + $0x1b8] sm:$0xff]
      %v1947 = vld [vmem:[%s1890 + $0x1c0] sm:$0xff]
      %v1948 = vld [vmem:[%s1890 + $0x1c8] sm:$0xff]
      %v1949 = vld [vmem:[%s1890 + $0x1d0] sm:$0xff]
      %v1950 = vld [vmem:[%s1890 + $0x1d8] sm:$0xff]
      %v1951 = vld [vmem:[%s1890 + $0x1e0] sm:$0xff]
      %v1952 = vld [vmem:[%s1890 + $0x1e8] sm:$0xff]
      %v1953 = vld [vmem:[%s1890 + $0x1f0] sm:$0xff]
      %v1954 = vld [vmem:[%s1890 + $0x1f8] sm:$0xff]
      %v1955 = vld [vmem:[%s1890 + $0x200] sm:$0xff]
      %v1956 = vld [vmem:[%s1890 + $0x208] sm:$0xff]
      %v1957 = vld [vmem:[%s1890 + $0x210] sm:$0xff]
      %v1958 = vld [vmem:[%s1890 + $0x218] sm:$0xff]
      %v1959 = vld [vmem:[%s1890 + $0x220] sm:$0xff]
      %v1960 = vld [vmem:[%s1890 + $0x228] sm:$0xff]
      %v1961 = vld [vmem:[%s1890 + $0x230] sm:$0xff]
      %v1962 = vld [vmem:[%s1890 + $0x238] sm:$0xff]
      %v1963 = vld [vmem:[%s1890 + $0x240] sm:$0xff]
      %v1964 = vld [vmem:[%s1890 + $0x248] sm:$0xff]
      %v1965 = vld [vmem:[%s1890 + $0x250] sm:$0xff]
      %v1966 = vld [vmem:[%s1890 + $0x258] sm:$0xff]
      %v1967 = vld [vmem:[%s1890 + $0x260] sm:$0xff]
      %v1968 = vld [vmem:[%s1890 + $0x268] sm:$0xff]
      %v1969 = vld [vmem:[%s1890 + $0x270] sm:$0xff]
      %v1970 = vld [vmem:[%s1890 + $0x278] sm:$0xff]
      %vm1971 = vcmask 523264
      %v1973 = vsel %vm1971, %v1887, 0
      %1975 = vmatprep.subr.mxu0 %v1922
      %1976 = vmatpush1.msra.mxu0 %v1921
      %1977 = vmatprep.subr.mxu0 %v1920
      %1978 = vmatpush1.msra.mxu0 %v1919
      %1979 = vmatprep.subr.mxu0 %v1918
      %1980 = vmatpush1.msra.mxu0 %v1917
      %1981 = vmatprep.subr.mxu0 %v1916
      %1982 = vmatpush1.msra.mxu0 %v1915
      %1983 = vmatprep.subr.mxu0 %v1914
      %1984 = vmatpush1.msra.mxu0 %v1913
      %1985 = vmatprep.subr.mxu0 %v1912
      %1986 = vmatpush1.msra.mxu0 %v1911
      %1987 = vmatprep.subr.mxu0 %v1910
      %1988 = vmatpush1.msra.mxu0 %v1909
      %1989 = vmatprep.subr.mxu0 %v1908
      %1990 = vmatpush1.msra.mxu0 %v1907
      %1991 = vmatprep.subr.mxu0 %v1906
      %1992 = vmatpush1.msra.mxu0 %v1905
      %1993 = vmatprep.subr.mxu0 %v1904
      %1994 = vmatpush1.msra.mxu0 %v1903
      %1995 = vmatprep.subr.mxu0 %v1902
      %1996 = vmatpush1.msra.mxu0 %v1901
      %1997 = vmatprep.subr.mxu0 %v1900
      %1998 = vmatpush1.msra.mxu0 %v1899
      %1999 = vmatprep.subr.mxu0 %v1898
      %2000 = vmatpush1.msra.mxu0 %v1897
      %2001 = vmatprep.subr.mxu0 %v1896
      %2002 = vmatpush1.msra.mxu0 %v1895
      %2003 = vmatprep.subr.mxu0 %v1894
      %2004 = vmatpush1.msra.mxu0 %v1893
      %2005 = vmatprep.subr.mxu0 %v1892
      %2006 = vmatpush1.msra.mxu0 %v1891
      %2007 = vmatprep.subr.mxu0 %v1954
      %2008 = vmatpush2.msra.mxu0 %v1953
      %2009 = vmatprep.subr.mxu0 %v1952
      %2010 = vmatpush2.msra.mxu0 %v1951
      %2011 = vmatprep.subr.mxu0 %v1950
      %2012 = vmatpush2.msra.mxu0 %v1949
      %2013 = vmatprep.subr.mxu0 %v1948
      %2014 = vmatpush2.msra.mxu0 %v1947
      %2015 = vmatprep.subr.mxu0 %v1946
      %2016 = vmatpush2.msra.mxu0 %v1945
      %2017 = vmatprep.subr.mxu0 %v1944
      %2018 = vmatpush2.msra.mxu0 %v1943
      %2019 = vmatprep.subr.mxu0 %v1942
      %2020 = vmatpush2.msra.mxu0 %v1941
      %2021 = vmatprep.subr.mxu0 %v1940
      %2022 = vmatpush2.msra.mxu0 %v1939
      %2023 = vmatprep.subr.mxu0 %v1938
      %2024 = vmatpush2.msra.mxu0 %v1937
      %2025 = vmatprep.subr.mxu0 %v1936
      %2026 = vmatpush2.msra.mxu0 %v1935
      %2027 = vmatprep.subr.mxu0 %v1934
      %2028 = vmatpush2.msra.mxu0 %v1933
      %2029 = vmatprep.subr.mxu0 %v1932
      %2030 = vmatpush2.msra.mxu0 %v1931
      %2031 = vmatprep.subr.mxu0 %v1930
      %2032 = vmatpush2.msra.mxu0 %v1929
      %2033 = vmatprep.subr.mxu0 %v1928
      %2034 = vmatpush2.msra.mxu0 %v1927
      %2035 = vmatprep.subr.mxu0 %v1926
      %2036 = vmatpush2.msra.mxu0 %v1925
      %2037 = vmatprep.subr.mxu0 %v1924
      %2038 = vmatpush2.msra.mxu0 %v1923
      %2039 = vmatprep.mubr.f32.mxu0 %v1818
      %2040 = vmatmul.mubr.f32.gmra.mxu0 %v1816
      %v2041 = vpop.f32.mrf.mxu0
      %v2042 = vadd.f32 0.0, %v2041
      %v2043 = vpop.f32.mrf.mxu0
      %v2044 = vadd.f32 0.0, %v2043
      %2045 = vdwg.mxu0
      %2046 = vmatprep.subr.mxu0 0.0
      %2047 = vmatpush1.msra.mxu0 0.0
      %2048 = vmatprep.subr.mxu0 0.0
      %2049 = vmatpush1.msra.mxu0 0.0
      %2050 = vmatprep.subr.mxu0 0.0
      %2051 = vmatpush1.msra.mxu0 0.0
      %2052 = vmatprep.subr.mxu0 0.0
      %2053 = vmatpush1.msra.mxu0 0.0
      %2054 = vmatprep.subr.mxu0 0.0
      %2055 = vmatpush1.msra.mxu0 0.0
      %2056 = vmatprep.subr.mxu0 0.0
      %2057 = vmatpush1.msra.mxu0 0.0
      %2058 = vmatprep.subr.mxu0 0.0
      %2059 = vmatpush1.msra.mxu0 0.0
      %2060 = vmatprep.subr.mxu0 0.0
      %2061 = vmatpush1.msra.mxu0 0.0
      %2062 = vmatprep.subr.mxu0 %v1970
      %2063 = vmatpush1.msra.mxu0 %v1969
      %2064 = vmatprep.subr.mxu0 %v1968
      %2065 = vmatpush1.msra.mxu0 %v1967
      %2066 = vmatprep.subr.mxu0 %v1966
      %2067 = vmatpush1.msra.mxu0 %v1965
      %2068 = vmatprep.subr.mxu0 %v1964
      %2069 = vmatpush1.msra.mxu0 %v1963
      %2070 = vmatprep.subr.mxu0 %v1962
      %2071 = vmatpush1.msra.mxu0 %v1961
      %2072 = vmatprep.subr.mxu0 %v1960
      %2073 = vmatpush1.msra.mxu0 %v1959
      %2074 = vmatprep.subr.mxu0 %v1958
      %2075 = vmatpush1.msra.mxu0 %v1957
      %2076 = vmatprep.subr.mxu0 %v1956
      %2077 = vmatpush1.msra.mxu0 %v1955
      %2078 = vmatprep.subr.mxu0 0.0
      %2079 = vmatpush2.msra.mxu0 0.0
      %2080 = vmatprep.subr.mxu0 0.0
      %2081 = vmatpush2.msra.mxu0 0.0
      %2082 = vmatprep.subr.mxu0 0.0
      %2083 = vmatpush2.msra.mxu0 0.0
      %2084 = vmatprep.subr.mxu0 0.0
      %2085 = vmatpush2.msra.mxu0 0.0
      %2086 = vmatprep.subr.mxu0 0.0
      %2087 = vmatpush2.msra.mxu0 0.0
      %2088 = vmatprep.subr.mxu0 0.0
      %2089 = vmatpush2.msra.mxu0 0.0
      %2090 = vmatprep.subr.mxu0 0.0
      %2091 = vmatpush2.msra.mxu0 0.0
      %2092 = vmatprep.subr.mxu0 0.0
      %2093 = vmatpush2.msra.mxu0 0.0
      %2094 = vmatprep.subr.mxu0 0.0
      %2095 = vmatpush2.msra.mxu0 0.0
      %2096 = vmatprep.subr.mxu0 0.0
      %2097 = vmatpush2.msra.mxu0 0.0
      %2098 = vmatprep.subr.mxu0 0.0
      %2099 = vmatpush2.msra.mxu0 0.0
      %2100 = vmatprep.subr.mxu0 0.0
      %2101 = vmatpush2.msra.mxu0 0.0
      %2102 = vmatprep.subr.mxu0 0.0
      %2103 = vmatpush2.msra.mxu0 0.0
      %2104 = vmatprep.subr.mxu0 0.0
      %2105 = vmatpush2.msra.mxu0 0.0
      %2106 = vmatprep.subr.mxu0 0.0
      %2107 = vmatpush2.msra.mxu0 0.0
      %2108 = vmatprep.subr.mxu0 0.0
      %2109 = vmatpush2.msra.mxu0 0.0
      %2110 = vmatprep.mubr.f32.mxu0 0.0
      %2111 = vmatmul.mubr.f32.gmra.mxu0 %v1973
      %v2112 = vpop.f32.mrf.mxu0
      %v2113 = vadd.f32 %v2042, %v2112
      %v2114 = vpop.f32.mrf.mxu0
      %v2115 = vadd.f32 %v2044, %v2114
      %2116 = vdwg.mxu0
      %v2118 = vsel %vm1971, %v1661, 0
      %2120 = vmatprep.subr.mxu0 %v1695
      %2121 = vmatpush1.msra.mxu0 %v1694
      %2122 = vmatprep.subr.mxu0 %v1693
      %2123 = vmatpush1.msra.mxu0 %v1692
      %2124 = vmatprep.subr.mxu0 %v1691
      %2125 = vmatpush1.msra.mxu0 %v1690
      %2126 = vmatprep.subr.mxu0 %v1689
      %2127 = vmatpush1.msra.mxu0 %v1688
      %2128 = vmatprep.subr.mxu0 %v1687
      %2129 = vmatpush1.msra.mxu0 %v1686
      %2130 = vmatprep.subr.mxu0 %v1685
      %2131 = vmatpush1.msra.mxu0 %v1684
      %2132 = vmatprep.subr.mxu0 %v1683
      %2133 = vmatpush1.msra.mxu0 %v1682
      %2134 = vmatprep.subr.mxu0 %v1681
      %2135 = vmatpush1.msra.mxu0 %v1680
      %2136 = vmatprep.subr.mxu0 %v1679
      %2137 = vmatpush1.msra.mxu0 %v1678
      %2138 = vmatprep.subr.mxu0 %v1677
      %2139 = vmatpush1.msra.mxu0 %v1676
      %2140 = vmatprep.subr.mxu0 %v1675
      %2141 = vmatpush1.msra.mxu0 %v1674
      %2142 = vmatprep.subr.mxu0 %v1673
      %2143 = vmatpush1.msra.mxu0 %v1672
      %2144 = vmatprep.subr.mxu0 %v1671
      %2145 = vmatpush1.msra.mxu0 %v1670
      %2146 = vmatprep.subr.mxu0 %v1669
      %2147 = vmatpush1.msra.mxu0 %v1668
      %2148 = vmatprep.subr.mxu0 %v1667
      %2149 = vmatpush1.msra.mxu0 %v1666
      %2150 = vmatprep.subr.mxu0 %v1665
      %2151 = vmatpush1.msra.mxu0 %v1664
      %2152 = vmatprep.subr.mxu0 %v1727
      %2153 = vmatpush2.msra.mxu0 %v1726
      %2154 = vmatprep.subr.mxu0 %v1725
      %2155 = vmatpush2.msra.mxu0 %v1724
      %2156 = vmatprep.subr.mxu0 %v1723
      %2157 = vmatpush2.msra.mxu0 %v1722
      %2158 = vmatprep.subr.mxu0 %v1721
      %2159 = vmatpush2.msra.mxu0 %v1720
      %2160 = vmatprep.subr.mxu0 %v1719
      %2161 = vmatpush2.msra.mxu0 %v1718
      %2162 = vmatprep.subr.mxu0 %v1717
      %2163 = vmatpush2.msra.mxu0 %v1716
      %2164 = vmatprep.subr.mxu0 %v1715
      %2165 = vmatpush2.msra.mxu0 %v1714
      %2166 = vmatprep.subr.mxu0 %v1713
      %2167 = vmatpush2.msra.mxu0 %v1712
      %2168 = vmatprep.subr.mxu0 %v1711
      %2169 = vmatpush2.msra.mxu0 %v1710
      %2170 = vmatprep.subr.mxu0 %v1709
      %2171 = vmatpush2.msra.mxu0 %v1708
      %2172 = vmatprep.subr.mxu0 %v1707
      %2173 = vmatpush2.msra.mxu0 %v1706
      %2174 = vmatprep.subr.mxu0 %v1705
      %2175 = vmatpush2.msra.mxu0 %v1704
      %2176 = vmatprep.subr.mxu0 %v1703
      %2177 = vmatpush2.msra.mxu0 %v1702
      %2178 = vmatprep.subr.mxu0 %v1701
      %2179 = vmatpush2.msra.mxu0 %v1700
      %2180 = vmatprep.subr.mxu0 %v1699
      %2181 = vmatpush2.msra.mxu0 %v1698
      %2182 = vmatprep.subr.mxu0 %v1697
      %2183 = vmatpush2.msra.mxu0 %v1696
      %2184 = vmatprep.mubr.f32.mxu0 %v1592
      %2185 = vmatmul.mubr.f32.gmra.mxu0 %v1590
      %v2186 = vpop.f32.mrf.mxu0
      %v2187 = vadd.f32 %v2113, %v2186
      %v2188 = vpop.f32.mrf.mxu0
      %v2189 = vadd.f32 %v2115, %v2188
      %2190 = vdwg.mxu0
      %2191 = vmatprep.subr.mxu0 0.0
      %2192 = vmatpush1.msra.mxu0 0.0
      %2193 = vmatprep.subr.mxu0 0.0
      %2194 = vmatpush1.msra.mxu0 0.0
      %2195 = vmatprep.subr.mxu0 0.0
      %2196 = vmatpush1.msra.mxu0 0.0
      %2197 = vmatprep.subr.mxu0 0.0
      %2198 = vmatpush1.msra.mxu0 0.0
      %2199 = vmatprep.subr.mxu0 0.0
      %2200 = vmatpush1.msra.mxu0 0.0
      %2201 = vmatprep.subr.mxu0 0.0
      %2202 = vmatpush1.msra.mxu0 0.0
      %2203 = vmatprep.subr.mxu0 0.0
      %2204 = vmatpush1.msra.mxu0 0.0
      %2205 = vmatprep.subr.mxu0 0.0
      %2206 = vmatpush1.msra.mxu0 0.0
      %2207 = vmatprep.subr.mxu0 %v1743
      %2208 = vmatpush1.msra.mxu0 %v1742
      %2209 = vmatprep.subr.mxu0 %v1741
      %2210 = vmatpush1.msra.mxu0 %v1740
      %2211 = vmatprep.subr.mxu0 %v1739
      %2212 = vmatpush1.msra.mxu0 %v1738
      %2213 = vmatprep.subr.mxu0 %v1737
      %2214 = vmatpush1.msra.mxu0 %v1736
      %2215 = vmatprep.subr.mxu0 %v1735
      %2216 = vmatpush1.msra.mxu0 %v1734
      %2217 = vmatprep.subr.mxu0 %v1733
      %2218 = vmatpush1.msra.mxu0 %v1732
      %2219 = vmatprep.subr.mxu0 %v1731
      %2220 = vmatpush1.msra.mxu0 %v1730
      %2221 = vmatprep.subr.mxu0 %v1729
      %2222 = vmatpush1.msra.mxu0 %v1728
      %2223 = vmatprep.subr.mxu0 0.0
      %2224 = vmatpush2.msra.mxu0 0.0
      %2225 = vmatprep.subr.mxu0 0.0
      %2226 = vmatpush2.msra.mxu0 0.0
      %2227 = vmatprep.subr.mxu0 0.0
      %2228 = vmatpush2.msra.mxu0 0.0
      %2229 = vmatprep.subr.mxu0 0.0
      %2230 = vmatpush2.msra.mxu0 0.0
      %2231 = vmatprep.subr.mxu0 0.0
      %2232 = vmatpush2.msra.mxu0 0.0
      %2233 = vmatprep.subr.mxu0 0.0
      %2234 = vmatpush2.msra.mxu0 0.0
      %2235 = vmatprep.subr.mxu0 0.0
      %2236 = vmatpush2.msra.mxu0 0.0
      %2237 = vmatprep.subr.mxu0 0.0
      %2238 = vmatpush2.msra.mxu0 0.0
      %2239 = vmatprep.subr.mxu0 0.0
      %2240 = vmatpush2.msra.mxu0 0.0
      %2241 = vmatprep.subr.mxu0 0.0
      %2242 = vmatpush2.msra.mxu0 0.0
      %2243 = vmatprep.subr.mxu0 0.0
      %2244 = vmatpush2.msra.mxu0 0.0
      %2245 = vmatprep.subr.mxu0 0.0
      %2246 = vmatpush2.msra.mxu0 0.0
      %2247 = vmatprep.subr.mxu0 0.0
      %2248 = vmatpush2.msra.mxu0 0.0
      %2249 = vmatprep.subr.mxu0 0.0
      %2250 = vmatpush2.msra.mxu0 0.0
      %2251 = vmatprep.subr.mxu0 0.0
      %2252 = vmatpush2.msra.mxu0 0.0
      %2253 = vmatprep.subr.mxu0 0.0
      %2254 = vmatpush2.msra.mxu0 0.0
      %2255 = vmatprep.mubr.f32.mxu0 0.0
      %2256 = vmatmul.mubr.f32.gmra.mxu0 %v2118
      %v2257 = vpop.f32.mrf.mxu0
      %v2258 = vadd.f32 %v2187, %v2257
      %v2259 = vpop.f32.mrf.mxu0
      %v2260 = vadd.f32 %v2189, %v2259
      %2261 = vdwg.mxu0
      %s2262 = scalar_lea.vmem %s4, 8
      %v2263 = vld [vmem:[%s2262] sm:$0x7]
      %v2265 = vsel %vm1509, %v2263, 0
      %2267 = vmatprep.subr.mxu0 0.0
      %2268 = vmatpush1.msra.mxu0 0.0
      %2269 = vmatprep.subr.mxu0 0.0
      %2270 = vmatpush1.msra.mxu0 0.0
      %2271 = vmatprep.subr.mxu0 0.0
      %2272 = vmatpush1.msra.mxu0 0.0
      %2273 = vmatprep.subr.mxu0 0.0
      %2274 = vmatpush1.msra.mxu0 0.0
      %2275 = vmatprep.subr.mxu0 0.0
      %2276 = vmatpush1.msra.mxu0 0.0
      %2277 = vmatprep.subr.mxu0 0.0
      %2278 = vmatpush1.msra.mxu0 0.0
      %2279 = vmatprep.subr.mxu0 0.0
      %2280 = vmatpush1.msra.mxu0 0.0
      %2281 = vmatprep.subr.mxu0 0.0
      %2282 = vmatpush1.msra.mxu0 0.0
      %2283 = vmatprep.subr.mxu0 0.0
      %2284 = vmatpush1.msra.mxu0 0.0
      %2285 = vmatprep.subr.mxu0 0.0
      %2286 = vmatpush1.msra.mxu0 0.0
      %2287 = vmatprep.subr.mxu0 0.0
      %2288 = vmatpush1.msra.mxu0 0.0
      %2289 = vmatprep.subr.mxu0 0.0
      %2290 = vmatpush1.msra.mxu0 0.0
      %2291 = vmatprep.subr.mxu0 0.0
      %2292 = vmatpush1.msra.mxu0 0.0
      %2293 = vmatprep.subr.mxu0 0.0
      %2294 = vmatpush1.msra.mxu0 0.0
      %2295 = vmatprep.subr.mxu0 %v1518
      %2296 = vmatpush1.msra.mxu0 %v1515
      %2297 = vmatprep.subr.mxu0 %v1503
      %2298 = vmatpush1.msra.mxu0 %v1502
      %2299 = vmatprep.subr.mxu0 0.0
      %2300 = vmatpush2.msra.mxu0 0.0
      %2301 = vmatprep.subr.mxu0 0.0
      %2302 = vmatpush2.msra.mxu0 0.0
      %2303 = vmatprep.subr.mxu0 0.0
      %2304 = vmatpush2.msra.mxu0 0.0
      %2305 = vmatprep.subr.mxu0 0.0
      %2306 = vmatpush2.msra.mxu0 0.0
      %2307 = vmatprep.subr.mxu0 0.0
      %2308 = vmatpush2.msra.mxu0 0.0
      %2309 = vmatprep.subr.mxu0 0.0
      %2310 = vmatpush2.msra.mxu0 0.0
      %2311 = vmatprep.subr.mxu0 0.0
      %2312 = vmatpush2.msra.mxu0 0.0
      %2313 = vmatprep.subr.mxu0 0.0
      %2314 = vmatpush2.msra.mxu0 0.0
      %2315 = vmatprep.subr.mxu0 0.0
      %2316 = vmatpush2.msra.mxu0 0.0
      %2317 = vmatprep.subr.mxu0 0.0
      %2318 = vmatpush2.msra.mxu0 0.0
      %2319 = vmatprep.subr.mxu0 0.0
      %2320 = vmatpush2.msra.mxu0 0.0
      %2321 = vmatprep.subr.mxu0 0.0
      %2322 = vmatpush2.msra.mxu0 0.0
      %2323 = vmatprep.subr.mxu0 0.0
      %2324 = vmatpush2.msra.mxu0 0.0
      %2325 = vmatprep.subr.mxu0 0.0
      %2326 = vmatpush2.msra.mxu0 0.0
      %2327 = vmatprep.subr.mxu0 0.0
      %2328 = vmatpush2.msra.mxu0 0.0
      %2329 = vmatprep.subr.mxu0 0.0
      %2330 = vmatpush2.msra.mxu0 0.0
      %2331 = vmatprep.mubr.f32.mxu0 0.0
      %2332 = vmatmul.mubr.f32.gmra.mxu0 %v2265
      %v2333 = vpop.f32.mrf.mxu0
      %v2334 = vadd.f32 0.0, %v2333
      %v2335 = vpop.f32.mrf.mxu0
      %v2336 = vadd.f32 0.0, %v2335
      %2337 = vdwg.mxu0
      %2338 = vmatprep.subr.mxu0 0.0
      %2339 = vmatpush1.msra.mxu0 0.0
      %2340 = vmatprep.subr.mxu0 0.0
      %2341 = vmatpush1.msra.mxu0 0.0
      %2342 = vmatprep.subr.mxu0 0.0
      %2343 = vmatpush1.msra.mxu0 0.0
      %2344 = vmatprep.subr.mxu0 0.0
      %2345 = vmatpush1.msra.mxu0 0.0
      %2346 = vmatprep.subr.mxu0 0.0
      %2347 = vmatpush1.msra.mxu0 0.0
      %2348 = vmatprep.subr.mxu0 0.0
      %2349 = vmatpush1.msra.mxu0 0.0
      %2350 = vmatprep.subr.mxu0 0.0
      %2351 = vmatpush1.msra.mxu0 0.0
      %2352 = vmatprep.subr.mxu0 0.0
      %2353 = vmatpush1.msra.mxu0 0.0
      %2354 = vmatprep.subr.mxu0 0.0
      %2355 = vmatpush1.msra.mxu0 0.0
      %2356 = vmatprep.subr.mxu0 0.0
      %2357 = vmatpush1.msra.mxu0 0.0
      %2358 = vmatprep.subr.mxu0 0.0
      %2359 = vmatpush1.msra.mxu0 0.0
      %2360 = vmatprep.subr.mxu0 0.0
      %2361 = vmatpush1.msra.mxu0 0.0
      %2362 = vmatprep.subr.mxu0 0.0
      %2363 = vmatpush1.msra.mxu0 0.0
      %2364 = vmatprep.subr.mxu0 0.0
      %2365 = vmatpush1.msra.mxu0 0.0
      %2366 = vmatprep.subr.mxu0 0.0
      %2367 = vmatpush1.msra.mxu0 %v1521
      %2368 = vmatprep.subr.mxu0 0.0
      %2369 = vmatpush1.msra.mxu0 %v1504
      %2370 = vmatprep.subr.mxu0 0.0
      %2371 = vmatpush2.msra.mxu0 0.0
      %2372 = vmatprep.subr.mxu0 0.0
      %2373 = vmatpush2.msra.mxu0 0.0
      %2374 = vmatprep.subr.mxu0 0.0
      %2375 = vmatpush2.msra.mxu0 0.0
      %2376 = vmatprep.subr.mxu0 0.0
      %2377 = vmatpush2.msra.mxu0 0.0
      %2378 = vmatprep.subr.mxu0 0.0
      %2379 = vmatpush2.msra.mxu0 0.0
      %2380 = vmatprep.subr.mxu0 0.0
      %2381 = vmatpush2.msra.mxu0 0.0
      %2382 = vmatprep.subr.mxu0 0.0
      %2383 = vmatpush2.msra.mxu0 0.0
      %2384 = vmatprep.subr.mxu0 0.0
      %2385 = vmatpush2.msra.mxu0 0.0
      %2386 = vmatprep.subr.mxu0 0.0
      %2387 = vmatpush2.msra.mxu0 0.0
      %2388 = vmatprep.subr.mxu0 0.0
      %2389 = vmatpush2.msra.mxu0 0.0
      %2390 = vmatprep.subr.mxu0 0.0
      %2391 = vmatpush2.msra.mxu0 0.0
      %2392 = vmatprep.subr.mxu0 0.0
      %2393 = vmatpush2.msra.mxu0 0.0
      %2394 = vmatprep.subr.mxu0 0.0
      %2395 = vmatpush2.msra.mxu0 0.0
      %2396 = vmatprep.subr.mxu0 0.0
      %2397 = vmatpush2.msra.mxu0 0.0
      %2398 = vmatprep.subr.mxu0 0.0
      %2399 = vmatpush2.msra.mxu0 0.0
      %2400 = vmatprep.subr.mxu0 0.0
      %2401 = vmatpush2.msra.mxu0 0.0
      %2402 = vmatprep.mubr.f32.mxu0 0.0
      %2403 = vmatmul.mubr.f32.gmra.mxu0 %v2265
      %v2404 = vpop.f32.mrf.mxu0
      %v2405 = vadd.f32 0.0, %v2404
      %v2406 = vpop.f32.mrf.mxu0
      %2407 = vdwg.mxu0
      %s2408 = scalar_lea.vmem %s5, 1280
      %v2409 = vld [vmem:[%s2408] sm:$0xff]
      %v2410 = vld [vmem:[%s2408 + $0x8] sm:$0xff]
      %v2411 = vld [vmem:[%s2408 + $0x10] sm:$0xff]
      %v2412 = vld [vmem:[%s2408 + $0x18] sm:$0xff]
      %v2413 = vld [vmem:[%s2408 + $0x20] sm:$0xff]
      %v2414 = vld [vmem:[%s2408 + $0x28] sm:$0xff]
      %v2415 = vld [vmem:[%s2408 + $0x30] sm:$0xff]
      %v2416 = vld [vmem:[%s2408 + $0x38] sm:$0xff]
      %v2417 = vld [vmem:[%s2408 + $0x40] sm:$0xff]
      %v2418 = vld [vmem:[%s2408 + $0x48] sm:$0xff]
      %v2419 = vld [vmem:[%s2408 + $0x50] sm:$0xff]
      %v2420 = vld [vmem:[%s2408 + $0x58] sm:$0xff]
      %v2421 = vld [vmem:[%s2408 + $0x60] sm:$0xff]
      %v2422 = vld [vmem:[%s2408 + $0x68] sm:$0xff]
      %v2423 = vld [vmem:[%s2408 + $0x70] sm:$0xff]
      %v2424 = vld [vmem:[%s2408 + $0x78] sm:$0xff]
      %v2425 = vld [vmem:[%s2408 + $0x80] sm:$0xff]
      %v2426 = vld [vmem:[%s2408 + $0x88] sm:$0xff]
      %v2427 = vld [vmem:[%s2408 + $0x90] sm:$0xff]
      %v2428 = vld [vmem:[%s2408 + $0x98] sm:$0xff]
      %v2429 = vld [vmem:[%s2408 + $0xa0] sm:$0xff]
      %v2430 = vld [vmem:[%s2408 + $0xa8] sm:$0xff]
      %v2431 = vld [vmem:[%s2408 + $0xb0] sm:$0xff]
      %v2432 = vld [vmem:[%s2408 + $0xb8] sm:$0xff]
      %v2433 = vld [vmem:[%s2408 + $0xc0] sm:$0xff]
      %v2434 = vld [vmem:[%s2408 + $0xc8] sm:$0xff]
      %v2435 = vld [vmem:[%s2408 + $0xd0] sm:$0xff]
      %v2436 = vld [vmem:[%s2408 + $0xd8] sm:$0xff]
      %v2437 = vld [vmem:[%s2408 + $0xe0] sm:$0xff]
      %v2438 = vld [vmem:[%s2408 + $0xe8] sm:$0xff]
      %v2439 = vld [vmem:[%s2408 + $0xf0] sm:$0xff]
      %v2440 = vld [vmem:[%s2408 + $0xf8] sm:$0xff]
      %v2441 = vld [vmem:[%s2408 + $0x100] sm:$0xff]
      %v2442 = vld [vmem:[%s2408 + $0x108] sm:$0xff]
      %v2443 = vld [vmem:[%s2408 + $0x110] sm:$0xff]
      %v2444 = vld [vmem:[%s2408 + $0x118] sm:$0xff]
      %v2445 = vld [vmem:[%s2408 + $0x120] sm:$0xff]
      %v2446 = vld [vmem:[%s2408 + $0x128] sm:$0xff]
      %v2447 = vld [vmem:[%s2408 + $0x130] sm:$0xff]
      %v2448 = vld [vmem:[%s2408 + $0x138] sm:$0xff]
      %v2449 = vld [vmem:[%s2408 + $0x140] sm:$0xff]
      %v2450 = vld [vmem:[%s2408 + $0x148] sm:$0xff]
      %v2451 = vld [vmem:[%s2408 + $0x150] sm:$0xff]
      %v2452 = vld [vmem:[%s2408 + $0x158] sm:$0xff]
      %v2453 = vld [vmem:[%s2408 + $0x160] sm:$0xff]
      %v2454 = vld [vmem:[%s2408 + $0x168] sm:$0xff]
      %v2455 = vld [vmem:[%s2408 + $0x170] sm:$0xff]
      %v2456 = vld [vmem:[%s2408 + $0x178] sm:$0xff]
      %v2457 = vld [vmem:[%s2408 + $0x180] sm:$0xff]
      %v2458 = vld [vmem:[%s2408 + $0x188] sm:$0xff]
      %v2459 = vld [vmem:[%s2408 + $0x190] sm:$0xff]
      %v2460 = vld [vmem:[%s2408 + $0x198] sm:$0xff]
      %v2461 = vld [vmem:[%s2408 + $0x1a0] sm:$0xff]
      %v2462 = vld [vmem:[%s2408 + $0x1a8] sm:$0xff]
      %v2463 = vld [vmem:[%s2408 + $0x1b0] sm:$0xff]
      %v2464 = vld [vmem:[%s2408 + $0x1b8] sm:$0xff]
      %v2465 = vld [vmem:[%s2408 + $0x1c0] sm:$0xff]
      %v2466 = vld [vmem:[%s2408 + $0x1c8] sm:$0xff]
      %v2467 = vld [vmem:[%s2408 + $0x1d0] sm:$0xff]
      %v2468 = vld [vmem:[%s2408 + $0x1d8] sm:$0xff]
      %v2469 = vld [vmem:[%s2408 + $0x1e0] sm:$0xff]
      %v2470 = vld [vmem:[%s2408 + $0x1e8] sm:$0xff]
      %v2471 = vld [vmem:[%s2408 + $0x1f0] sm:$0xff]
      %v2472 = vld [vmem:[%s2408 + $0x1f8] sm:$0xff]
      %v2473 = vld [vmem:[%s2408 + $0x200] sm:$0xff]
      %v2474 = vld [vmem:[%s2408 + $0x208] sm:$0xff]
      %v2475 = vld [vmem:[%s2408 + $0x210] sm:$0xff]
      %v2476 = vld [vmem:[%s2408 + $0x218] sm:$0xff]
      %v2477 = vld [vmem:[%s2408 + $0x220] sm:$0xff]
      %v2478 = vld [vmem:[%s2408 + $0x228] sm:$0xff]
      %v2479 = vld [vmem:[%s2408 + $0x230] sm:$0xff]
      %v2480 = vld [vmem:[%s2408 + $0x238] sm:$0xff]
      %v2481 = vld [vmem:[%s2408 + $0x240] sm:$0xff]
      %v2482 = vld [vmem:[%s2408 + $0x248] sm:$0xff]
      %v2483 = vld [vmem:[%s2408 + $0x250] sm:$0xff]
      %v2484 = vld [vmem:[%s2408 + $0x258] sm:$0xff]
      %v2485 = vld [vmem:[%s2408 + $0x260] sm:$0xff]
      %v2486 = vld [vmem:[%s2408 + $0x268] sm:$0xff]
      %v2487 = vld [vmem:[%s2408 + $0x270] sm:$0xff]
      %v2488 = vld [vmem:[%s2408 + $0x278] sm:$0xff]
      %v2490 = vsel %vm1971, %v2405, 0
      %2492 = vmatprep.subr.mxu0 %v2440
      %2493 = vmatpush1.msra.mxu0 %v2439
      %2494 = vmatprep.subr.mxu0 %v2438
      %2495 = vmatpush1.msra.mxu0 %v2437
      %2496 = vmatprep.subr.mxu0 %v2436
      %2497 = vmatpush1.msra.mxu0 %v2435
      %2498 = vmatprep.subr.mxu0 %v2434
      %2499 = vmatpush1.msra.mxu0 %v2433
      %2500 = vmatprep.subr.mxu0 %v2432
      %2501 = vmatpush1.msra.mxu0 %v2431
      %2502 = vmatprep.subr.mxu0 %v2430
      %2503 = vmatpush1.msra.mxu0 %v2429
      %2504 = vmatprep.subr.mxu0 %v2428
      %2505 = vmatpush1.msra.mxu0 %v2427
      %2506 = vmatprep.subr.mxu0 %v2426
      %2507 = vmatpush1.msra.mxu0 %v2425
      %2508 = vmatprep.subr.mxu0 %v2424
      %2509 = vmatpush1.msra.mxu0 %v2423
      %2510 = vmatprep.subr.mxu0 %v2422
      %2511 = vmatpush1.msra.mxu0 %v2421
      %2512 = vmatprep.subr.mxu0 %v2420
      %2513 = vmatpush1.msra.mxu0 %v2419
      %2514 = vmatprep.subr.mxu0 %v2418
      %2515 = vmatpush1.msra.mxu0 %v2417
      %2516 = vmatprep.subr.mxu0 %v2416
      %2517 = vmatpush1.msra.mxu0 %v2415
      %2518 = vmatprep.subr.mxu0 %v2414
      %2519 = vmatpush1.msra.mxu0 %v2413
      %2520 = vmatprep.subr.mxu0 %v2412
      %2521 = vmatpush1.msra.mxu0 %v2411
      %2522 = vmatprep.subr.mxu0 %v2410
      %2523 = vmatpush1.msra.mxu0 %v2409
      %2524 = vmatprep.subr.mxu0 %v2472
      %2525 = vmatpush2.msra.mxu0 %v2471
      %2526 = vmatprep.subr.mxu0 %v2470
      %2527 = vmatpush2.msra.mxu0 %v2469
      %2528 = vmatprep.subr.mxu0 %v2468
      %2529 = vmatpush2.msra.mxu0 %v2467
      %2530 = vmatprep.subr.mxu0 %v2466
      %2531 = vmatpush2.msra.mxu0 %v2465
      %2532 = vmatprep.subr.mxu0 %v2464
      %2533 = vmatpush2.msra.mxu0 %v2463
      %2534 = vmatprep.subr.mxu0 %v2462
      %2535 = vmatpush2.msra.mxu0 %v2461
      %2536 = vmatprep.subr.mxu0 %v2460
      %2537 = vmatpush2.msra.mxu0 %v2459
      %2538 = vmatprep.subr.mxu0 %v2458
      %2539 = vmatpush2.msra.mxu0 %v2457
      %2540 = vmatprep.subr.mxu0 %v2456
      %2541 = vmatpush2.msra.mxu0 %v2455
      %2542 = vmatprep.subr.mxu0 %v2454
      %2543 = vmatpush2.msra.mxu0 %v2453
      %2544 = vmatprep.subr.mxu0 %v2452
      %2545 = vmatpush2.msra.mxu0 %v2451
      %2546 = vmatprep.subr.mxu0 %v2450
      %2547 = vmatpush2.msra.mxu0 %v2449
      %2548 = vmatprep.subr.mxu0 %v2448
      %2549 = vmatpush2.msra.mxu0 %v2447
      %2550 = vmatprep.subr.mxu0 %v2446
      %2551 = vmatpush2.msra.mxu0 %v2445
      %2552 = vmatprep.subr.mxu0 %v2444
      %2553 = vmatpush2.msra.mxu0 %v2443
      %2554 = vmatprep.subr.mxu0 %v2442
      %2555 = vmatpush2.msra.mxu0 %v2441
      %2556 = vmatprep.mubr.f32.mxu0 %v2336
      %2557 = vmatmul.mubr.f32.gmra.mxu0 %v2334
      %v2558 = vpop.f32.mrf.mxu0
      %v2559 = vadd.f32 0.0, %v2558
      %v2560 = vpop.f32.mrf.mxu0
      %v2561 = vadd.f32 0.0, %v2560
      %2562 = vdwg.mxu0
      %2563 = vmatprep.subr.mxu0 0.0
      %2564 = vmatpush1.msra.mxu0 0.0
      %2565 = vmatprep.subr.mxu0 0.0
      %2566 = vmatpush1.msra.mxu0 0.0
      %2567 = vmatprep.subr.mxu0 0.0
      %2568 = vmatpush1.msra.mxu0 0.0
      %2569 = vmatprep.subr.mxu0 0.0
      %2570 = vmatpush1.msra.mxu0 0.0
      %2571 = vmatprep.subr.mxu0 0.0
      %2572 = vmatpush1.msra.mxu0 0.0
      %2573 = vmatprep.subr.mxu0 0.0
      %2574 = vmatpush1.msra.mxu0 0.0
      %2575 = vmatprep.subr.mxu0 0.0
      %2576 = vmatpush1.msra.mxu0 0.0
      %2577 = vmatprep.subr.mxu0 0.0
      %2578 = vmatpush1.msra.mxu0 0.0
      %2579 = vmatprep.subr.mxu0 %v2488
      %2580 = vmatpush1.msra.mxu0 %v2487
      %2581 = vmatprep.subr.mxu0 %v2486
      %2582 = vmatpush1.msra.mxu0 %v2485
      %2583 = vmatprep.subr.mxu0 %v2484
      %2584 = vmatpush1.msra.mxu0 %v2483
      %2585 = vmatprep.subr.mxu0 %v2482
      %2586 = vmatpush1.msra.mxu0 %v2481
      %2587 = vmatprep.subr.mxu0 %v2480
      %2588 = vmatpush1.msra.mxu0 %v2479
      %2589 = vmatprep.subr.mxu0 %v2478
      %2590 = vmatpush1.msra.mxu0 %v2477
      %2591 = vmatprep.subr.mxu0 %v2476
      %2592 = vmatpush1.msra.mxu0 %v2475
      %2593 = vmatprep.subr.mxu0 %v2474
      %2594 = vmatpush1.msra.mxu0 %v2473
      %2595 = vmatprep.subr.mxu0 0.0
      %2596 = vmatpush2.msra.mxu0 0.0
      %2597 = vmatprep.subr.mxu0 0.0
      %2598 = vmatpush2.msra.mxu0 0.0
      %2599 = vmatprep.subr.mxu0 0.0
      %2600 = vmatpush2.msra.mxu0 0.0
      %2601 = vmatprep.subr.mxu0 0.0
      %2602 = vmatpush2.msra.mxu0 0.0
      %2603 = vmatprep.subr.mxu0 0.0
      %2604 = vmatpush2.msra.mxu0 0.0
      %2605 = vmatprep.subr.mxu0 0.0
      %2606 = vmatpush2.msra.mxu0 0.0
      %2607 = vmatprep.subr.mxu0 0.0
      %2608 = vmatpush2.msra.mxu0 0.0
      %2609 = vmatprep.subr.mxu0 0.0
      %2610 = vmatpush2.msra.mxu0 0.0
      %2611 = vmatprep.subr.mxu0 0.0
      %2612 = vmatpush2.msra.mxu0 0.0
      %2613 = vmatprep.subr.mxu0 0.0
      %2614 = vmatpush2.msra.mxu0 0.0
      %2615 = vmatprep.subr.mxu0 0.0
      %2616 = vmatpush2.msra.mxu0 0.0
      %2617 = vmatprep.subr.mxu0 0.0
      %2618 = vmatpush2.msra.mxu0 0.0
      %2619 = vmatprep.subr.mxu0 0.0
      %2620 = vmatpush2.msra.mxu0 0.0
      %2621 = vmatprep.subr.mxu0 0.0
      %2622 = vmatpush2.msra.mxu0 0.0
      %2623 = vmatprep.subr.mxu0 0.0
      %2624 = vmatpush2.msra.mxu0 0.0
      %2625 = vmatprep.subr.mxu0 0.0
      %2626 = vmatpush2.msra.mxu0 0.0
      %2627 = vmatprep.mubr.f32.mxu0 0.0
      %2628 = vmatmul.mubr.f32.gmra.mxu0 %v2490
      %v2629 = vpop.f32.mrf.mxu0
      %v2630 = vadd.f32 %v2559, %v2629
      %v2631 = vpop.f32.mrf.mxu0
      %v2632 = vadd.f32 %v2561, %v2631
      %2633 = vdwg.mxu0
      %v2634 = vadd.f32 %v2258, %v2630
      %v2635 = vadd.f32 %v2260, %v2632
      %v2636 = vld [vmem:[%s6] ss:$4 sm:$0x3]
      %v2638 = vlaneseq
      %v2639 = vshrl.u32 %v2638, 7
      %v2640 = vsub.s32 0, %v2639
      %v2641 = vrot.slane %v2636, %v2640
      %v2642 = vlaneseq
      %v2643 = vshrl.u32 %v2642, 7
      %v2644 = vsub.s32 1, %v2643
      %v2645 = vrot.slane %v2636, %v2644
      %v2648 = vadd.f32 %v2634, %v2641
      %v2649 = vadd.f32 %v2635, %v2645
      %v2650 = vmax.f32 %v2648, 0.0
      %v2651 = vmax.f32 %v2649, 0.0
      %s2652 = scalar_lea.vmem %s6, 1
      %v2653 = vld [vmem:[%s2652] ss:$4 sm:$0x3]
      %v2655 = vlaneseq
      %v2656 = vshrl.u32 %v2655, 7
      %v2657 = vsub.s32 0, %v2656
      %v2658 = vrot.slane %v2653, %v2657
      %v2659 = vlaneseq
      %v2660 = vshrl.u32 %v2659, 7
      %v2661 = vsub.s32 1, %v2660
      %v2662 = vrot.slane %v2653, %v2661
      %v2665 = vmul.f32 %v2650, %v2658
      %v2666 = vmul.f32 %v2651, %v2662
      %s2667 = scalar_lea.vmem %s6, 2
      %v2668 = vld [vmem:[%s2667] ss:$4 sm:$0x3]
      %v2670 = vlaneseq
      %v2671 = vshrl.u32 %v2670, 7
      %v2672 = vsub.s32 0, %v2671
      %v2673 = vrot.slane %v2668, %v2672
      %v2674 = vlaneseq
      %v2675 = vshrl.u32 %v2674, 7
      %v2676 = vsub.s32 1, %v2675
      %v2677 = vrot.slane %v2668, %v2676
      %v2680 = vadd.f32 %v2665, %v2673
      %v2681 = vadd.f32 %v2666, %v2677
      %v2684 = vrot.slane %v2680, 1
      %v2685 = vrot.slane %v2681, 1
      %v2688 = vmax.f32 %v2680, %v2684
      %v2689 = vmax.f32 %v2681, %v2685
      %2692 = vrot.lane.b32.xlu0 %v2688, 64
      %v2693 = vpop.permute.xlu0 %2692
      %2694 = vrot.lane.b32.xlu0 %v2689, 64
      %v2695 = vpop.permute.xlu0 %2694
      %v2696 = vsel %vm1971, %v2693, %v2695
      %v2698 = vmax.f32 %v2688, %v2696
      %v2699 = vld [vmem:[%s7] sm:$0x1f]
      %vm2700 = vcmask 15360
      %v2702 = vsel %vm2700, %v2699, 0
      %v2705 = vsel %vm1513, %v2698, 0
      %2707 = vmatprep.subr.mxu0 0.0
      %2708 = vmatpush1.msra.mxu0 0.0
      %2709 = vmatprep.subr.mxu0 0.0
      %2710 = vmatpush1.msra.mxu0 0.0
      %2711 = vmatprep.subr.mxu0 0.0
      %2712 = vmatpush1.msra.mxu0 0.0
      %2713 = vmatprep.subr.mxu0 0.0
      %2714 = vmatpush1.msra.mxu0 0.0
      %2715 = vmatprep.subr.mxu0 0.0
      %2716 = vmatpush1.msra.mxu0 0.0
      %2717 = vmatprep.subr.mxu0 0.0
      %2718 = vmatpush1.msra.mxu0 0.0
      %2719 = vmatprep.subr.mxu0 0.0
      %2720 = vmatpush1.msra.mxu0 0.0
      %2721 = vmatprep.subr.mxu0 0.0
      %2722 = vmatpush1.msra.mxu0 0.0
      %2723 = vmatprep.subr.mxu0 0.0
      %2724 = vmatpush1.msra.mxu0 0.0
      %2725 = vmatprep.subr.mxu0 0.0
      %2726 = vmatpush1.msra.mxu0 0.0
      %2727 = vmatprep.subr.mxu0 0.0
      %2728 = vmatpush1.msra.mxu0 0.0
      %2729 = vmatprep.subr.mxu0 0.0
      %2730 = vmatpush1.msra.mxu0 0.0
      %2731 = vmatprep.subr.mxu0 0.0
      %2732 = vmatpush1.msra.mxu0 0.0
      %2733 = vmatprep.subr.mxu0 0.0
      %2734 = vmatpush1.msra.mxu0 0.0
      %2735 = vmatprep.subr.mxu0 0.0
      %2736 = vmatpush1.msra.mxu0 0.0
      %2737 = vmatprep.subr.mxu0 0.0
      %2738 = vmatpush1.msra.mxu0 %v2705
      %2739 = vmatprep.subr.mxu0 0.0
      %2740 = vmatpush2.msra.mxu0 0.0
      %2741 = vmatprep.subr.mxu0 0.0
      %2742 = vmatpush2.msra.mxu0 0.0
      %2743 = vmatprep.subr.mxu0 0.0
      %2744 = vmatpush2.msra.mxu0 0.0
      %2745 = vmatprep.subr.mxu0 0.0
      %2746 = vmatpush2.msra.mxu0 0.0
      %2747 = vmatprep.subr.mxu0 0.0
      %2748 = vmatpush2.msra.mxu0 0.0
      %2749 = vmatprep.subr.mxu0 0.0
      %2750 = vmatpush2.msra.mxu0 0.0
      %2751 = vmatprep.subr.mxu0 0.0
      %2752 = vmatpush2.msra.mxu0 0.0
      %2753 = vmatprep.subr.mxu0 0.0
      %2754 = vmatpush2.msra.mxu0 0.0
      %2755 = vmatprep.subr.mxu0 0.0
      %2756 = vmatpush2.msra.mxu0 0.0
      %2757 = vmatprep.subr.mxu0 0.0
      %2758 = vmatpush2.msra.mxu0 0.0
      %2759 = vmatprep.subr.mxu0 0.0
      %2760 = vmatpush2.msra.mxu0 0.0
      %2761 = vmatprep.subr.mxu0 0.0
      %2762 = vmatpush2.msra.mxu0 0.0
      %2763 = vmatprep.subr.mxu0 0.0
      %2764 = vmatpush2.msra.mxu0 0.0
      %2765 = vmatprep.subr.mxu0 0.0
      %2766 = vmatpush2.msra.mxu0 0.0
      %2767 = vmatprep.subr.mxu0 0.0
      %2768 = vmatpush2.msra.mxu0 0.0
      %2769 = vmatprep.subr.mxu0 0.0
      %2770 = vmatpush2.msra.mxu0 0.0
      %2771 = vmatprep.mubr.f32.mxu0 0.0
      %2772 = vmatmul.mubr.f32.gmra.mxu0 %v2702
      %v2773 = vpop.f32.mrf.mxu0
      %v2774 = vadd.f32 0.0, %v2773
      %v2775 = vpop.f32.mrf.mxu0
      %2776 = vdwg.mxu0
      %v2777 = vld [vmem:[%s8] sm:$0xff]
      %v2778 = vld [vmem:[%s8 + $0x8] sm:$0xff]
      %v2779 = vld [vmem:[%s8 + $0x10] sm:$0xff]
      %v2780 = vld [vmem:[%s8 + $0x18] sm:$0xff]
      %v2781 = vld [vmem:[%s8 + $0x20] sm:$0xff]
      %v2782 = vld [vmem:[%s8 + $0x28] sm:$0xff]
      %v2783 = vld [vmem:[%s8 + $0x30] sm:$0xff]
      %v2784 = vld [vmem:[%s8 + $0x38] sm:$0xff]
      %v2785 = vld [vmem:[%s8 + $0x40] sm:$0xff]
      %v2786 = vld [vmem:[%s8 + $0x48] sm:$0xff]
      %v2787 = vld [vmem:[%s8 + $0x50] sm:$0xff]
      %v2788 = vld [vmem:[%s8 + $0x58] sm:$0xff]
      %v2789 = vld [vmem:[%s8 + $0x60] sm:$0xff]
      %v2790 = vld [vmem:[%s8 + $0x68] sm:$0xff]
      %v2791 = vld [vmem:[%s8 + $0x70] sm:$0xff]
      %v2792 = vld [vmem:[%s8 + $0x78] sm:$0xff]
      %v2793 = vld [vmem:[%s8 + $0x80] sm:$0xff]
      %v2794 = vld [vmem:[%s8 + $0x88] sm:$0xff]
      %v2795 = vld [vmem:[%s8 + $0x90] sm:$0xff]
      %v2796 = vld [vmem:[%s8 + $0x98] sm:$0xff]
      %v2797 = vld [vmem:[%s8 + $0xa0] sm:$0xff]
      %v2798 = vld [vmem:[%s8 + $0xa8] sm:$0xff]
      %v2799 = vld [vmem:[%s8 + $0xb0] sm:$0xff]
      %v2800 = vld [vmem:[%s8 + $0xb8] sm:$0xff]
      %v2801 = vld [vmem:[%s8 + $0xc0] sm:$0xff]
      %v2802 = vld [vmem:[%s8 + $0xc8] sm:$0xff]
      %v2803 = vld [vmem:[%s8 + $0xd0] sm:$0xff]
      %v2804 = vld [vmem:[%s8 + $0xd8] sm:$0xff]
      %v2805 = vld [vmem:[%s8 + $0xe0] sm:$0xff]
      %v2806 = vld [vmem:[%s8 + $0xe8] sm:$0xff]
      %v2807 = vld [vmem:[%s8 + $0xf0] sm:$0xff]
      %v2808 = vld [vmem:[%s8 + $0xf8] sm:$0xff]
      %s2809 = scalar_lea.vmem %s7, 8
      %v2810 = vld [vmem:[%s2809] sm:$0x1f]
      %v2812 = vsel %vm2700, %v2810, 0
      %2814 = vmatprep.subr.mxu0 0.0
      %2815 = vmatpush1.msra.mxu0 0.0
      %2816 = vmatprep.subr.mxu0 0.0
      %2817 = vmatpush1.msra.mxu0 0.0
      %2818 = vmatprep.subr.mxu0 0.0
      %2819 = vmatpush1.msra.mxu0 0.0
      %2820 = vmatprep.subr.mxu0 0.0
      %2821 = vmatpush1.msra.mxu0 0.0
      %2822 = vmatprep.subr.mxu0 0.0
      %2823 = vmatpush1.msra.mxu0 0.0
      %2824 = vmatprep.subr.mxu0 0.0
      %2825 = vmatpush1.msra.mxu0 0.0
      %2826 = vmatprep.subr.mxu0 0.0
      %2827 = vmatpush1.msra.mxu0 0.0
      %2828 = vmatprep.subr.mxu0 0.0
      %2829 = vmatpush1.msra.mxu0 0.0
      %2830 = vmatprep.subr.mxu0 0.0
      %2831 = vmatpush1.msra.mxu0 0.0
      %2832 = vmatprep.subr.mxu0 0.0
      %2833 = vmatpush1.msra.mxu0 0.0
      %2834 = vmatprep.subr.mxu0 0.0
      %2835 = vmatpush1.msra.mxu0 0.0
      %2836 = vmatprep.subr.mxu0 0.0
      %2837 = vmatpush1.msra.mxu0 0.0
      %2838 = vmatprep.subr.mxu0 0.0
      %2839 = vmatpush1.msra.mxu0 0.0
      %2840 = vmatprep.subr.mxu0 0.0
      %2841 = vmatpush1.msra.mxu0 0.0
      %2842 = vmatprep.subr.mxu0 0.0
      %2843 = vmatpush1.msra.mxu0 0.0
      %2844 = vmatprep.subr.mxu0 0.0
      %2845 = vmatpush1.msra.mxu0 %v2705
      %2846 = vmatprep.subr.mxu0 0.0
      %2847 = vmatpush2.msra.mxu0 0.0
      %2848 = vmatprep.subr.mxu0 0.0
      %2849 = vmatpush2.msra.mxu0 0.0
      %2850 = vmatprep.subr.mxu0 0.0
      %2851 = vmatpush2.msra.mxu0 0.0
      %2852 = vmatprep.subr.mxu0 0.0
      %2853 = vmatpush2.msra.mxu0 0.0
      %2854 = vmatprep.subr.mxu0 0.0
      %2855 = vmatpush2.msra.mxu0 0.0
      %2856 = vmatprep.subr.mxu0 0.0
      %2857 = vmatpush2.msra.mxu0 0.0
      %2858 = vmatprep.subr.mxu0 0.0
      %2859 = vmatpush2.msra.mxu0 0.0
      %2860 = vmatprep.subr.mxu0 0.0
      %2861 = vmatpush2.msra.mxu0 0.0
      %2862 = vmatprep.subr.mxu0 0.0
      %2863 = vmatpush2.msra.mxu0 0.0
      %2864 = vmatprep.subr.mxu0 0.0
      %2865 = vmatpush2.msra.mxu0 0.0
      %2866 = vmatprep.subr.mxu0 0.0
      %2867 = vmatpush2.msra.mxu0 0.0
      %2868 = vmatprep.subr.mxu0 0.0
      %2869 = vmatpush2.msra.mxu0 0.0
      %2870 = vmatprep.subr.mxu0 0.0
      %2871 = vmatpush2.msra.mxu0 0.0
      %2872 = vmatprep.subr.mxu0 0.0
      %2873 = vmatpush2.msra.mxu0 0.0
      %2874 = vmatprep.subr.mxu0 0.0
      %2875 = vmatpush2.msra.mxu0 0.0
      %2876 = vmatprep.subr.mxu0 0.0
      %2877 = vmatpush2.msra.mxu0 0.0
      %2878 = vmatprep.mubr.f32.mxu0 0.0
      %2879 = vmatmul.mubr.f32.gmra.mxu0 %v2812
      %v2880 = vpop.f32.mrf.mxu0
      %v2881 = vadd.f32 0.0, %v2880
      %v2882 = vpop.f32.mrf.mxu0
      %2883 = vdwg.mxu0
      %s2884 = scalar_lea.vmem %s8, 256
      %v2885 = vld [vmem:[%s2884] sm:$0xff]
      %v2886 = vld [vmem:[%s2884 + $0x8] sm:$0xff]
      %v2887 = vld [vmem:[%s2884 + $0x10] sm:$0xff]
      %v2888 = vld [vmem:[%s2884 + $0x18] sm:$0xff]
      %v2889 = vld [vmem:[%s2884 + $0x20] sm:$0xff]
      %v2890 = vld [vmem:[%s2884 + $0x28] sm:$0xff]
      %v2891 = vld [vmem:[%s2884 + $0x30] sm:$0xff]
      %v2892 = vld [vmem:[%s2884 + $0x38] sm:$0xff]
      %v2893 = vld [vmem:[%s2884 + $0x40] sm:$0xff]
      %v2894 = vld [vmem:[%s2884 + $0x48] sm:$0xff]
      %v2895 = vld [vmem:[%s2884 + $0x50] sm:$0xff]
      %v2896 = vld [vmem:[%s2884 + $0x58] sm:$0xff]
      %v2897 = vld [vmem:[%s2884 + $0x60] sm:$0xff]
      %v2898 = vld [vmem:[%s2884 + $0x68] sm:$0xff]
      %v2899 = vld [vmem:[%s2884 + $0x70] sm:$0xff]
      %v2900 = vld [vmem:[%s2884 + $0x78] sm:$0xff]
      %v2901 = vld [vmem:[%s2884 + $0x80] sm:$0xff]
      %v2902 = vld [vmem:[%s2884 + $0x88] sm:$0xff]
      %v2903 = vld [vmem:[%s2884 + $0x90] sm:$0xff]
      %v2904 = vld [vmem:[%s2884 + $0x98] sm:$0xff]
      %v2905 = vld [vmem:[%s2884 + $0xa0] sm:$0xff]
      %v2906 = vld [vmem:[%s2884 + $0xa8] sm:$0xff]
      %v2907 = vld [vmem:[%s2884 + $0xb0] sm:$0xff]
      %v2908 = vld [vmem:[%s2884 + $0xb8] sm:$0xff]
      %v2909 = vld [vmem:[%s2884 + $0xc0] sm:$0xff]
      %v2910 = vld [vmem:[%s2884 + $0xc8] sm:$0xff]
      %v2911 = vld [vmem:[%s2884 + $0xd0] sm:$0xff]
      %v2912 = vld [vmem:[%s2884 + $0xd8] sm:$0xff]
      %v2913 = vld [vmem:[%s2884 + $0xe0] sm:$0xff]
      %v2914 = vld [vmem:[%s2884 + $0xe8] sm:$0xff]
      %v2915 = vld [vmem:[%s2884 + $0xf0] sm:$0xff]
      %v2916 = vld [vmem:[%s2884 + $0xf8] sm:$0xff]
      %2917 = vmatprep.subr.mxu0 %v2916
      %2918 = vmatpush1.msra.mxu0 %v2915
      %2919 = vmatprep.subr.mxu0 %v2914
      %2920 = vmatpush1.msra.mxu0 %v2913
      %2921 = vmatprep.subr.mxu0 %v2912
      %2922 = vmatpush1.msra.mxu0 %v2911
      %2923 = vmatprep.subr.mxu0 %v2910
      %2924 = vmatpush1.msra.mxu0 %v2909
      %2925 = vmatprep.subr.mxu0 %v2908
      %2926 = vmatpush1.msra.mxu0 %v2907
      %2927 = vmatprep.subr.mxu0 %v2906
      %2928 = vmatpush1.msra.mxu0 %v2905
      %2929 = vmatprep.subr.mxu0 %v2904
      %2930 = vmatpush1.msra.mxu0 %v2903
      %2931 = vmatprep.subr.mxu0 %v2902
      %2932 = vmatpush1.msra.mxu0 %v2901
      %2933 = vmatprep.subr.mxu0 %v2900
      %2934 = vmatpush1.msra.mxu0 %v2899
      %2935 = vmatprep.subr.mxu0 %v2898
      %2936 = vmatpush1.msra.mxu0 %v2897
      %2937 = vmatprep.subr.mxu0 %v2896
      %2938 = vmatpush1.msra.mxu0 %v2895
      %2939 = vmatprep.subr.mxu0 %v2894
      %2940 = vmatpush1.msra.mxu0 %v2893
      %2941 = vmatprep.subr.mxu0 %v2892
      %2942 = vmatpush1.msra.mxu0 %v2891
      %2943 = vmatprep.subr.mxu0 %v2890
      %2944 = vmatpush1.msra.mxu0 %v2889
      %2945 = vmatprep.subr.mxu0 %v2888
      %2946 = vmatpush1.msra.mxu0 %v2887
      %2947 = vmatprep.subr.mxu0 %v2886
      %2948 = vmatpush1.msra.mxu0 %v2885
      %2949 = vmatprep.subr.mxu0 0.0
      %2950 = vmatpush2.msra.mxu0 0.0
      %2951 = vmatprep.subr.mxu0 0.0
      %2952 = vmatpush2.msra.mxu0 0.0
      %2953 = vmatprep.subr.mxu0 0.0
      %2954 = vmatpush2.msra.mxu0 0.0
      %2955 = vmatprep.subr.mxu0 0.0
      %2956 = vmatpush2.msra.mxu0 0.0
      %2957 = vmatprep.subr.mxu0 0.0
      %2958 = vmatpush2.msra.mxu0 0.0
      %2959 = vmatprep.subr.mxu0 0.0
      %2960 = vmatpush2.msra.mxu0 0.0
      %2961 = vmatprep.subr.mxu0 0.0
      %2962 = vmatpush2.msra.mxu0 0.0
      %2963 = vmatprep.subr.mxu0 0.0
      %2964 = vmatpush2.msra.mxu0 0.0
      %2965 = vmatprep.subr.mxu0 0.0
      %2966 = vmatpush2.msra.mxu0 0.0
      %2967 = vmatprep.subr.mxu0 0.0
      %2968 = vmatpush2.msra.mxu0 0.0
      %2969 = vmatprep.subr.mxu0 0.0
      %2970 = vmatpush2.msra.mxu0 0.0
      %2971 = vmatprep.subr.mxu0 0.0
      %2972 = vmatpush2.msra.mxu0 0.0
      %2973 = vmatprep.subr.mxu0 0.0
      %2974 = vmatpush2.msra.mxu0 0.0
      %2975 = vmatprep.subr.mxu0 0.0
      %2976 = vmatpush2.msra.mxu0 0.0
      %2977 = vmatprep.subr.mxu0 0.0
      %2978 = vmatpush2.msra.mxu0 0.0
      %2979 = vmatprep.subr.mxu0 0.0
      %2980 = vmatpush2.msra.mxu0 0.0
      %2981 = vmatprep.mubr.f32.mxu0 0.0
      %2982 = vmatmul.mubr.f32.gmra.mxu0 %v2881
      %v2983 = vpop.f32.mrf.mxu0
      %v2984 = vadd.f32 0.0, %v2983
      %v2985 = vpop.f32.mrf.mxu0
      %v2986 = vadd.f32 0.0, %v2985
      %2987 = vdwg.mxu0
      %2988 = vmatprep.subr.mxu0 %v2808
      %2989 = vmatpush1.msra.mxu0 %v2807
      %2990 = vmatprep.subr.mxu0 %v2806
      %2991 = vmatpush1.msra.mxu0 %v2805
      %2992 = vmatprep.subr.mxu0 %v2804
      %2993 = vmatpush1.msra.mxu0 %v2803
      %2994 = vmatprep.subr.mxu0 %v2802
      %2995 = vmatpush1.msra.mxu0 %v2801
      %2996 = vmatprep.subr.mxu0 %v2800
      %2997 = vmatpush1.msra.mxu0 %v2799
      %2998 = vmatprep.subr.mxu0 %v2798
      %2999 = vmatpush1.msra.mxu0 %v2797
      %3000 = vmatprep.subr.mxu0 %v2796
      %3001 = vmatpush1.msra.mxu0 %v2795
      %3002 = vmatprep.subr.mxu0 %v2794
      %3003 = vmatpush1.msra.mxu0 %v2793
      %3004 = vmatprep.subr.mxu0 %v2792
      %3005 = vmatpush1.msra.mxu0 %v2791
      %3006 = vmatprep.subr.mxu0 %v2790
      %3007 = vmatpush1.msra.mxu0 %v2789
      %3008 = vmatprep.subr.mxu0 %v2788
      %3009 = vmatpush1.msra.mxu0 %v2787
      %3010 = vmatprep.subr.mxu0 %v2786
      %3011 = vmatpush1.msra.mxu0 %v2785
      %3012 = vmatprep.subr.mxu0 %v2784
      %3013 = vmatpush1.msra.mxu0 %v2783
      %3014 = vmatprep.subr.mxu0 %v2782
      %3015 = vmatpush1.msra.mxu0 %v2781
      %3016 = vmatprep.subr.mxu0 %v2780
      %3017 = vmatpush1.msra.mxu0 %v2779
      %3018 = vmatprep.subr.mxu0 %v2778
      %3019 = vmatpush1.msra.mxu0 %v2777
      %3020 = vmatprep.subr.mxu0 0.0
      %3021 = vmatpush2.msra.mxu0 0.0
      %3022 = vmatprep.subr.mxu0 0.0
      %3023 = vmatpush2.msra.mxu0 0.0
      %3024 = vmatprep.subr.mxu0 0.0
      %3025 = vmatpush2.msra.mxu0 0.0
      %3026 = vmatprep.subr.mxu0 0.0
      %3027 = vmatpush2.msra.mxu0 0.0
      %3028 = vmatprep.subr.mxu0 0.0
      %3029 = vmatpush2.msra.mxu0 0.0
      %3030 = vmatprep.subr.mxu0 0.0
      %3031 = vmatpush2.msra.mxu0 0.0
      %3032 = vmatprep.subr.mxu0 0.0
      %3033 = vmatpush2.msra.mxu0 0.0
      %3034 = vmatprep.subr.mxu0 0.0
      %3035 = vmatpush2.msra.mxu0 0.0
      %3036 = vmatprep.subr.mxu0 0.0
      %3037 = vmatpush2.msra.mxu0 0.0
      %3038 = vmatprep.subr.mxu0 0.0
      %3039 = vmatpush2.msra.mxu0 0.0
      %3040 = vmatprep.subr.mxu0 0.0
      %3041 = vmatpush2.msra.mxu0 0.0
      %3042 = vmatprep.subr.mxu0 0.0
      %3043 = vmatpush2.msra.mxu0 0.0
      %3044 = vmatprep.subr.mxu0 0.0
      %3045 = vmatpush2.msra.mxu0 0.0
      %3046 = vmatprep.subr.mxu0 0.0
      %3047 = vmatpush2.msra.mxu0 0.0
      %3048 = vmatprep.subr.mxu0 0.0
      %3049 = vmatpush2.msra.mxu0 0.0
      %3050 = vmatprep.subr.mxu0 0.0
      %3051 = vmatpush2.msra.mxu0 0.0
      %3052 = vmatprep.mubr.f32.mxu0 0.0
      %3053 = vmatmul.mubr.f32.gmra.mxu0 %v2774
      %v3054 = vpop.f32.mrf.mxu0
      %v3055 = vadd.f32 %v2984, %v3054
      %v3056 = vpop.f32.mrf.mxu0
      %v3057 = vadd.f32 %v2986, %v3056
      %3058 = vdwg.mxu0
      %s3059 = scalar_lea.vmem %s7, 16
      %v3060 = vld [vmem:[%s3059] sm:$0x1f]
      %v3062 = vsel %vm2700, %v3060, 0
      %3064 = vmatprep.subr.mxu0 0.0
      %3065 = vmatpush1.msra.mxu0 0.0
      %3066 = vmatprep.subr.mxu0 0.0
      %3067 = vmatpush1.msra.mxu0 0.0
      %3068 = vmatprep.subr.mxu0 0.0
      %3069 = vmatpush1.msra.mxu0 0.0
      %3070 = vmatprep.subr.mxu0 0.0
      %3071 = vmatpush1.msra.mxu0 0.0
      %3072 = vmatprep.subr.mxu0 0.0
      %3073 = vmatpush1.msra.mxu0 0.0
      %3074 = vmatprep.subr.mxu0 0.0
      %3075 = vmatpush1.msra.mxu0 0.0
      %3076 = vmatprep.subr.mxu0 0.0
      %3077 = vmatpush1.msra.mxu0 0.0
      %3078 = vmatprep.subr.mxu0 0.0
      %3079 = vmatpush1.msra.mxu0 0.0
      %3080 = vmatprep.subr.mxu0 0.0
      %3081 = vmatpush1.msra.mxu0 0.0
      %3082 = vmatprep.subr.mxu0 0.0
      %3083 = vmatpush1.msra.mxu0 0.0
      %3084 = vmatprep.subr.mxu0 0.0
      %3085 = vmatpush1.msra.mxu0 0.0
      %3086 = vmatprep.subr.mxu0 0.0
      %3087 = vmatpush1.msra.mxu0 0.0
      %3088 = vmatprep.subr.mxu0 0.0
      %3089 = vmatpush1.msra.mxu0 0.0
      %3090 = vmatprep.subr.mxu0 0.0
      %3091 = vmatpush1.msra.mxu0 0.0
      %3092 = vmatprep.subr.mxu0 0.0
      %3093 = vmatpush1.msra.mxu0 0.0
      %3094 = vmatprep.subr.mxu0 0.0
      %3095 = vmatpush1.msra.mxu0 %v2705
      %3096 = vmatprep.subr.mxu0 0.0
      %3097 = vmatpush2.msra.mxu0 0.0
      %3098 = vmatprep.subr.mxu0 0.0
      %3099 = vmatpush2.msra.mxu0 0.0
      %3100 = vmatprep.subr.mxu0 0.0
      %3101 = vmatpush2.msra.mxu0 0.0
      %3102 = vmatprep.subr.mxu0 0.0
      %3103 = vmatpush2.msra.mxu0 0.0
      %3104 = vmatprep.subr.mxu0 0.0
      %3105 = vmatpush2.msra.mxu0 0.0
      %3106 = vmatprep.subr.mxu0 0.0
      %3107 = vmatpush2.msra.mxu0 0.0
      %3108 = vmatprep.subr.mxu0 0.0
      %3109 = vmatpush2.msra.mxu0 0.0
      %3110 = vmatprep.subr.mxu0 0.0
      %3111 = vmatpush2.msra.mxu0 0.0
      %3112 = vmatprep.subr.mxu0 0.0
      %3113 = vmatpush2.msra.mxu0 0.0
      %3114 = vmatprep.subr.mxu0 0.0
      %3115 = vmatpush2.msra.mxu0 0.0
      %3116 = vmatprep.subr.mxu0 0.0
      %3117 = vmatpush2.msra.mxu0 0.0
      %3118 = vmatprep.subr.mxu0 0.0
      %3119 = vmatpush2.msra.mxu0 0.0
      %3120 = vmatprep.subr.mxu0 0.0
      %3121 = vmatpush2.msra.mxu0 0.0
      %3122 = vmatprep.subr.mxu0 0.0
      %3123 = vmatpush2.msra.mxu0 0.0
      %3124 = vmatprep.subr.mxu0 0.0
      %3125 = vmatpush2.msra.mxu0 0.0
      %3126 = vmatprep.subr.mxu0 0.0
      %3127 = vmatpush2.msra.mxu0 0.0
      %3128 = vmatprep.mubr.f32.mxu0 0.0
      %3129 = vmatmul.mubr.f32.gmra.mxu0 %v3062
      %v3130 = vpop.f32.mrf.mxu0
      %v3131 = vadd.f32 0.0, %v3130
      %v3132 = vpop.f32.mrf.mxu0
      %3133 = vdwg.mxu0
      %s3134 = scalar_lea.vmem %s8, 512
      %v3135 = vld [vmem:[%s3134] sm:$0xff]
      %v3136 = vld [vmem:[%s3134 + $0x8] sm:$0xff]
      %v3137 = vld [vmem:[%s3134 + $0x10] sm:$0xff]
      %v3138 = vld [vmem:[%s3134 + $0x18] sm:$0xff]
      %v3139 = vld [vmem:[%s3134 + $0x20] sm:$0xff]
      %v3140 = vld [vmem:[%s3134 + $0x28] sm:$0xff]
      %v3141 = vld [vmem:[%s3134 + $0x30] sm:$0xff]
      %v3142 = vld [vmem:[%s3134 + $0x38] sm:$0xff]
      %v3143 = vld [vmem:[%s3134 + $0x40] sm:$0xff]
      %v3144 = vld [vmem:[%s3134 + $0x48] sm:$0xff]
      %v3145 = vld [vmem:[%s3134 + $0x50] sm:$0xff]
      %v3146 = vld [vmem:[%s3134 + $0x58] sm:$0xff]
      %v3147 = vld [vmem:[%s3134 + $0x60] sm:$0xff]
      %v3148 = vld [vmem:[%s3134 + $0x68] sm:$0xff]
      %v3149 = vld [vmem:[%s3134 + $0x70] sm:$0xff]
      %v3150 = vld [vmem:[%s3134 + $0x78] sm:$0xff]
      %v3151 = vld [vmem:[%s3134 + $0x80] sm:$0xff]
      %v3152 = vld [vmem:[%s3134 + $0x88] sm:$0xff]
      %v3153 = vld [vmem:[%s3134 + $0x90] sm:$0xff]
      %v3154 = vld [vmem:[%s3134 + $0x98] sm:$0xff]
      %v3155 = vld [vmem:[%s3134 + $0xa0] sm:$0xff]
      %v3156 = vld [vmem:[%s3134 + $0xa8] sm:$0xff]
      %v3157 = vld [vmem:[%s3134 + $0xb0] sm:$0xff]
      %v3158 = vld [vmem:[%s3134 + $0xb8] sm:$0xff]
      %v3159 = vld [vmem:[%s3134 + $0xc0] sm:$0xff]
      %v3160 = vld [vmem:[%s3134 + $0xc8] sm:$0xff]
      %v3161 = vld [vmem:[%s3134 + $0xd0] sm:$0xff]
      %v3162 = vld [vmem:[%s3134 + $0xd8] sm:$0xff]
      %v3163 = vld [vmem:[%s3134 + $0xe0] sm:$0xff]
      %v3164 = vld [vmem:[%s3134 + $0xe8] sm:$0xff]
      %v3165 = vld [vmem:[%s3134 + $0xf0] sm:$0xff]
      %v3166 = vld [vmem:[%s3134 + $0xf8] sm:$0xff]
      %3167 = vmatprep.subr.mxu0 %v3166
      %3168 = vmatpush1.msra.mxu0 %v3165
      %3169 = vmatprep.subr.mxu0 %v3164
      %3170 = vmatpush1.msra.mxu0 %v3163
      %3171 = vmatprep.subr.mxu0 %v3162
      %3172 = vmatpush1.msra.mxu0 %v3161
      %3173 = vmatprep.subr.mxu0 %v3160
      %3174 = vmatpush1.msra.mxu0 %v3159
      %3175 = vmatprep.subr.mxu0 %v3158
      %3176 = vmatpush1.msra.mxu0 %v3157
      %3177 = vmatprep.subr.mxu0 %v3156
      %3178 = vmatpush1.msra.mxu0 %v3155
      %3179 = vmatprep.subr.mxu0 %v3154
      %3180 = vmatpush1.msra.mxu0 %v3153
      %3181 = vmatprep.subr.mxu0 %v3152
      %3182 = vmatpush1.msra.mxu0 %v3151
      %3183 = vmatprep.subr.mxu0 %v3150
      %3184 = vmatpush1.msra.mxu0 %v3149
      %3185 = vmatprep.subr.mxu0 %v3148
      %3186 = vmatpush1.msra.mxu0 %v3147
      %3187 = vmatprep.subr.mxu0 %v3146
      %3188 = vmatpush1.msra.mxu0 %v3145
      %3189 = vmatprep.subr.mxu0 %v3144
      %3190 = vmatpush1.msra.mxu0 %v3143
      %3191 = vmatprep.subr.mxu0 %v3142
      %3192 = vmatpush1.msra.mxu0 %v3141
      %3193 = vmatprep.subr.mxu0 %v3140
      %3194 = vmatpush1.msra.mxu0 %v3139
      %3195 = vmatprep.subr.mxu0 %v3138
      %3196 = vmatpush1.msra.mxu0 %v3137
      %3197 = vmatprep.subr.mxu0 %v3136
      %3198 = vmatpush1.msra.mxu0 %v3135
      %3199 = vmatprep.subr.mxu0 0.0
      %3200 = vmatpush2.msra.mxu0 0.0
      %3201 = vmatprep.subr.mxu0 0.0
      %3202 = vmatpush2.msra.mxu0 0.0
      %3203 = vmatprep.subr.mxu0 0.0
      %3204 = vmatpush2.msra.mxu0 0.0
      %3205 = vmatprep.subr.mxu0 0.0
      %3206 = vmatpush2.msra.mxu0 0.0
      %3207 = vmatprep.subr.mxu0 0.0
      %3208 = vmatpush2.msra.mxu0 0.0
      %3209 = vmatprep.subr.mxu0 0.0
      %3210 = vmatpush2.msra.mxu0 0.0
      %3211 = vmatprep.subr.mxu0 0.0
      %3212 = vmatpush2.msra.mxu0 0.0
      %3213 = vmatprep.subr.mxu0 0.0
      %3214 = vmatpush2.msra.mxu0 0.0
      %3215 = vmatprep.subr.mxu0 0.0
      %3216 = vmatpush2.msra.mxu0 0.0
      %3217 = vmatprep.subr.mxu0 0.0
      %3218 = vmatpush2.msra.mxu0 0.0
      %3219 = vmatprep.subr.mxu0 0.0
      %3220 = vmatpush2.msra.mxu0 0.0
      %3221 = vmatprep.subr.mxu0 0.0
      %3222 = vmatpush2.msra.mxu0 0.0
      %3223 = vmatprep.subr.mxu0 0.0
      %3224 = vmatpush2.msra.mxu0 0.0
      %3225 = vmatprep.subr.mxu0 0.0
      %3226 = vmatpush2.msra.mxu0 0.0
      %3227 = vmatprep.subr.mxu0 0.0
      %3228 = vmatpush2.msra.mxu0 0.0
      %3229 = vmatprep.subr.mxu0 0.0
      %3230 = vmatpush2.msra.mxu0 0.0
      %3231 = vmatprep.mubr.f32.mxu0 0.0
      %3232 = vmatmul.mubr.f32.gmra.mxu0 %v3131
      %v3233 = vpop.f32.mrf.mxu0
      %v3234 = vadd.f32 0.0, %v3233
      %v3235 = vpop.f32.mrf.mxu0
      %v3236 = vadd.f32 0.0, %v3235
      %3237 = vdwg.mxu0
      %v3238 = vadd.f32 %v3055, %v3234
      %v3239 = vadd.f32 %v3057, %v3236
      %v3240 = vld [vmem:[%s9] ss:$4 sm:$0x3]
      %v3242 = vlaneseq
      %v3243 = vshrl.u32 %v3242, 7
      %v3244 = vsub.s32 0, %v3243
      %v3245 = vrot.slane %v3240, %v3244
      %v3246 = vlaneseq
      %v3247 = vshrl.u32 %v3246, 7
      %v3248 = vsub.s32 1, %v3247
      %v3249 = vrot.slane %v3240, %v3248
      %v3252 = vadd.f32 %v3238, %v3245
      %v3253 = vadd.f32 %v3239, %v3249
      %v3254 = vmax.f32 %v3252, 0.0
      %v3255 = vmax.f32 %v3253, 0.0
      %s3256 = scalar_lea.vmem %s9, 1
      %v3257 = vld [vmem:[%s3256] ss:$4 sm:$0x3]
      %v3259 = vlaneseq
      %v3260 = vshrl.u32 %v3259, 7
      %v3261 = vsub.s32 0, %v3260
      %v3262 = vrot.slane %v3257, %v3261
      %v3263 = vlaneseq
      %v3264 = vshrl.u32 %v3263, 7
      %v3265 = vsub.s32 1, %v3264
      %v3266 = vrot.slane %v3257, %v3265
      %v3269 = vmul.f32 %v3254, %v3262
      %v3270 = vmul.f32 %v3255, %v3266
      %s3271 = scalar_lea.vmem %s9, 2
      %v3272 = vld [vmem:[%s3271] ss:$4 sm:$0x3]
      %v3274 = vlaneseq
      %v3275 = vshrl.u32 %v3274, 7
      %v3276 = vsub.s32 0, %v3275
      %v3277 = vrot.slane %v3272, %v3276
      %v3278 = vlaneseq
      %v3279 = vshrl.u32 %v3278, 7
      %v3280 = vsub.s32 1, %v3279
      %v3281 = vrot.slane %v3272, %v3280
      %v3284 = vadd.f32 %v3269, %v3277
      %v3285 = vadd.f32 %v3270, %v3281
      %v3286 = vld [vmem:[%s10] sm:$0xff]
      %v3287 = vld [vmem:[%s10 + $0x8] sm:$0x7f]
      %vm3288 = vcmask 39936
      %v3290 = vsel %vm3288, %v3286, 0
      %v3293 = vsel %vm3288, %v3287, 0
      %vm3295 = vcmask 1044480
      %v3297 = vsel %vm3295, %v3284, 0
      %v3300 = vsel %vm3295, %v3285, 0
      %3302 = vmatprep.subr.mxu0 0.0
      %3303 = vmatpush1.msra.mxu0 0.0
      %3304 = vmatprep.subr.mxu0 0.0
      %3305 = vmatpush1.msra.mxu0 0.0
      %3306 = vmatprep.subr.mxu0 0.0
      %3307 = vmatpush1.msra.mxu0 0.0
      %3308 = vmatprep.subr.mxu0 0.0
      %3309 = vmatpush1.msra.mxu0 0.0
      %3310 = vmatprep.subr.mxu0 0.0
      %3311 = vmatpush1.msra.mxu0 0.0
      %3312 = vmatprep.subr.mxu0 0.0
      %3313 = vmatpush1.msra.mxu0 0.0
      %3314 = vmatprep.subr.mxu0 0.0
      %3315 = vmatpush1.msra.mxu0 0.0
      %3316 = vmatprep.subr.mxu0 0.0
      %3317 = vmatpush1.msra.mxu0 0.0
      %3318 = vmatprep.subr.mxu0 0.0
      %3319 = vmatpush1.msra.mxu0 0.0
      %3320 = vmatprep.subr.mxu0 0.0
      %3321 = vmatpush1.msra.mxu0 0.0
      %3322 = vmatprep.subr.mxu0 0.0
      %3323 = vmatpush1.msra.mxu0 0.0
      %3324 = vmatprep.subr.mxu0 0.0
      %3325 = vmatpush1.msra.mxu0 0.0
      %3326 = vmatprep.subr.mxu0 0.0
      %3327 = vmatpush1.msra.mxu0 0.0
      %3328 = vmatprep.subr.mxu0 0.0
      %3329 = vmatpush1.msra.mxu0 0.0
      %3330 = vmatprep.subr.mxu0 0.0
      %3331 = vmatpush1.msra.mxu0 0.0
      %3332 = vmatprep.subr.mxu0 %v3300
      %3333 = vmatpush1.msra.mxu0 %v3297
      %3334 = vmatprep.subr.mxu0 0.0
      %3335 = vmatpush2.msra.mxu0 0.0
      %3336 = vmatprep.subr.mxu0 0.0
      %3337 = vmatpush2.msra.mxu0 0.0
      %3338 = vmatprep.subr.mxu0 0.0
      %3339 = vmatpush2.msra.mxu0 0.0
      %3340 = vmatprep.subr.mxu0 0.0
      %3341 = vmatpush2.msra.mxu0 0.0
      %3342 = vmatprep.subr.mxu0 0.0
      %3343 = vmatpush2.msra.mxu0 0.0
      %3344 = vmatprep.subr.mxu0 0.0
      %3345 = vmatpush2.msra.mxu0 0.0
      %3346 = vmatprep.subr.mxu0 0.0
      %3347 = vmatpush2.msra.mxu0 0.0
      %3348 = vmatprep.subr.mxu0 0.0
      %3349 = vmatpush2.msra.mxu0 0.0
      %3350 = vmatprep.subr.mxu0 0.0
      %3351 = vmatpush2.msra.mxu0 0.0
      %3352 = vmatprep.subr.mxu0 0.0
      %3353 = vmatpush2.msra.mxu0 0.0
      %3354 = vmatprep.subr.mxu0 0.0
      %3355 = vmatpush2.msra.mxu0 0.0
      %3356 = vmatprep.subr.mxu0 0.0
      %3357 = vmatpush2.msra.mxu0 0.0
      %3358 = vmatprep.subr.mxu0 0.0
      %3359 = vmatpush2.msra.mxu0 0.0
      %3360 = vmatprep.subr.mxu0 0.0
      %3361 = vmatpush2.msra.mxu0 0.0
      %3362 = vmatprep.subr.mxu0 0.0
      %3363 = vmatpush2.msra.mxu0 0.0
      %3364 = vmatprep.subr.mxu0 0.0
      %3365 = vmatpush2.msra.mxu0 0.0
      %3366 = vmatprep.mubr.f32.mxu0 0.0
      %3367 = vmatmul.mubr.f32.gmra.mxu0 %v3290
      %v3368 = vpop.f32.mrf.mxu0
      %v3369 = vadd.f32 0.0, %v3368
      %v3370 = vpop.f32.mrf.mxu0
      %v3371 = vadd.f32 0.0, %v3370
      %3372 = vmatprep.mubr.f32.mxu0 0.0
      %3373 = vmatmul.mubr.f32.gmra.mxu0 %v3293
      %v3374 = vpop.f32.mrf.mxu0
      %v3375 = vadd.f32 0.0, %v3374
      %v3376 = vpop.f32.mrf.mxu0
      %v3377 = vadd.f32 0.0, %v3376
      %3378 = vdwg.mxu0
      %v3379 = vld [vmem:[%s11] sm:$0xff]
      %v3380 = vld [vmem:[%s11 + $0x8] sm:$0xff]
      %v3381 = vld [vmem:[%s11 + $0x10] sm:$0xff]
      %v3382 = vld [vmem:[%s11 + $0x18] sm:$0xff]
      %v3383 = vld [vmem:[%s11 + $0x20] sm:$0xff]
      %v3384 = vld [vmem:[%s11 + $0x28] sm:$0xff]
      %v3385 = vld [vmem:[%s11 + $0x30] sm:$0xff]
      %v3386 = vld [vmem:[%s11 + $0x38] sm:$0xff]
      %v3387 = vld [vmem:[%s11 + $0x40] sm:$0xff]
      %v3388 = vld [vmem:[%s11 + $0x48] sm:$0xff]
      %v3389 = vld [vmem:[%s11 + $0x50] sm:$0xff]
      %v3390 = vld [vmem:[%s11 + $0x58] sm:$0xff]
      %v3391 = vld [vmem:[%s11 + $0x60] sm:$0xff]
      %v3392 = vld [vmem:[%s11 + $0x68] sm:$0xff]
      %v3393 = vld [vmem:[%s11 + $0x70] sm:$0xff]
      %v3394 = vld [vmem:[%s11 + $0x78] sm:$0xff]
      %v3395 = vld [vmem:[%s11 + $0x80] sm:$0xff]
      %v3396 = vld [vmem:[%s11 + $0x88] sm:$0xff]
      %v3397 = vld [vmem:[%s11 + $0x90] sm:$0xff]
      %v3398 = vld [vmem:[%s11 + $0x98] sm:$0xff]
      %v3399 = vld [vmem:[%s11 + $0xa0] sm:$0xff]
      %v3400 = vld [vmem:[%s11 + $0xa8] sm:$0xff]
      %v3401 = vld [vmem:[%s11 + $0xb0] sm:$0xff]
      %v3402 = vld [vmem:[%s11 + $0xb8] sm:$0xff]
      %v3403 = vld [vmem:[%s11 + $0xc0] sm:$0xff]
      %v3404 = vld [vmem:[%s11 + $0xc8] sm:$0xff]
      %v3405 = vld [vmem:[%s11 + $0xd0] sm:$0xff]
      %v3406 = vld [vmem:[%s11 + $0xd8] sm:$0xff]
      %v3407 = vld [vmem:[%s11 + $0xe0] sm:$0xff]
      %v3408 = vld [vmem:[%s11 + $0xe8] sm:$0xff]
      %v3409 = vld [vmem:[%s11 + $0xf0] sm:$0xff]
      %v3410 = vld [vmem:[%s11 + $0xf8] sm:$0xff]
      %v3411 = vld [vmem:[%s11 + $0x100] sm:$0xff]
      %v3412 = vld [vmem:[%s11 + $0x108] sm:$0xff]
      %v3413 = vld [vmem:[%s11 + $0x110] sm:$0xff]
      %v3414 = vld [vmem:[%s11 + $0x118] sm:$0xff]
      %v3415 = vld [vmem:[%s11 + $0x120] sm:$0xff]
      %v3416 = vld [vmem:[%s11 + $0x128] sm:$0xff]
      %v3417 = vld [vmem:[%s11 + $0x130] sm:$0xff]
      %v3418 = vld [vmem:[%s11 + $0x138] sm:$0xff]
      %s3419 = scalar_lea.vmem %s10, 16
      %v3420 = vld [vmem:[%s3419] sm:$0xff]
      %v3421 = vld [vmem:[%s3419 + $0x8] sm:$0x7f]
      %v3423 = vsel %vm3288, %v3420, 0
      %v3426 = vsel %vm3288, %v3421, 0
      %3428 = vmatprep.subr.mxu0 0.0
      %3429 = vmatpush1.msra.mxu0 0.0
      %3430 = vmatprep.subr.mxu0 0.0
      %3431 = vmatpush1.msra.mxu0 0.0
      %3432 = vmatprep.subr.mxu0 0.0
      %3433 = vmatpush1.msra.mxu0 0.0
      %3434 = vmatprep.subr.mxu0 0.0
      %3435 = vmatpush1.msra.mxu0 0.0
      %3436 = vmatprep.subr.mxu0 0.0
      %3437 = vmatpush1.msra.mxu0 0.0
      %3438 = vmatprep.subr.mxu0 0.0
      %3439 = vmatpush1.msra.mxu0 0.0
      %3440 = vmatprep.subr.mxu0 0.0
      %3441 = vmatpush1.msra.mxu0 0.0
      %3442 = vmatprep.subr.mxu0 0.0
      %3443 = vmatpush1.msra.mxu0 0.0
      %3444 = vmatprep.subr.mxu0 0.0
      %3445 = vmatpush1.msra.mxu0 0.0
      %3446 = vmatprep.subr.mxu0 0.0
      %3447 = vmatpush1.msra.mxu0 0.0
      %3448 = vmatprep.subr.mxu0 0.0
      %3449 = vmatpush1.msra.mxu0 0.0
      %3450 = vmatprep.subr.mxu0 0.0
      %3451 = vmatpush1.msra.mxu0 0.0
      %3452 = vmatprep.subr.mxu0 0.0
      %3453 = vmatpush1.msra.mxu0 0.0
      %3454 = vmatprep.subr.mxu0 0.0
      %3455 = vmatpush1.msra.mxu0 0.0
      %3456 = vmatprep.subr.mxu0 0.0
      %3457 = vmatpush1.msra.mxu0 0.0
      %3458 = vmatprep.subr.mxu0 %v3300
      %3459 = vmatpush1.msra.mxu0 %v3297
      %3460 = vmatprep.subr.mxu0 0.0
      %3461 = vmatpush2.msra.mxu0 0.0
      %3462 = vmatprep.subr.mxu0 0.0
      %3463 = vmatpush2.msra.mxu0 0.0
      %3464 = vmatprep.subr.mxu0 0.0
      %3465 = vmatpush2.msra.mxu0 0.0
      %3466 = vmatprep.subr.mxu0 0.0
      %3467 = vmatpush2.msra.mxu0 0.0
      %3468 = vmatprep.subr.mxu0 0.0
      %3469 = vmatpush2.msra.mxu0 0.0
      %3470 = vmatprep.subr.mxu0 0.0
      %3471 = vmatpush2.msra.mxu0 0.0
      %3472 = vmatprep.subr.mxu0 0.0
      %3473 = vmatpush2.msra.mxu0 0.0
      %3474 = vmatprep.subr.mxu0 0.0
      %3475 = vmatpush2.msra.mxu0 0.0
      %3476 = vmatprep.subr.mxu0 0.0
      %3477 = vmatpush2.msra.mxu0 0.0
      %3478 = vmatprep.subr.mxu0 0.0
      %3479 = vmatpush2.msra.mxu0 0.0
      %3480 = vmatprep.subr.mxu0 0.0
      %3481 = vmatpush2.msra.mxu0 0.0
      %3482 = vmatprep.subr.mxu0 0.0
      %3483 = vmatpush2.msra.mxu0 0.0
      %3484 = vmatprep.subr.mxu0 0.0
      %3485 = vmatpush2.msra.mxu0 0.0
      %3486 = vmatprep.subr.mxu0 0.0
      %3487 = vmatpush2.msra.mxu0 0.0
      %3488 = vmatprep.subr.mxu0 0.0
      %3489 = vmatpush2.msra.mxu0 0.0
      %3490 = vmatprep.subr.mxu0 0.0
      %3491 = vmatpush2.msra.mxu0 0.0
      %3492 = vmatprep.mubr.f32.mxu0 0.0
      %3493 = vmatmul.mubr.f32.gmra.mxu0 %v3423
      %v3494 = vpop.f32.mrf.mxu0
      %v3495 = vadd.f32 0.0, %v3494
      %v3496 = vpop.f32.mrf.mxu0
      %v3497 = vadd.f32 0.0, %v3496
      %3498 = vmatprep.mubr.f32.mxu0 0.0
      %3499 = vmatmul.mubr.f32.gmra.mxu0 %v3426
      %v3500 = vpop.f32.mrf.mxu0
      %v3501 = vadd.f32 0.0, %v3500
      %v3502 = vpop.f32.mrf.mxu0
      %v3503 = vadd.f32 0.0, %v3502
      %3504 = vdwg.mxu0
      %s3505 = scalar_lea.vmem %s11, 320
      %v3506 = vld [vmem:[%s3505] sm:$0xff]
      %v3507 = vld [vmem:[%s3505 + $0x8] sm:$0xff]
      %v3508 = vld [vmem:[%s3505 + $0x10] sm:$0xff]
      %v3509 = vld [vmem:[%s3505 + $0x18] sm:$0xff]
      %v3510 = vld [vmem:[%s3505 + $0x20] sm:$0xff]
      %v3511 = vld [vmem:[%s3505 + $0x28] sm:$0xff]
      %v3512 = vld [vmem:[%s3505 + $0x30] sm:$0xff]
      %v3513 = vld [vmem:[%s3505 + $0x38] sm:$0xff]
      %v3514 = vld [vmem:[%s3505 + $0x40] sm:$0xff]
      %v3515 = vld [vmem:[%s3505 + $0x48] sm:$0xff]
      %v3516 = vld [vmem:[%s3505 + $0x50] sm:$0xff]
      %v3517 = vld [vmem:[%s3505 + $0x58] sm:$0xff]
      %v3518 = vld [vmem:[%s3505 + $0x60] sm:$0xff]
      %v3519 = vld [vmem:[%s3505 + $0x68] sm:$0xff]
      %v3520 = vld [vmem:[%s3505 + $0x70] sm:$0xff]
      %v3521 = vld [vmem:[%s3505 + $0x78] sm:$0xff]
      %v3522 = vld [vmem:[%s3505 + $0x80] sm:$0xff]
      %v3523 = vld [vmem:[%s3505 + $0x88] sm:$0xff]
      %v3524 = vld [vmem:[%s3505 + $0x90] sm:$0xff]
      %v3525 = vld [vmem:[%s3505 + $0x98] sm:$0xff]
      %v3526 = vld [vmem:[%s3505 + $0xa0] sm:$0xff]
      %v3527 = vld [vmem:[%s3505 + $0xa8] sm:$0xff]
      %v3528 = vld [vmem:[%s3505 + $0xb0] sm:$0xff]
      %v3529 = vld [vmem:[%s3505 + $0xb8] sm:$0xff]
      %v3530 = vld [vmem:[%s3505 + $0xc0] sm:$0xff]
      %v3531 = vld [vmem:[%s3505 + $0xc8] sm:$0xff]
      %v3532 = vld [vmem:[%s3505 + $0xd0] sm:$0xff]
      %v3533 = vld [vmem:[%s3505 + $0xd8] sm:$0xff]
      %v3534 = vld [vmem:[%s3505 + $0xe0] sm:$0xff]
      %v3535 = vld [vmem:[%s3505 + $0xe8] sm:$0xff]
      %v3536 = vld [vmem:[%s3505 + $0xf0] sm:$0xff]
      %v3537 = vld [vmem:[%s3505 + $0xf8] sm:$0xff]
      %v3538 = vld [vmem:[%s3505 + $0x100] sm:$0xff]
      %v3539 = vld [vmem:[%s3505 + $0x108] sm:$0xff]
      %v3540 = vld [vmem:[%s3505 + $0x110] sm:$0xff]
      %v3541 = vld [vmem:[%s3505 + $0x118] sm:$0xff]
      %v3542 = vld [vmem:[%s3505 + $0x120] sm:$0xff]
      %v3543 = vld [vmem:[%s3505 + $0x128] sm:$0xff]
      %v3544 = vld [vmem:[%s3505 + $0x130] sm:$0xff]
      %v3545 = vld [vmem:[%s3505 + $0x138] sm:$0xff]
      %v3547 = vsel %vm528, %v3497, 0
      %v3550 = vsel %vm528, %v3503, 0
      %3552 = vmatprep.subr.mxu0 %v3537
      %3553 = vmatpush1.msra.mxu0 %v3536
      %3554 = vmatprep.subr.mxu0 %v3535
      %3555 = vmatpush1.msra.mxu0 %v3534
      %3556 = vmatprep.subr.mxu0 %v3533
      %3557 = vmatpush1.msra.mxu0 %v3532
      %3558 = vmatprep.subr.mxu0 %v3531
      %3559 = vmatpush1.msra.mxu0 %v3530
      %3560 = vmatprep.subr.mxu0 %v3529
      %3561 = vmatpush1.msra.mxu0 %v3528
      %3562 = vmatprep.subr.mxu0 %v3527
      %3563 = vmatpush1.msra.mxu0 %v3526
      %3564 = vmatprep.subr.mxu0 %v3525
      %3565 = vmatpush1.msra.mxu0 %v3524
      %3566 = vmatprep.subr.mxu0 %v3523
      %3567 = vmatpush1.msra.mxu0 %v3522
      %3568 = vmatprep.subr.mxu0 %v3521
      %3569 = vmatpush1.msra.mxu0 %v3520
      %3570 = vmatprep.subr.mxu0 %v3519
      %3571 = vmatpush1.msra.mxu0 %v3518
      %3572 = vmatprep.subr.mxu0 %v3517
      %3573 = vmatpush1.msra.mxu0 %v3516
      %3574 = vmatprep.subr.mxu0 %v3515
      %3575 = vmatpush1.msra.mxu0 %v3514
      %3576 = vmatprep.subr.mxu0 %v3513
      %3577 = vmatpush1.msra.mxu0 %v3512
      %3578 = vmatprep.subr.mxu0 %v3511
      %3579 = vmatpush1.msra.mxu0 %v3510
      %3580 = vmatprep.subr.mxu0 %v3509
      %3581 = vmatpush1.msra.mxu0 %v3508
      %3582 = vmatprep.subr.mxu0 %v3507
      %3583 = vmatpush1.msra.mxu0 %v3506
      %3584 = vmatprep.subr.mxu0 0.0
      %3585 = vmatpush2.msra.mxu0 0.0
      %3586 = vmatprep.subr.mxu0 0.0
      %3587 = vmatpush2.msra.mxu0 0.0
      %3588 = vmatprep.subr.mxu0 0.0
      %3589 = vmatpush2.msra.mxu0 0.0
      %3590 = vmatprep.subr.mxu0 0.0
      %3591 = vmatpush2.msra.mxu0 0.0
      %3592 = vmatprep.subr.mxu0 0.0
      %3593 = vmatpush2.msra.mxu0 0.0
      %3594 = vmatprep.subr.mxu0 0.0
      %3595 = vmatpush2.msra.mxu0 0.0
      %3596 = vmatprep.subr.mxu0 0.0
      %3597 = vmatpush2.msra.mxu0 0.0
      %3598 = vmatprep.subr.mxu0 0.0
      %3599 = vmatpush2.msra.mxu0 0.0
      %3600 = vmatprep.subr.mxu0 0.0
      %3601 = vmatpush2.msra.mxu0 0.0
      %3602 = vmatprep.subr.mxu0 0.0
      %3603 = vmatpush2.msra.mxu0 0.0
      %3604 = vmatprep.subr.mxu0 0.0
      %3605 = vmatpush2.msra.mxu0 0.0
      %3606 = vmatprep.subr.mxu0 0.0
      %3607 = vmatpush2.msra.mxu0 0.0
      %3608 = vmatprep.subr.mxu0 %v3545
      %3609 = vmatpush2.msra.mxu0 %v3544
      %3610 = vmatprep.subr.mxu0 %v3543
      %3611 = vmatpush2.msra.mxu0 %v3542
      %3612 = vmatprep.subr.mxu0 %v3541
      %3613 = vmatpush2.msra.mxu0 %v3540
      %3614 = vmatprep.subr.mxu0 %v3539
      %3615 = vmatpush2.msra.mxu0 %v3538
      %3616 = vmatprep.mubr.f32.mxu0 %v3547
      %3617 = vmatmul.mubr.f32.gmra.mxu0 %v3495
      %v3618 = vpop.f32.mrf.mxu0
      %v3619 = vadd.f32 0.0, %v3618
      %v3620 = vpop.f32.mrf.mxu0
      %v3621 = vadd.f32 0.0, %v3620
      %3622 = vmatprep.mubr.f32.mxu0 %v3550
      %3623 = vmatmul.mubr.f32.gmra.mxu0 %v3501
      %v3624 = vpop.f32.mrf.mxu0
      %v3625 = vadd.f32 0.0, %v3624
      %v3626 = vpop.f32.mrf.mxu0
      %v3627 = vadd.f32 0.0, %v3626
      %3628 = vdwg.mxu0
      %v3630 = vsel %vm528, %v3371, 0
      %v3633 = vsel %vm528, %v3377, 0
      %3635 = vmatprep.subr.mxu0 %v3410
      %3636 = vmatpush1.msra.mxu0 %v3409
      %3637 = vmatprep.subr.mxu0 %v3408
      %3638 = vmatpush1.msra.mxu0 %v3407
      %3639 = vmatprep.subr.mxu0 %v3406
      %3640 = vmatpush1.msra.mxu0 %v3405
      %3641 = vmatprep.subr.mxu0 %v3404
      %3642 = vmatpush1.msra.mxu0 %v3403
      %3643 = vmatprep.subr.mxu0 %v3402
      %3644 = vmatpush1.msra.mxu0 %v3401
      %3645 = vmatprep.subr.mxu0 %v3400
      %3646 = vmatpush1.msra.mxu0 %v3399
      %3647 = vmatprep.subr.mxu0 %v3398
      %3648 = vmatpush1.msra.mxu0 %v3397
      %3649 = vmatprep.subr.mxu0 %v3396
      %3650 = vmatpush1.msra.mxu0 %v3395
      %3651 = vmatprep.subr.mxu0 %v3394
      %3652 = vmatpush1.msra.mxu0 %v3393
      %3653 = vmatprep.subr.mxu0 %v3392
      %3654 = vmatpush1.msra.mxu0 %v3391
      %3655 = vmatprep.subr.mxu0 %v3390
      %3656 = vmatpush1.msra.mxu0 %v3389
      %3657 = vmatprep.subr.mxu0 %v3388
      %3658 = vmatpush1.msra.mxu0 %v3387
      %3659 = vmatprep.subr.mxu0 %v3386
      %3660 = vmatpush1.msra.mxu0 %v3385
      %3661 = vmatprep.subr.mxu0 %v3384
      %3662 = vmatpush1.msra.mxu0 %v3383
      %3663 = vmatprep.subr.mxu0 %v3382
      %3664 = vmatpush1.msra.mxu0 %v3381
      %3665 = vmatprep.subr.mxu0 %v3380
      %3666 = vmatpush1.msra.mxu0 %v3379
      %3667 = vmatprep.subr.mxu0 0.0
      %3668 = vmatpush2.msra.mxu0 0.0
      %3669 = vmatprep.subr.mxu0 0.0
      %3670 = vmatpush2.msra.mxu0 0.0
      %3671 = vmatprep.subr.mxu0 0.0
      %3672 = vmatpush2.msra.mxu0 0.0
      %3673 = vmatprep.subr.mxu0 0.0
      %3674 = vmatpush2.msra.mxu0 0.0
      %3675 = vmatprep.subr.mxu0 0.0
      %3676 = vmatpush2.msra.mxu0 0.0
      %3677 = vmatprep.subr.mxu0 0.0
      %3678 = vmatpush2.msra.mxu0 0.0
      %3679 = vmatprep.subr.mxu0 0.0
      %3680 = vmatpush2.msra.mxu0 0.0
      %3681 = vmatprep.subr.mxu0 0.0
      %3682 = vmatpush2.msra.mxu0 0.0
      %3683 = vmatprep.subr.mxu0 0.0
      %3684 = vmatpush2.msra.mxu0 0.0
      %3685 = vmatprep.subr.mxu0 0.0
      %3686 = vmatpush2.msra.mxu0 0.0
      %3687 = vmatprep.subr.mxu0 0.0
      %3688 = vmatpush2.msra.mxu0 0.0
      %3689 = vmatprep.subr.mxu0 0.0
      %3690 = vmatpush2.msra.mxu0 0.0
      %3691 = vmatprep.subr.mxu0 %v3418
      %3692 = vmatpush2.msra.mxu0 %v3417
      %3693 = vmatprep.subr.mxu0 %v3416
      %3694 = vmatpush2.msra.mxu0 %v3415
      %3695 = vmatprep.subr.mxu0 %v3414
      %3696 = vmatpush2.msra.mxu0 %v3413
      %3697 = vmatprep.subr.mxu0 %v3412
      %3698 = vmatpush2.msra.mxu0 %v3411
      %3699 = vmatprep.mubr.f32.mxu0 %v3630
      %3700 = vmatmul.mubr.f32.gmra.mxu0 %v3369
      %v3701 = vpop.f32.mrf.mxu0
      %v3702 = vadd.f32 %v3619, %v3701
      %v3703 = vpop.f32.mrf.mxu0
      %v3704 = vadd.f32 %v3621, %v3703
      %3705 = vmatprep.mubr.f32.mxu0 %v3633
      %3706 = vmatmul.mubr.f32.gmra.mxu0 %v3375
      %v3707 = vpop.f32.mrf.mxu0
      %v3708 = vadd.f32 %v3625, %v3707
      %v3709 = vpop.f32.mrf.mxu0
      %v3710 = vadd.f32 %v3627, %v3709
      %3711 = vdwg.mxu0
      %s3712 = scalar_lea.vmem %s10, 32
      %v3713 = vld [vmem:[%s3712] sm:$0xff]
      %v3714 = vld [vmem:[%s3712 + $0x8] sm:$0x7f]
      %v3716 = vsel %vm3288, %v3713, 0
      %v3719 = vsel %vm3288, %v3714, 0
      %3721 = vmatprep.subr.mxu0 0.0
      %3722 = vmatpush1.msra.mxu0 0.0
      %3723 = vmatprep.subr.mxu0 0.0
      %3724 = vmatpush1.msra.mxu0 0.0
      %3725 = vmatprep.subr.mxu0 0.0
      %3726 = vmatpush1.msra.mxu0 0.0
      %3727 = vmatprep.subr.mxu0 0.0
      %3728 = vmatpush1.msra.mxu0 0.0
      %3729 = vmatprep.subr.mxu0 0.0
      %3730 = vmatpush1.msra.mxu0 0.0
      %3731 = vmatprep.subr.mxu0 0.0
      %3732 = vmatpush1.msra.mxu0 0.0
      %3733 = vmatprep.subr.mxu0 0.0
      %3734 = vmatpush1.msra.mxu0 0.0
      %3735 = vmatprep.subr.mxu0 0.0
      %3736 = vmatpush1.msra.mxu0 0.0
      %3737 = vmatprep.subr.mxu0 0.0
      %3738 = vmatpush1.msra.mxu0 0.0
      %3739 = vmatprep.subr.mxu0 0.0
      %3740 = vmatpush1.msra.mxu0 0.0
      %3741 = vmatprep.subr.mxu0 0.0
      %3742 = vmatpush1.msra.mxu0 0.0
      %3743 = vmatprep.subr.mxu0 0.0
      %3744 = vmatpush1.msra.mxu0 0.0
      %3745 = vmatprep.subr.mxu0 0.0
      %3746 = vmatpush1.msra.mxu0 0.0
      %3747 = vmatprep.subr.mxu0 0.0
      %3748 = vmatpush1.msra.mxu0 0.0
      %3749 = vmatprep.subr.mxu0 0.0
      %3750 = vmatpush1.msra.mxu0 0.0
      %3751 = vmatprep.subr.mxu0 %v3300
      %3752 = vmatpush1.msra.mxu0 %v3297
      %3753 = vmatprep.subr.mxu0 0.0
      %3754 = vmatpush2.msra.mxu0 0.0
      %3755 = vmatprep.subr.mxu0 0.0
      %3756 = vmatpush2.msra.mxu0 0.0
      %3757 = vmatprep.subr.mxu0 0.0
      %3758 = vmatpush2.msra.mxu0 0.0
      %3759 = vmatprep.subr.mxu0 0.0
      %3760 = vmatpush2.msra.mxu0 0.0
      %3761 = vmatprep.subr.mxu0 0.0
      %3762 = vmatpush2.msra.mxu0 0.0
      %3763 = vmatprep.subr.mxu0 0.0
      %3764 = vmatpush2.msra.mxu0 0.0
      %3765 = vmatprep.subr.mxu0 0.0
      %3766 = vmatpush2.msra.mxu0 0.0
      %3767 = vmatprep.subr.mxu0 0.0
      %3768 = vmatpush2.msra.mxu0 0.0
      %3769 = vmatprep.subr.mxu0 0.0
      %3770 = vmatpush2.msra.mxu0 0.0
      %3771 = vmatprep.subr.mxu0 0.0
      %3772 = vmatpush2.msra.mxu0 0.0
      %3773 = vmatprep.subr.mxu0 0.0
      %3774 = vmatpush2.msra.mxu0 0.0
      %3775 = vmatprep.subr.mxu0 0.0
      %3776 = vmatpush2.msra.mxu0 0.0
      %3777 = vmatprep.subr.mxu0 0.0
      %3778 = vmatpush2.msra.mxu0 0.0
      %3779 = vmatprep.subr.mxu0 0.0
      %3780 = vmatpush2.msra.mxu0 0.0
      %3781 = vmatprep.subr.mxu0 0.0
      %3782 = vmatpush2.msra.mxu0 0.0
      %3783 = vmatprep.subr.mxu0 0.0
      %3784 = vmatpush2.msra.mxu0 0.0
      %3785 = vmatprep.mubr.f32.mxu0 0.0
      %3786 = vmatmul.mubr.f32.gmra.mxu0 %v3716
      %v3787 = vpop.f32.mrf.mxu0
      %v3788 = vadd.f32 0.0, %v3787
      %v3789 = vpop.f32.mrf.mxu0
      %v3790 = vadd.f32 0.0, %v3789
      %3791 = vmatprep.mubr.f32.mxu0 0.0
      %3792 = vmatmul.mubr.f32.gmra.mxu0 %v3719
      %v3793 = vpop.f32.mrf.mxu0
      %v3794 = vadd.f32 0.0, %v3793
      %v3795 = vpop.f32.mrf.mxu0
      %v3796 = vadd.f32 0.0, %v3795
      %3797 = vdwg.mxu0
      %s3798 = scalar_lea.vmem %s11, 640
      %v3799 = vld [vmem:[%s3798] sm:$0xff]
      %v3800 = vld [vmem:[%s3798 + $0x8] sm:$0xff]
      %v3801 = vld [vmem:[%s3798 + $0x10] sm:$0xff]
      %v3802 = vld [vmem:[%s3798 + $0x18] sm:$0xff]
      %v3803 = vld [vmem:[%s3798 + $0x20] sm:$0xff]
      %v3804 = vld [vmem:[%s3798 + $0x28] sm:$0xff]
      %v3805 = vld [vmem:[%s3798 + $0x30] sm:$0xff]
      %v3806 = vld [vmem:[%s3798 + $0x38] sm:$0xff]
      %v3807 = vld [vmem:[%s3798 + $0x40] sm:$0xff]
      %v3808 = vld [vmem:[%s3798 + $0x48] sm:$0xff]
      %v3809 = vld [vmem:[%s3798 + $0x50] sm:$0xff]
      %v3810 = vld [vmem:[%s3798 + $0x58] sm:$0xff]
      %v3811 = vld [vmem:[%s3798 + $0x60] sm:$0xff]
      %v3812 = vld [vmem:[%s3798 + $0x68] sm:$0xff]
      %v3813 = vld [vmem:[%s3798 + $0x70] sm:$0xff]
      %v3814 = vld [vmem:[%s3798 + $0x78] sm:$0xff]
      %v3815 = vld [vmem:[%s3798 + $0x80] sm:$0xff]
      %v3816 = vld [vmem:[%s3798 + $0x88] sm:$0xff]
      %v3817 = vld [vmem:[%s3798 + $0x90] sm:$0xff]
      %v3818 = vld [vmem:[%s3798 + $0x98] sm:$0xff]
      %v3819 = vld [vmem:[%s3798 + $0xa0] sm:$0xff]
      %v3820 = vld [vmem:[%s3798 + $0xa8] sm:$0xff]
      %v3821 = vld [vmem:[%s3798 + $0xb0] sm:$0xff]
      %v3822 = vld [vmem:[%s3798 + $0xb8] sm:$0xff]
      %v3823 = vld [vmem:[%s3798 + $0xc0] sm:$0xff]
      %v3824 = vld [vmem:[%s3798 + $0xc8] sm:$0xff]
      %v3825 = vld [vmem:[%s3798 + $0xd0] sm:$0xff]
      %v3826 = vld [vmem:[%s3798 + $0xd8] sm:$0xff]
      %v3827 = vld [vmem:[%s3798 + $0xe0] sm:$0xff]
      %v3828 = vld [vmem:[%s3798 + $0xe8] sm:$0xff]
      %v3829 = vld [vmem:[%s3798 + $0xf0] sm:$0xff]
      %v3830 = vld [vmem:[%s3798 + $0xf8] sm:$0xff]
      %v3831 = vld [vmem:[%s3798 + $0x100] sm:$0xff]
      %v3832 = vld [vmem:[%s3798 + $0x108] sm:$0xff]
      %v3833 = vld [vmem:[%s3798 + $0x110] sm:$0xff]
      %v3834 = vld [vmem:[%s3798 + $0x118] sm:$0xff]
      %v3835 = vld [vmem:[%s3798 + $0x120] sm:$0xff]
      %v3836 = vld [vmem:[%s3798 + $0x128] sm:$0xff]
      %v3837 = vld [vmem:[%s3798 + $0x130] sm:$0xff]
      %v3838 = vld [vmem:[%s3798 + $0x138] sm:$0xff]
      %v3840 = vsel %vm528, %v3790, 0
      %v3843 = vsel %vm528, %v3796, 0
      %3845 = vmatprep.subr.mxu0 %v3830
      %3846 = vmatpush1.msra.mxu0 %v3829
      %3847 = vmatprep.subr.mxu0 %v3828
      %3848 = vmatpush1.msra.mxu0 %v3827
      %3849 = vmatprep.subr.mxu0 %v3826
      %3850 = vmatpush1.msra.mxu0 %v3825
      %3851 = vmatprep.subr.mxu0 %v3824
      %3852 = vmatpush1.msra.mxu0 %v3823
      %3853 = vmatprep.subr.mxu0 %v3822
      %3854 = vmatpush1.msra.mxu0 %v3821
      %3855 = vmatprep.subr.mxu0 %v3820
      %3856 = vmatpush1.msra.mxu0 %v3819
      %3857 = vmatprep.subr.mxu0 %v3818
      %3858 = vmatpush1.msra.mxu0 %v3817
      %3859 = vmatprep.subr.mxu0 %v3816
      %3860 = vmatpush1.msra.mxu0 %v3815
      %3861 = vmatprep.subr.mxu0 %v3814
      %3862 = vmatpush1.msra.mxu0 %v3813
      %3863 = vmatprep.subr.mxu0 %v3812
      %3864 = vmatpush1.msra.mxu0 %v3811
      %3865 = vmatprep.subr.mxu0 %v3810
      %3866 = vmatpush1.msra.mxu0 %v3809
      %3867 = vmatprep.subr.mxu0 %v3808
      %3868 = vmatpush1.msra.mxu0 %v3807
      %3869 = vmatprep.subr.mxu0 %v3806
      %3870 = vmatpush1.msra.mxu0 %v3805
      %3871 = vmatprep.subr.mxu0 %v3804
      %3872 = vmatpush1.msra.mxu0 %v3803
      %3873 = vmatprep.subr.mxu0 %v3802
      %3874 = vmatpush1.msra.mxu0 %v3801
      %3875 = vmatprep.subr.mxu0 %v3800
      %3876 = vmatpush1.msra.mxu0 %v3799
      %3877 = vmatprep.subr.mxu0 0.0
      %3878 = vmatpush2.msra.mxu0 0.0
      %3879 = vmatprep.subr.mxu0 0.0
      %3880 = vmatpush2.msra.mxu0 0.0
      %3881 = vmatprep.subr.mxu0 0.0
      %3882 = vmatpush2.msra.mxu0 0.0
      %3883 = vmatprep.subr.mxu0 0.0
      %3884 = vmatpush2.msra.mxu0 0.0
      %3885 = vmatprep.subr.mxu0 0.0
      %3886 = vmatpush2.msra.mxu0 0.0
      %3887 = vmatprep.subr.mxu0 0.0
      %3888 = vmatpush2.msra.mxu0 0.0
      %3889 = vmatprep.subr.mxu0 0.0
      %3890 = vmatpush2.msra.mxu0 0.0
      %3891 = vmatprep.subr.mxu0 0.0
      %3892 = vmatpush2.msra.mxu0 0.0
      %3893 = vmatprep.subr.mxu0 0.0
      %3894 = vmatpush2.msra.mxu0 0.0
      %3895 = vmatprep.subr.mxu0 0.0
      %3896 = vmatpush2.msra.mxu0 0.0
      %3897 = vmatprep.subr.mxu0 0.0
      %3898 = vmatpush2.msra.mxu0 0.0
      %3899 = vmatprep.subr.mxu0 0.0
      %3900 = vmatpush2.msra.mxu0 0.0
      %3901 = vmatprep.subr.mxu0 %v3838
      %3902 = vmatpush2.msra.mxu0 %v3837
      %3903 = vmatprep.subr.mxu0 %v3836
      %3904 = vmatpush2.msra.mxu0 %v3835
      %3905 = vmatprep.subr.mxu0 %v3834
      %3906 = vmatpush2.msra.mxu0 %v3833
      %3907 = vmatprep.subr.mxu0 %v3832
      %3908 = vmatpush2.msra.mxu0 %v3831
      %3909 = vmatprep.mubr.f32.mxu0 %v3840
      %3910 = vmatmul.mubr.f32.gmra.mxu0 %v3788
      %v3911 = vpop.f32.mrf.mxu0
      %v3912 = vadd.f32 0.0, %v3911
      %v3913 = vpop.f32.mrf.mxu0
      %v3914 = vadd.f32 0.0, %v3913
      %3915 = vmatprep.mubr.f32.mxu0 %v3843
      %3916 = vmatmul.mubr.f32.gmra.mxu0 %v3794
      %v3917 = vpop.f32.mrf.mxu0
      %v3918 = vadd.f32 0.0, %v3917
      %v3919 = vpop.f32.mrf.mxu0
      %v3920 = vadd.f32 0.0, %v3919
      %3921 = vdwg.mxu0
      %v3922 = vadd.f32 %v3702, %v3912
      %v3923 = vadd.f32 %v3704, %v3914
      %v3924 = vadd.f32 %v3708, %v3918
      %v3925 = vadd.f32 %v3710, %v3920
      %s3926 = scalar_lea.vmem %s10, 48
      %v3927 = vld [vmem:[%s3926] sm:$0xff]
      %v3928 = vld [vmem:[%s3926 + $0x8] sm:$0x7f]
      %v3930 = vsel %vm3288, %v3927, 0
      %v3933 = vsel %vm3288, %v3928, 0
      %3935 = vmatprep.subr.mxu0 0.0
      %3936 = vmatpush1.msra.mxu0 0.0
      %3937 = vmatprep.subr.mxu0 0.0
      %3938 = vmatpush1.msra.mxu0 0.0
      %3939 = vmatprep.subr.mxu0 0.0
      %3940 = vmatpush1.msra.mxu0 0.0
      %3941 = vmatprep.subr.mxu0 0.0
      %3942 = vmatpush1.msra.mxu0 0.0
      %3943 = vmatprep.subr.mxu0 0.0
      %3944 = vmatpush1.msra.mxu0 0.0
      %3945 = vmatprep.subr.mxu0 0.0
      %3946 = vmatpush1.msra.mxu0 0.0
      %3947 = vmatprep.subr.mxu0 0.0
      %3948 = vmatpush1.msra.mxu0 0.0
      %3949 = vmatprep.subr.mxu0 0.0
      %3950 = vmatpush1.msra.mxu0 0.0
      %3951 = vmatprep.subr.mxu0 0.0
      %3952 = vmatpush1.msra.mxu0 0.0
      %3953 = vmatprep.subr.mxu0 0.0
      %3954 = vmatpush1.msra.mxu0 0.0
      %3955 = vmatprep.subr.mxu0 0.0
      %3956 = vmatpush1.msra.mxu0 0.0
      %3957 = vmatprep.subr.mxu0 0.0
      %3958 = vmatpush1.msra.mxu0 0.0
      %3959 = vmatprep.subr.mxu0 0.0
      %3960 = vmatpush1.msra.mxu0 0.0
      %3961 = vmatprep.subr.mxu0 0.0
      %3962 = vmatpush1.msra.mxu0 0.0
      %3963 = vmatprep.subr.mxu0 0.0
      %3964 = vmatpush1.msra.mxu0 0.0
      %3965 = vmatprep.subr.mxu0 %v3300
      %3966 = vmatpush1.msra.mxu0 %v3297
      %3967 = vmatprep.subr.mxu0 0.0
      %3968 = vmatpush2.msra.mxu0 0.0
      %3969 = vmatprep.subr.mxu0 0.0
      %3970 = vmatpush2.msra.mxu0 0.0
      %3971 = vmatprep.subr.mxu0 0.0
      %3972 = vmatpush2.msra.mxu0 0.0
      %3973 = vmatprep.subr.mxu0 0.0
      %3974 = vmatpush2.msra.mxu0 0.0
      %3975 = vmatprep.subr.mxu0 0.0
      %3976 = vmatpush2.msra.mxu0 0.0
      %3977 = vmatprep.subr.mxu0 0.0
      %3978 = vmatpush2.msra.mxu0 0.0
      %3979 = vmatprep.subr.mxu0 0.0
      %3980 = vmatpush2.msra.mxu0 0.0
      %3981 = vmatprep.subr.mxu0 0.0
      %3982 = vmatpush2.msra.mxu0 0.0
      %3983 = vmatprep.subr.mxu0 0.0
      %3984 = vmatpush2.msra.mxu0 0.0
      %3985 = vmatprep.subr.mxu0 0.0
      %3986 = vmatpush2.msra.mxu0 0.0
      %3987 = vmatprep.subr.mxu0 0.0
      %3988 = vmatpush2.msra.mxu0 0.0
      %3989 = vmatprep.subr.mxu0 0.0
      %3990 = vmatpush2.msra.mxu0 0.0
      %3991 = vmatprep.subr.mxu0 0.0
      %3992 = vmatpush2.msra.mxu0 0.0
      %3993 = vmatprep.subr.mxu0 0.0
      %3994 = vmatpush2.msra.mxu0 0.0
      %3995 = vmatprep.subr.mxu0 0.0
      %3996 = vmatpush2.msra.mxu0 0.0
      %3997 = vmatprep.subr.mxu0 0.0
      %3998 = vmatpush2.msra.mxu0 0.0
      %3999 = vmatprep.mubr.f32.mxu0 0.0
      %4000 = vmatmul.mubr.f32.gmra.mxu0 %v3930
      %v4001 = vpop.f32.mrf.mxu0
      %v4002 = vadd.f32 0.0, %v4001
      %v4003 = vpop.f32.mrf.mxu0
      %v4004 = vadd.f32 0.0, %v4003
      %4005 = vmatprep.mubr.f32.mxu0 0.0
      %4006 = vmatmul.mubr.f32.gmra.mxu0 %v3933
      %v4007 = vpop.f32.mrf.mxu0
      %v4008 = vadd.f32 0.0, %v4007
      %v4009 = vpop.f32.mrf.mxu0
      %v4010 = vadd.f32 0.0, %v4009
      %4011 = vdwg.mxu0
      %s4012 = scalar_lea.vmem %s11, 960
      %v4013 = vld [vmem:[%s4012] sm:$0xff]
      %v4014 = vld [vmem:[%s4012 + $0x8] sm:$0xff]
      %v4015 = vld [vmem:[%s4012 + $0x10] sm:$0xff]
      %v4016 = vld [vmem:[%s4012 + $0x18] sm:$0xff]
      %v4017 = vld [vmem:[%s4012 + $0x20] sm:$0xff]
      %v4018 = vld [vmem:[%s4012 + $0x28] sm:$0xff]
      %v4019 = vld [vmem:[%s4012 + $0x30] sm:$0xff]
      %v4020 = vld [vmem:[%s4012 + $0x38] sm:$0xff]
      %v4021 = vld [vmem:[%s4012 + $0x40] sm:$0xff]
      %v4022 = vld [vmem:[%s4012 + $0x48] sm:$0xff]
      %v4023 = vld [vmem:[%s4012 + $0x50] sm:$0xff]
      %v4024 = vld [vmem:[%s4012 + $0x58] sm:$0xff]
      %v4025 = vld [vmem:[%s4012 + $0x60] sm:$0xff]
      %v4026 = vld [vmem:[%s4012 + $0x68] sm:$0xff]
      %v4027 = vld [vmem:[%s4012 + $0x70] sm:$0xff]
      %v4028 = vld [vmem:[%s4012 + $0x78] sm:$0xff]
      %v4029 = vld [vmem:[%s4012 + $0x80] sm:$0xff]
      %v4030 = vld [vmem:[%s4012 + $0x88] sm:$0xff]
      %v4031 = vld [vmem:[%s4012 + $0x90] sm:$0xff]
      %v4032 = vld [vmem:[%s4012 + $0x98] sm:$0xff]
      %v4033 = vld [vmem:[%s4012 + $0xa0] sm:$0xff]
      %v4034 = vld [vmem:[%s4012 + $0xa8] sm:$0xff]
      %v4035 = vld [vmem:[%s4012 + $0xb0] sm:$0xff]
      %v4036 = vld [vmem:[%s4012 + $0xb8] sm:$0xff]
      %v4037 = vld [vmem:[%s4012 + $0xc0] sm:$0xff]
      %v4038 = vld [vmem:[%s4012 + $0xc8] sm:$0xff]
      %v4039 = vld [vmem:[%s4012 + $0xd0] sm:$0xff]
      %v4040 = vld [vmem:[%s4012 + $0xd8] sm:$0xff]
      %v4041 = vld [vmem:[%s4012 + $0xe0] sm:$0xff]
      %v4042 = vld [vmem:[%s4012 + $0xe8] sm:$0xff]
      %v4043 = vld [vmem:[%s4012 + $0xf0] sm:$0xff]
      %v4044 = vld [vmem:[%s4012 + $0xf8] sm:$0xff]
      %v4045 = vld [vmem:[%s4012 + $0x100] sm:$0xff]
      %v4046 = vld [vmem:[%s4012 + $0x108] sm:$0xff]
      %v4047 = vld [vmem:[%s4012 + $0x110] sm:$0xff]
      %v4048 = vld [vmem:[%s4012 + $0x118] sm:$0xff]
      %v4049 = vld [vmem:[%s4012 + $0x120] sm:$0xff]
      %v4050 = vld [vmem:[%s4012 + $0x128] sm:$0xff]
      %v4051 = vld [vmem:[%s4012 + $0x130] sm:$0xff]
      %v4052 = vld [vmem:[%s4012 + $0x138] sm:$0xff]
      %v4054 = vsel %vm528, %v4004, 0
      %v4057 = vsel %vm528, %v4010, 0
      %4059 = vmatprep.subr.mxu0 %v4044
      %4060 = vmatpush1.msra.mxu0 %v4043
      %4061 = vmatprep.subr.mxu0 %v4042
      %4062 = vmatpush1.msra.mxu0 %v4041
      %4063 = vmatprep.subr.mxu0 %v4040
      %4064 = vmatpush1.msra.mxu0 %v4039
      %4065 = vmatprep.subr.mxu0 %v4038
      %4066 = vmatpush1.msra.mxu0 %v4037
      %4067 = vmatprep.subr.mxu0 %v4036
      %4068 = vmatpush1.msra.mxu0 %v4035
      %4069 = vmatprep.subr.mxu0 %v4034
      %4070 = vmatpush1.msra.mxu0 %v4033
      %4071 = vmatprep.subr.mxu0 %v4032
      %4072 = vmatpush1.msra.mxu0 %v4031
      %4073 = vmatprep.subr.mxu0 %v4030
      %4074 = vmatpush1.msra.mxu0 %v4029
      %4075 = vmatprep.subr.mxu0 %v4028
      %4076 = vmatpush1.msra.mxu0 %v4027
      %4077 = vmatprep.subr.mxu0 %v4026
      %4078 = vmatpush1.msra.mxu0 %v4025
      %4079 = vmatprep.subr.mxu0 %v4024
      %4080 = vmatpush1.msra.mxu0 %v4023
      %4081 = vmatprep.subr.mxu0 %v4022
      %4082 = vmatpush1.msra.mxu0 %v4021
      %4083 = vmatprep.subr.mxu0 %v4020
      %4084 = vmatpush1.msra.mxu0 %v4019
      %4085 = vmatprep.subr.mxu0 %v4018
      %4086 = vmatpush1.msra.mxu0 %v4017
      %4087 = vmatprep.subr.mxu0 %v4016
      %4088 = vmatpush1.msra.mxu0 %v4015
      %4089 = vmatprep.subr.mxu0 %v4014
      %4090 = vmatpush1.msra.mxu0 %v4013
      %4091 = vmatprep.subr.mxu0 0.0
      %4092 = vmatpush2.msra.mxu0 0.0
      %4093 = vmatprep.subr.mxu0 0.0
      %4094 = vmatpush2.msra.mxu0 0.0
      %4095 = vmatprep.subr.mxu0 0.0
      %4096 = vmatpush2.msra.mxu0 0.0
      %4097 = vmatprep.subr.mxu0 0.0
      %4098 = vmatpush2.msra.mxu0 0.0
      %4099 = vmatprep.subr.mxu0 0.0
      %4100 = vmatpush2.msra.mxu0 0.0
      %4101 = vmatprep.subr.mxu0 0.0
      %4102 = vmatpush2.msra.mxu0 0.0
      %4103 = vmatprep.subr.mxu0 0.0
      %4104 = vmatpush2.msra.mxu0 0.0
      %4105 = vmatprep.subr.mxu0 0.0
      %4106 = vmatpush2.msra.mxu0 0.0
      %4107 = vmatprep.subr.mxu0 0.0
      %4108 = vmatpush2.msra.mxu0 0.0
      %4109 = vmatprep.subr.mxu0 0.0
      %4110 = vmatpush2.msra.mxu0 0.0
      %4111 = vmatprep.subr.mxu0 0.0
      %4112 = vmatpush2.msra.mxu0 0.0
      %4113 = vmatprep.subr.mxu0 0.0
      %4114 = vmatpush2.msra.mxu0 0.0
      %4115 = vmatprep.subr.mxu0 %v4052
      %4116 = vmatpush2.msra.mxu0 %v4051
      %4117 = vmatprep.subr.mxu0 %v4050
      %4118 = vmatpush2.msra.mxu0 %v4049
      %4119 = vmatprep.subr.mxu0 %v4048
      %4120 = vmatpush2.msra.mxu0 %v4047
      %4121 = vmatprep.subr.mxu0 %v4046
      %4122 = vmatpush2.msra.mxu0 %v4045
      %4123 = vmatprep.mubr.f32.mxu0 %v4054
      %4124 = vmatmul.mubr.f32.gmra.mxu0 %v4002
      %v4125 = vpop.f32.mrf.mxu0
      %v4126 = vadd.f32 0.0, %v4125
      %v4127 = vpop.f32.mrf.mxu0
      %v4128 = vadd.f32 0.0, %v4127
      %4129 = vmatprep.mubr.f32.mxu0 %v4057
      %4130 = vmatmul.mubr.f32.gmra.mxu0 %v4008
      %v4131 = vpop.f32.mrf.mxu0
      %v4132 = vadd.f32 0.0, %v4131
      %v4133 = vpop.f32.mrf.mxu0
      %v4134 = vadd.f32 0.0, %v4133
      %4135 = vdwg.mxu0
      %v4136 = vadd.f32 %v3922, %v4126
      %v4137 = vadd.f32 %v3923, %v4128
      %v4138 = vadd.f32 %v3924, %v4132
      %v4139 = vadd.f32 %v3925, %v4134
      %s4140 = scalar_lea.vmem %s10, 64
      %v4141 = vld [vmem:[%s4140] sm:$0xff]
      %v4142 = vld [vmem:[%s4140 + $0x8] sm:$0x7f]
      %v4144 = vsel %vm3288, %v4141, 0
      %v4147 = vsel %vm3288, %v4142, 0
      %4149 = vmatprep.subr.mxu0 0.0
      %4150 = vmatpush1.msra.mxu0 0.0
      %4151 = vmatprep.subr.mxu0 0.0
      %4152 = vmatpush1.msra.mxu0 0.0
      %4153 = vmatprep.subr.mxu0 0.0
      %4154 = vmatpush1.msra.mxu0 0.0
      %4155 = vmatprep.subr.mxu0 0.0
      %4156 = vmatpush1.msra.mxu0 0.0
      %4157 = vmatprep.subr.mxu0 0.0
      %4158 = vmatpush1.msra.mxu0 0.0
      %4159 = vmatprep.subr.mxu0 0.0
      %4160 = vmatpush1.msra.mxu0 0.0
      %4161 = vmatprep.subr.mxu0 0.0
      %4162 = vmatpush1.msra.mxu0 0.0
      %4163 = vmatprep.subr.mxu0 0.0
      %4164 = vmatpush1.msra.mxu0 0.0
      %4165 = vmatprep.subr.mxu0 0.0
      %4166 = vmatpush1.msra.mxu0 0.0
      %4167 = vmatprep.subr.mxu0 0.0
      %4168 = vmatpush1.msra.mxu0 0.0
      %4169 = vmatprep.subr.mxu0 0.0
      %4170 = vmatpush1.msra.mxu0 0.0
      %4171 = vmatprep.subr.mxu0 0.0
      %4172 = vmatpush1.msra.mxu0 0.0
      %4173 = vmatprep.subr.mxu0 0.0
      %4174 = vmatpush1.msra.mxu0 0.0
      %4175 = vmatprep.subr.mxu0 0.0
      %4176 = vmatpush1.msra.mxu0 0.0
      %4177 = vmatprep.subr.mxu0 0.0
      %4178 = vmatpush1.msra.mxu0 0.0
      %4179 = vmatprep.subr.mxu0 %v3300
      %4180 = vmatpush1.msra.mxu0 %v3297
      %4181 = vmatprep.subr.mxu0 0.0
      %4182 = vmatpush2.msra.mxu0 0.0
      %4183 = vmatprep.subr.mxu0 0.0
      %4184 = vmatpush2.msra.mxu0 0.0
      %4185 = vmatprep.subr.mxu0 0.0
      %4186 = vmatpush2.msra.mxu0 0.0
      %4187 = vmatprep.subr.mxu0 0.0
      %4188 = vmatpush2.msra.mxu0 0.0
      %4189 = vmatprep.subr.mxu0 0.0
      %4190 = vmatpush2.msra.mxu0 0.0
      %4191 = vmatprep.subr.mxu0 0.0
      %4192 = vmatpush2.msra.mxu0 0.0
      %4193 = vmatprep.subr.mxu0 0.0
      %4194 = vmatpush2.msra.mxu0 0.0
      %4195 = vmatprep.subr.mxu0 0.0
      %4196 = vmatpush2.msra.mxu0 0.0
      %4197 = vmatprep.subr.mxu0 0.0
      %4198 = vmatpush2.msra.mxu0 0.0
      %4199 = vmatprep.subr.mxu0 0.0
      %4200 = vmatpush2.msra.mxu0 0.0
      %4201 = vmatprep.subr.mxu0 0.0
      %4202 = vmatpush2.msra.mxu0 0.0
      %4203 = vmatprep.subr.mxu0 0.0
      %4204 = vmatpush2.msra.mxu0 0.0
      %4205 = vmatprep.subr.mxu0 0.0
      %4206 = vmatpush2.msra.mxu0 0.0
      %4207 = vmatprep.subr.mxu0 0.0
      %4208 = vmatpush2.msra.mxu0 0.0
      %4209 = vmatprep.subr.mxu0 0.0
      %4210 = vmatpush2.msra.mxu0 0.0
      %4211 = vmatprep.subr.mxu0 0.0
      %4212 = vmatpush2.msra.mxu0 0.0
      %4213 = vmatprep.mubr.f32.mxu0 0.0
      %4214 = vmatmul.mubr.f32.gmra.mxu0 %v4144
      %v4215 = vpop.f32.mrf.mxu0
      %v4216 = vadd.f32 0.0, %v4215
      %v4217 = vpop.f32.mrf.mxu0
      %v4218 = vadd.f32 0.0, %v4217
      %4219 = vmatprep.mubr.f32.mxu0 0.0
      %4220 = vmatmul.mubr.f32.gmra.mxu0 %v4147
      %v4221 = vpop.f32.mrf.mxu0
      %v4222 = vadd.f32 0.0, %v4221
      %v4223 = vpop.f32.mrf.mxu0
      %v4224 = vadd.f32 0.0, %v4223
      %4225 = vdwg.mxu0
      %s4226 = scalar_lea.vmem %s11, 1280
      %v4227 = vld [vmem:[%s4226] sm:$0xff]
      %v4228 = vld [vmem:[%s4226 + $0x8] sm:$0xff]
      %v4229 = vld [vmem:[%s4226 + $0x10] sm:$0xff]
      %v4230 = vld [vmem:[%s4226 + $0x18] sm:$0xff]
      %v4231 = vld [vmem:[%s4226 + $0x20] sm:$0xff]
      %v4232 = vld [vmem:[%s4226 + $0x28] sm:$0xff]
      %v4233 = vld [vmem:[%s4226 + $0x30] sm:$0xff]
      %v4234 = vld [vmem:[%s4226 + $0x38] sm:$0xff]
      %v4235 = vld [vmem:[%s4226 + $0x40] sm:$0xff]
      %v4236 = vld [vmem:[%s4226 + $0x48] sm:$0xff]
      %v4237 = vld [vmem:[%s4226 + $0x50] sm:$0xff]
      %v4238 = vld [vmem:[%s4226 + $0x58] sm:$0xff]
      %v4239 = vld [vmem:[%s4226 + $0x60] sm:$0xff]
      %v4240 = vld [vmem:[%s4226 + $0x68] sm:$0xff]
      %v4241 = vld [vmem:[%s4226 + $0x70] sm:$0xff]
      %v4242 = vld [vmem:[%s4226 + $0x78] sm:$0xff]
      %v4243 = vld [vmem:[%s4226 + $0x80] sm:$0xff]
      %v4244 = vld [vmem:[%s4226 + $0x88] sm:$0xff]
      %v4245 = vld [vmem:[%s4226 + $0x90] sm:$0xff]
      %v4246 = vld [vmem:[%s4226 + $0x98] sm:$0xff]
      %v4247 = vld [vmem:[%s4226 + $0xa0] sm:$0xff]
      %v4248 = vld [vmem:[%s4226 + $0xa8] sm:$0xff]
      %v4249 = vld [vmem:[%s4226 + $0xb0] sm:$0xff]
      %v4250 = vld [vmem:[%s4226 + $0xb8] sm:$0xff]
      %v4251 = vld [vmem:[%s4226 + $0xc0] sm:$0xff]
      %v4252 = vld [vmem:[%s4226 + $0xc8] sm:$0xff]
      %v4253 = vld [vmem:[%s4226 + $0xd0] sm:$0xff]
      %v4254 = vld [vmem:[%s4226 + $0xd8] sm:$0xff]
      %v4255 = vld [vmem:[%s4226 + $0xe0] sm:$0xff]
      %v4256 = vld [vmem:[%s4226 + $0xe8] sm:$0xff]
      %v4257 = vld [vmem:[%s4226 + $0xf0] sm:$0xff]
      %v4258 = vld [vmem:[%s4226 + $0xf8] sm:$0xff]
      %v4259 = vld [vmem:[%s4226 + $0x100] sm:$0xff]
      %v4260 = vld [vmem:[%s4226 + $0x108] sm:$0xff]
      %v4261 = vld [vmem:[%s4226 + $0x110] sm:$0xff]
      %v4262 = vld [vmem:[%s4226 + $0x118] sm:$0xff]
      %v4263 = vld [vmem:[%s4226 + $0x120] sm:$0xff]
      %v4264 = vld [vmem:[%s4226 + $0x128] sm:$0xff]
      %v4265 = vld [vmem:[%s4226 + $0x130] sm:$0xff]
      %v4266 = vld [vmem:[%s4226 + $0x138] sm:$0xff]
      %v4268 = vsel %vm528, %v4218, 0
      %v4271 = vsel %vm528, %v4224, 0
      %4273 = vmatprep.subr.mxu0 %v4258
      %4274 = vmatpush1.msra.mxu0 %v4257
      %4275 = vmatprep.subr.mxu0 %v4256
      %4276 = vmatpush1.msra.mxu0 %v4255
      %4277 = vmatprep.subr.mxu0 %v4254
      %4278 = vmatpush1.msra.mxu0 %v4253
      %4279 = vmatprep.subr.mxu0 %v4252
      %4280 = vmatpush1.msra.mxu0 %v4251
      %4281 = vmatprep.subr.mxu0 %v4250
      %4282 = vmatpush1.msra.mxu0 %v4249
      %4283 = vmatprep.subr.mxu0 %v4248
      %4284 = vmatpush1.msra.mxu0 %v4247
      %4285 = vmatprep.subr.mxu0 %v4246
      %4286 = vmatpush1.msra.mxu0 %v4245
      %4287 = vmatprep.subr.mxu0 %v4244
      %4288 = vmatpush1.msra.mxu0 %v4243
      %4289 = vmatprep.subr.mxu0 %v4242
      %4290 = vmatpush1.msra.mxu0 %v4241
      %4291 = vmatprep.subr.mxu0 %v4240
      %4292 = vmatpush1.msra.mxu0 %v4239
      %4293 = vmatprep.subr.mxu0 %v4238
      %4294 = vmatpush1.msra.mxu0 %v4237
      %4295 = vmatprep.subr.mxu0 %v4236
      %4296 = vmatpush1.msra.mxu0 %v4235
      %4297 = vmatprep.subr.mxu0 %v4234
      %4298 = vmatpush1.msra.mxu0 %v4233
      %4299 = vmatprep.subr.mxu0 %v4232
      %4300 = vmatpush1.msra.mxu0 %v4231
      %4301 = vmatprep.subr.mxu0 %v4230
      %4302 = vmatpush1.msra.mxu0 %v4229
      %4303 = vmatprep.subr.mxu0 %v4228
      %4304 = vmatpush1.msra.mxu0 %v4227
      %4305 = vmatprep.subr.mxu0 0.0
      %4306 = vmatpush2.msra.mxu0 0.0
      %4307 = vmatprep.subr.mxu0 0.0
      %4308 = vmatpush2.msra.mxu0 0.0
      %4309 = vmatprep.subr.mxu0 0.0
      %4310 = vmatpush2.msra.mxu0 0.0
      %4311 = vmatprep.subr.mxu0 0.0
      %4312 = vmatpush2.msra.mxu0 0.0
      %4313 = vmatprep.subr.mxu0 0.0
      %4314 = vmatpush2.msra.mxu0 0.0
      %4315 = vmatprep.subr.mxu0 0.0
      %4316 = vmatpush2.msra.mxu0 0.0
      %4317 = vmatprep.subr.mxu0 0.0
      %4318 = vmatpush2.msra.mxu0 0.0
      %4319 = vmatprep.subr.mxu0 0.0
      %4320 = vmatpush2.msra.mxu0 0.0
      %4321 = vmatprep.subr.mxu0 0.0
      %4322 = vmatpush2.msra.mxu0 0.0
      %4323 = vmatprep.subr.mxu0 0.0
      %4324 = vmatpush2.msra.mxu0 0.0
      %4325 = vmatprep.subr.mxu0 0.0
      %4326 = vmatpush2.msra.mxu0 0.0
      %4327 = vmatprep.subr.mxu0 0.0
      %4328 = vmatpush2.msra.mxu0 0.0
      %4329 = vmatprep.subr.mxu0 %v4266
      %4330 = vmatpush2.msra.mxu0 %v4265
      %4331 = vmatprep.subr.mxu0 %v4264
      %4332 = vmatpush2.msra.mxu0 %v4263
      %4333 = vmatprep.subr.mxu0 %v4262
      %4334 = vmatpush2.msra.mxu0 %v4261
      %4335 = vmatprep.subr.mxu0 %v4260
      %4336 = vmatpush2.msra.mxu0 %v4259
      %4337 = vmatprep.mubr.f32.mxu0 %v4268
      %4338 = vmatmul.mubr.f32.gmra.mxu0 %v4216
      %v4339 = vpop.f32.mrf.mxu0
      %v4340 = vadd.f32 0.0, %v4339
      %v4341 = vpop.f32.mrf.mxu0
      %v4342 = vadd.f32 0.0, %v4341
      %4343 = vmatprep.mubr.f32.mxu0 %v4271
      %4344 = vmatmul.mubr.f32.gmra.mxu0 %v4222
      %v4345 = vpop.f32.mrf.mxu0
      %v4346 = vadd.f32 0.0, %v4345
      %v4347 = vpop.f32.mrf.mxu0
      %v4348 = vadd.f32 0.0, %v4347
      %4349 = vdwg.mxu0
      %v4350 = vadd.f32 %v4136, %v4340
      %v4351 = vadd.f32 %v4137, %v4342
      %v4352 = vadd.f32 %v4138, %v4346
      %v4353 = vadd.f32 %v4139, %v4348
      %v4354 = vld [vmem:[%s12] ss:$4 sm:$0x3]
      %v4356 = vlaneseq
      %v4357 = vshrl.u32 %v4356, 7
      %v4358 = vsub.s32 0, %v4357
      %v4359 = vrot.slane %v4354, %v4358
      %v4360 = vlaneseq
      %v4361 = vshrl.u32 %v4360, 7
      %v4362 = vsub.s32 1, %v4361
      %v4363 = vrot.slane %v4354, %v4362
      %v4366 = vadd.f32 %v4350, %v4359
      %v4367 = vadd.f32 %v4351, %v4363
      %v4368 = vadd.f32 %v4352, %v4359
      %v4369 = vadd.f32 %v4353, %v4363
      %v4370 = vmax.f32 %v4366, 0.0
      %v4371 = vmax.f32 %v4367, 0.0
      %v4372 = vmax.f32 %v4368, 0.0
      %v4373 = vmax.f32 %v4369, 0.0
      %s4374 = scalar_lea.vmem %s12, 1
      %v4375 = vld [vmem:[%s4374] ss:$4 sm:$0x3]
      %v4377 = vlaneseq
      %v4378 = vshrl.u32 %v4377, 7
      %v4379 = vsub.s32 0, %v4378
      %v4380 = vrot.slane %v4375, %v4379
      %v4381 = vlaneseq
      %v4382 = vshrl.u32 %v4381, 7
      %v4383 = vsub.s32 1, %v4382
      %v4384 = vrot.slane %v4375, %v4383
      %v4387 = vmul.f32 %v4370, %v4380
      %v4388 = vmul.f32 %v4371, %v4384
      %v4389 = vmul.f32 %v4372, %v4380
      %v4390 = vmul.f32 %v4373, %v4384
      %s4391 = scalar_lea.vmem %s12, 2
      %v4392 = vld [vmem:[%s4391] ss:$4 sm:$0x3]
      %v4394 = vlaneseq
      %v4395 = vshrl.u32 %v4394, 7
      %v4396 = vsub.s32 0, %v4395
      %v4397 = vrot.slane %v4392, %v4396
      %v4398 = vlaneseq
      %v4399 = vshrl.u32 %v4398, 7
      %v4400 = vsub.s32 1, %v4399
      %v4401 = vrot.slane %v4392, %v4400
      %v4404 = vadd.f32 %v4387, %v4397
      %v4405 = vadd.f32 %v4388, %v4401
      %v4406 = vadd.f32 %v4389, %v4397
      %v4407 = vadd.f32 %v4390, %v4401
      %v4408 = vld [vmem:[%s13] sm:$0xff]
      %v4409 = vld [vmem:[%s13 + $0x8] sm:$0xff]
      %v4410 = vld [vmem:[%s13 + $0x10] sm:$0xff]
      %v4411 = vld [vmem:[%s13 + $0x18] sm:$0xf]
      %vm4412 = vcmask 121856
      %v4414 = vsel %vm4412, %v4408, 0
      %v4417 = vsel %vm4412, %v4409, 0
      %v4420 = vsel %vm4412, %v4410, 0
      %v4423 = vsel %vm4412, %v4411, 0
      %v4426 = vsel %vm1452, %v4406, 0
      %v4429 = vsel %vm1452, %v4407, 0
      %4431 = vmatprep.subr.mxu0 0.0
      %4432 = vmatpush1.msra.mxu0 0.0
      %4433 = vmatprep.subr.mxu0 0.0
      %4434 = vmatpush1.msra.mxu0 0.0
      %4435 = vmatprep.subr.mxu0 0.0
      %4436 = vmatpush1.msra.mxu0 0.0
      %4437 = vmatprep.subr.mxu0 0.0
      %4438 = vmatpush1.msra.mxu0 0.0
      %4439 = vmatprep.subr.mxu0 0.0
      %4440 = vmatpush1.msra.mxu0 0.0
      %4441 = vmatprep.subr.mxu0 0.0
      %4442 = vmatpush1.msra.mxu0 0.0
      %4443 = vmatprep.subr.mxu0 0.0
      %4444 = vmatpush1.msra.mxu0 0.0
      %4445 = vmatprep.subr.mxu0 0.0
      %4446 = vmatpush1.msra.mxu0 0.0
      %4447 = vmatprep.subr.mxu0 0.0
      %4448 = vmatpush1.msra.mxu0 0.0
      %4449 = vmatprep.subr.mxu0 0.0
      %4450 = vmatpush1.msra.mxu0 0.0
      %4451 = vmatprep.subr.mxu0 0.0
      %4452 = vmatpush1.msra.mxu0 0.0
      %4453 = vmatprep.subr.mxu0 0.0
      %4454 = vmatpush1.msra.mxu0 0.0
      %4455 = vmatprep.subr.mxu0 0.0
      %4456 = vmatpush1.msra.mxu0 0.0
      %4457 = vmatprep.subr.mxu0 0.0
      %4458 = vmatpush1.msra.mxu0 0.0
      %4459 = vmatprep.subr.mxu0 %v4429
      %4460 = vmatpush1.msra.mxu0 %v4426
      %4461 = vmatprep.subr.mxu0 %v4405
      %4462 = vmatpush1.msra.mxu0 %v4404
      %4463 = vmatprep.subr.mxu0 0.0
      %4464 = vmatpush2.msra.mxu0 0.0
      %4465 = vmatprep.subr.mxu0 0.0
      %4466 = vmatpush2.msra.mxu0 0.0
      %4467 = vmatprep.subr.mxu0 0.0
      %4468 = vmatpush2.msra.mxu0 0.0
      %4469 = vmatprep.subr.mxu0 0.0
      %4470 = vmatpush2.msra.mxu0 0.0
      %4471 = vmatprep.subr.mxu0 0.0
      %4472 = vmatpush2.msra.mxu0 0.0
      %4473 = vmatprep.subr.mxu0 0.0
      %4474 = vmatpush2.msra.mxu0 0.0
      %4475 = vmatprep.subr.mxu0 0.0
      %4476 = vmatpush2.msra.mxu0 0.0
      %4477 = vmatprep.subr.mxu0 0.0
      %4478 = vmatpush2.msra.mxu0 0.0
      %4479 = vmatprep.subr.mxu0 0.0
      %4480 = vmatpush2.msra.mxu0 0.0
      %4481 = vmatprep.subr.mxu0 0.0
      %4482 = vmatpush2.msra.mxu0 0.0
      %4483 = vmatprep.subr.mxu0 0.0
      %4484 = vmatpush2.msra.mxu0 0.0
      %4485 = vmatprep.subr.mxu0 0.0
      %4486 = vmatpush2.msra.mxu0 0.0
      %4487 = vmatprep.subr.mxu0 0.0
      %4488 = vmatpush2.msra.mxu0 0.0
      %4489 = vmatprep.subr.mxu0 0.0
      %4490 = vmatpush2.msra.mxu0 0.0
      %4491 = vmatprep.subr.mxu0 0.0
      %4492 = vmatpush2.msra.mxu0 0.0
      %4493 = vmatprep.subr.mxu0 0.0
      %4494 = vmatpush2.msra.mxu0 0.0
      %4495 = vmatprep.mubr.f32.mxu0 0.0
      %4496 = vmatmul.mubr.f32.gmra.mxu0 %v4414
      %v4497 = vpop.f32.mrf.mxu0
      %v4498 = vadd.f32 0.0, %v4497
      %v4499 = vpop.f32.mrf.mxu0
      %v4500 = vadd.f32 0.0, %v4499
      %4501 = vmatprep.mubr.f32.mxu0 0.0
      %4502 = vmatmul.mubr.f32.gmra.mxu0 %v4417
      %v4503 = vpop.f32.mrf.mxu0
      %v4504 = vadd.f32 0.0, %v4503
      %v4505 = vpop.f32.mrf.mxu0
      %v4506 = vadd.f32 0.0, %v4505
      %4507 = vmatprep.mubr.f32.mxu0 0.0
      %4508 = vmatmul.mubr.f32.gmra.mxu0 %v4420
      %v4509 = vpop.f32.mrf.mxu0
      %v4510 = vadd.f32 0.0, %v4509
      %v4511 = vpop.f32.mrf.mxu0
      %v4512 = vadd.f32 0.0, %v4511
      %4513 = vmatprep.mubr.f32.mxu0 0.0
      %4514 = vmatmul.mubr.f32.gmra.mxu0 %v4423
      %v4515 = vpop.f32.mrf.mxu0
      %v4516 = vadd.f32 0.0, %v4515
      %v4517 = vpop.f32.mrf.mxu0
      %v4518 = vadd.f32 0.0, %v4517
      %4519 = vdwg.mxu0
      %v4520 = vld [vmem:[%s14] sm:$0xff]
      %v4521 = vld [vmem:[%s14 + $0x8] sm:$0xff]
      %v4522 = vld [vmem:[%s14 + $0x10] sm:$0xff]
      %v4523 = vld [vmem:[%s14 + $0x18] sm:$0xff]
      %v4524 = vld [vmem:[%s14 + $0x20] sm:$0xff]
      %v4525 = vld [vmem:[%s14 + $0x28] sm:$0xff]
      %v4526 = vld [vmem:[%s14 + $0x30] sm:$0xff]
      %v4527 = vld [vmem:[%s14 + $0x38] sm:$0xff]
      %v4528 = vld [vmem:[%s14 + $0x40] sm:$0xff]
      %v4529 = vld [vmem:[%s14 + $0x48] sm:$0xff]
      %v4530 = vld [vmem:[%s14 + $0x50] sm:$0xff]
      %v4531 = vld [vmem:[%s14 + $0x58] sm:$0xff]
      %v4532 = vld [vmem:[%s14 + $0x60] sm:$0xff]
      %v4533 = vld [vmem:[%s14 + $0x68] sm:$0xff]
      %v4534 = vld [vmem:[%s14 + $0x70] sm:$0xff]
      %v4535 = vld [vmem:[%s14 + $0x78] sm:$0xff]
      %v4536 = vld [vmem:[%s14 + $0x80] sm:$0xff]
      %v4537 = vld [vmem:[%s14 + $0x88] sm:$0xff]
      %v4538 = vld [vmem:[%s14 + $0x90] sm:$0xff]
      %v4539 = vld [vmem:[%s14 + $0x98] sm:$0xff]
      %v4540 = vld [vmem:[%s14 + $0xa0] sm:$0xff]
      %v4541 = vld [vmem:[%s14 + $0xa8] sm:$0xff]
      %v4542 = vld [vmem:[%s14 + $0xb0] sm:$0xff]
      %v4543 = vld [vmem:[%s14 + $0xb8] sm:$0xff]
      %v4544 = vld [vmem:[%s14 + $0xc0] sm:$0xff]
      %v4545 = vld [vmem:[%s14 + $0xc8] sm:$0xff]
      %v4546 = vld [vmem:[%s14 + $0xd0] sm:$0xff]
      %v4547 = vld [vmem:[%s14 + $0xd8] sm:$0xff]
      %v4548 = vld [vmem:[%s14 + $0xe0] sm:$0xff]
      %v4549 = vld [vmem:[%s14 + $0xe8] sm:$0xff]
      %s4550 = scalar_lea.vmem %s13, 32
      %v4551 = vld [vmem:[%s4550] sm:$0xff]
      %v4552 = vld [vmem:[%s4550 + $0x8] sm:$0xff]
      %v4553 = vld [vmem:[%s4550 + $0x10] sm:$0xff]
      %v4554 = vld [vmem:[%s4550 + $0x18] sm:$0xf]
      %v4556 = vsel %vm4412, %v4551, 0
      %v4559 = vsel %vm4412, %v4552, 0
      %v4562 = vsel %vm4412, %v4553, 0
      %v4565 = vsel %vm4412, %v4554, 0
      %4567 = vmatprep.subr.mxu0 0.0
      %4568 = vmatpush1.msra.mxu0 0.0
      %4569 = vmatprep.subr.mxu0 0.0
      %4570 = vmatpush1.msra.mxu0 0.0
      %4571 = vmatprep.subr.mxu0 0.0
      %4572 = vmatpush1.msra.mxu0 0.0
      %4573 = vmatprep.subr.mxu0 0.0
      %4574 = vmatpush1.msra.mxu0 0.0
      %4575 = vmatprep.subr.mxu0 0.0
      %4576 = vmatpush1.msra.mxu0 0.0
      %4577 = vmatprep.subr.mxu0 0.0
      %4578 = vmatpush1.msra.mxu0 0.0
      %4579 = vmatprep.subr.mxu0 0.0
      %4580 = vmatpush1.msra.mxu0 0.0
      %4581 = vmatprep.subr.mxu0 0.0
      %4582 = vmatpush1.msra.mxu0 0.0
      %4583 = vmatprep.subr.mxu0 0.0
      %4584 = vmatpush1.msra.mxu0 0.0
      %4585 = vmatprep.subr.mxu0 0.0
      %4586 = vmatpush1.msra.mxu0 0.0
      %4587 = vmatprep.subr.mxu0 0.0
      %4588 = vmatpush1.msra.mxu0 0.0
      %4589 = vmatprep.subr.mxu0 0.0
      %4590 = vmatpush1.msra.mxu0 0.0
      %4591 = vmatprep.subr.mxu0 0.0
      %4592 = vmatpush1.msra.mxu0 0.0
      %4593 = vmatprep.subr.mxu0 0.0
      %4594 = vmatpush1.msra.mxu0 0.0
      %4595 = vmatprep.subr.mxu0 %v4429
      %4596 = vmatpush1.msra.mxu0 %v4426
      %4597 = vmatprep.subr.mxu0 %v4405
      %4598 = vmatpush1.msra.mxu0 %v4404
      %4599 = vmatprep.subr.mxu0 0.0
      %4600 = vmatpush2.msra.mxu0 0.0
      %4601 = vmatprep.subr.mxu0 0.0
      %4602 = vmatpush2.msra.mxu0 0.0
      %4603 = vmatprep.subr.mxu0 0.0
      %4604 = vmatpush2.msra.mxu0 0.0
      %4605 = vmatprep.subr.mxu0 0.0
      %4606 = vmatpush2.msra.mxu0 0.0
      %4607 = vmatprep.subr.mxu0 0.0
      %4608 = vmatpush2.msra.mxu0 0.0
      %4609 = vmatprep.subr.mxu0 0.0
      %4610 = vmatpush2.msra.mxu0 0.0
      %4611 = vmatprep.subr.mxu0 0.0
      %4612 = vmatpush2.msra.mxu0 0.0
      %4613 = vmatprep.subr.mxu0 0.0
      %4614 = vmatpush2.msra.mxu0 0.0
      %4615 = vmatprep.subr.mxu0 0.0
      %4616 = vmatpush2.msra.mxu0 0.0
      %4617 = vmatprep.subr.mxu0 0.0
      %4618 = vmatpush2.msra.mxu0 0.0
      %4619 = vmatprep.subr.mxu0 0.0
      %4620 = vmatpush2.msra.mxu0 0.0
      %4621 = vmatprep.subr.mxu0 0.0
      %4622 = vmatpush2.msra.mxu0 0.0
      %4623 = vmatprep.subr.mxu0 0.0
      %4624 = vmatpush2.msra.mxu0 0.0
      %4625 = vmatprep.subr.mxu0 0.0
      %4626 = vmatpush2.msra.mxu0 0.0
      %4627 = vmatprep.subr.mxu0 0.0
      %4628 = vmatpush2.msra.mxu0 0.0
      %4629 = vmatprep.subr.mxu0 0.0
      %4630 = vmatpush2.msra.mxu0 0.0
      %4631 = vmatprep.mubr.f32.mxu0 0.0
      %4632 = vmatmul.mubr.f32.gmra.mxu0 %v4556
      %v4633 = vpop.f32.mrf.mxu0
      %v4634 = vadd.f32 0.0, %v4633
      %v4635 = vpop.f32.mrf.mxu0
      %v4636 = vadd.f32 0.0, %v4635
      %4637 = vmatprep.mubr.f32.mxu0 0.0
      %4638 = vmatmul.mubr.f32.gmra.mxu0 %v4559
      %v4639 = vpop.f32.mrf.mxu0
      %v4640 = vadd.f32 0.0, %v4639
      %v4641 = vpop.f32.mrf.mxu0
      %v4642 = vadd.f32 0.0, %v4641
      %4643 = vmatprep.mubr.f32.mxu0 0.0
      %4644 = vmatmul.mubr.f32.gmra.mxu0 %v4562
      %v4645 = vpop.f32.mrf.mxu0
      %v4646 = vadd.f32 0.0, %v4645
      %v4647 = vpop.f32.mrf.mxu0
      %v4648 = vadd.f32 0.0, %v4647
      %4649 = vmatprep.mubr.f32.mxu0 0.0
      %4650 = vmatmul.mubr.f32.gmra.mxu0 %v4565
      %v4651 = vpop.f32.mrf.mxu0
      %v4652 = vadd.f32 0.0, %v4651
      %v4653 = vpop.f32.mrf.mxu0
      %v4654 = vadd.f32 0.0, %v4653
      %4655 = vdwg.mxu0
      %s4656 = scalar_lea.vmem %s14, 240
      %v4657 = vld [vmem:[%s4656] sm:$0xff]
      %v4658 = vld [vmem:[%s4656 + $0x8] sm:$0xff]
      %v4659 = vld [vmem:[%s4656 + $0x10] sm:$0xff]
      %v4660 = vld [vmem:[%s4656 + $0x18] sm:$0xff]
      %v4661 = vld [vmem:[%s4656 + $0x20] sm:$0xff]
      %v4662 = vld [vmem:[%s4656 + $0x28] sm:$0xff]
      %v4663 = vld [vmem:[%s4656 + $0x30] sm:$0xff]
      %v4664 = vld [vmem:[%s4656 + $0x38] sm:$0xff]
      %v4665 = vld [vmem:[%s4656 + $0x40] sm:$0xff]
      %v4666 = vld [vmem:[%s4656 + $0x48] sm:$0xff]
      %v4667 = vld [vmem:[%s4656 + $0x50] sm:$0xff]
      %v4668 = vld [vmem:[%s4656 + $0x58] sm:$0xff]
      %v4669 = vld [vmem:[%s4656 + $0x60] sm:$0xff]
      %v4670 = vld [vmem:[%s4656 + $0x68] sm:$0xff]
      %v4671 = vld [vmem:[%s4656 + $0x70] sm:$0xff]
      %v4672 = vld [vmem:[%s4656 + $0x78] sm:$0xff]
      %v4673 = vld [vmem:[%s4656 + $0x80] sm:$0xff]
      %v4674 = vld [vmem:[%s4656 + $0x88] sm:$0xff]
      %v4675 = vld [vmem:[%s4656 + $0x90] sm:$0xff]
      %v4676 = vld [vmem:[%s4656 + $0x98] sm:$0xff]
      %v4677 = vld [vmem:[%s4656 + $0xa0] sm:$0xff]
      %v4678 = vld [vmem:[%s4656 + $0xa8] sm:$0xff]
      %v4679 = vld [vmem:[%s4656 + $0xb0] sm:$0xff]
      %v4680 = vld [vmem:[%s4656 + $0xb8] sm:$0xff]
      %v4681 = vld [vmem:[%s4656 + $0xc0] sm:$0xff]
      %v4682 = vld [vmem:[%s4656 + $0xc8] sm:$0xff]
      %v4683 = vld [vmem:[%s4656 + $0xd0] sm:$0xff]
      %v4684 = vld [vmem:[%s4656 + $0xd8] sm:$0xff]
      %v4685 = vld [vmem:[%s4656 + $0xe0] sm:$0xff]
      %v4686 = vld [vmem:[%s4656 + $0xe8] sm:$0xff]
      %vm4687 = vcmask 916480
      %v4689 = vsel %vm4687, %v4636, 0
      %v4692 = vsel %vm4687, %v4642, 0
      %v4695 = vsel %vm4687, %v4648, 0
      %v4698 = vsel %vm4687, %v4654, 0
      %4700 = vmatprep.subr.mxu0 0.0
      %4701 = vmatpush1.msra.mxu0 %v4672
      %4702 = vmatprep.subr.mxu0 0.0
      %4703 = vmatpush1.msra.mxu0 %v4671
      %4704 = vmatprep.subr.mxu0 0.0
      %4705 = vmatpush1.msra.mxu0 %v4670
      %4706 = vmatprep.subr.mxu0 0.0
      %4707 = vmatpush1.msra.mxu0 %v4669
      %4708 = vmatprep.subr.mxu0 0.0
      %4709 = vmatpush1.msra.mxu0 %v4668
      %4710 = vmatprep.subr.mxu0 0.0
      %4711 = vmatpush1.msra.mxu0 %v4667
      %4712 = vmatprep.subr.mxu0 0.0
      %4713 = vmatpush1.msra.mxu0 %v4666
      %4714 = vmatprep.subr.mxu0 0.0
      %4715 = vmatpush1.msra.mxu0 %v4665
      %4716 = vmatprep.subr.mxu0 0.0
      %4717 = vmatpush1.msra.mxu0 %v4664
      %4718 = vmatprep.subr.mxu0 0.0
      %4719 = vmatpush1.msra.mxu0 %v4663
      %4720 = vmatprep.subr.mxu0 0.0
      %4721 = vmatpush1.msra.mxu0 %v4662
      %4722 = vmatprep.subr.mxu0 0.0
      %4723 = vmatpush1.msra.mxu0 %v4661
      %4724 = vmatprep.subr.mxu0 0.0
      %4725 = vmatpush1.msra.mxu0 %v4660
      %4726 = vmatprep.subr.mxu0 0.0
      %4727 = vmatpush1.msra.mxu0 %v4659
      %4728 = vmatprep.subr.mxu0 0.0
      %4729 = vmatpush1.msra.mxu0 %v4658
      %4730 = vmatprep.subr.mxu0 0.0
      %4731 = vmatpush1.msra.mxu0 %v4657
      %4732 = vmatprep.subr.mxu0 0.0
      %4733 = vmatpush2.msra.mxu0 0.0
      %4734 = vmatprep.subr.mxu0 0.0
      %4735 = vmatpush2.msra.mxu0 0.0
      %4736 = vmatprep.subr.mxu0 0.0
      %4737 = vmatpush2.msra.mxu0 %v4686
      %4738 = vmatprep.subr.mxu0 0.0
      %4739 = vmatpush2.msra.mxu0 %v4685
      %4740 = vmatprep.subr.mxu0 0.0
      %4741 = vmatpush2.msra.mxu0 %v4684
      %4742 = vmatprep.subr.mxu0 0.0
      %4743 = vmatpush2.msra.mxu0 %v4683
      %4744 = vmatprep.subr.mxu0 0.0
      %4745 = vmatpush2.msra.mxu0 %v4682
      %4746 = vmatprep.subr.mxu0 0.0
      %4747 = vmatpush2.msra.mxu0 %v4681
      %4748 = vmatprep.subr.mxu0 0.0
      %4749 = vmatpush2.msra.mxu0 %v4680
      %4750 = vmatprep.subr.mxu0 0.0
      %4751 = vmatpush2.msra.mxu0 %v4679
      %4752 = vmatprep.subr.mxu0 0.0
      %4753 = vmatpush2.msra.mxu0 %v4678
      %4754 = vmatprep.subr.mxu0 0.0
      %4755 = vmatpush2.msra.mxu0 %v4677
      %4756 = vmatprep.subr.mxu0 0.0
      %4757 = vmatpush2.msra.mxu0 %v4676
      %4758 = vmatprep.subr.mxu0 0.0
      %4759 = vmatpush2.msra.mxu0 %v4675
      %4760 = vmatprep.subr.mxu0 0.0
      %4761 = vmatpush2.msra.mxu0 %v4674
      %4762 = vmatprep.subr.mxu0 0.0
      %4763 = vmatpush2.msra.mxu0 %v4673
      %4764 = vmatprep.mubr.f32.mxu0 %v4689
      %4765 = vmatmul.mubr.f32.gmra.mxu0 %v4634
      %v4766 = vpop.f32.mrf.mxu0
      %v4767 = vadd.f32 0.0, %v4766
      %v4768 = vpop.f32.mrf.mxu0
      %4769 = vmatprep.mubr.f32.mxu0 %v4692
      %4770 = vmatmul.mubr.f32.gmra.mxu0 %v4640
      %v4771 = vpop.f32.mrf.mxu0
      %v4772 = vadd.f32 0.0, %v4771
      %v4773 = vpop.f32.mrf.mxu0
      %4774 = vmatprep.mubr.f32.mxu0 %v4695
      %4775 = vmatmul.mubr.f32.gmra.mxu0 %v4646
      %v4776 = vpop.f32.mrf.mxu0
      %v4777 = vadd.f32 0.0, %v4776
      %v4778 = vpop.f32.mrf.mxu0
      %4779 = vmatprep.mubr.f32.mxu0 %v4698
      %4780 = vmatmul.mubr.f32.gmra.mxu0 %v4652
      %v4781 = vpop.f32.mrf.mxu0
      %v4782 = vadd.f32 0.0, %v4781
      %v4783 = vpop.f32.mrf.mxu0
      %4784 = vdwg.mxu0
      %v4786 = vsel %vm4687, %v4500, 0
      %v4789 = vsel %vm4687, %v4506, 0
      %v4792 = vsel %vm4687, %v4512, 0
      %v4795 = vsel %vm4687, %v4518, 0
      %4797 = vmatprep.subr.mxu0 0.0
      %4798 = vmatpush1.msra.mxu0 %v4535
      %4799 = vmatprep.subr.mxu0 0.0
      %4800 = vmatpush1.msra.mxu0 %v4534
      %4801 = vmatprep.subr.mxu0 0.0
      %4802 = vmatpush1.msra.mxu0 %v4533
      %4803 = vmatprep.subr.mxu0 0.0
      %4804 = vmatpush1.msra.mxu0 %v4532
      %4805 = vmatprep.subr.mxu0 0.0
      %4806 = vmatpush1.msra.mxu0 %v4531
      %4807 = vmatprep.subr.mxu0 0.0
      %4808 = vmatpush1.msra.mxu0 %v4530
      %4809 = vmatprep.subr.mxu0 0.0
      %4810 = vmatpush1.msra.mxu0 %v4529
      %4811 = vmatprep.subr.mxu0 0.0
      %4812 = vmatpush1.msra.mxu0 %v4528
      %4813 = vmatprep.subr.mxu0 0.0
      %4814 = vmatpush1.msra.mxu0 %v4527
      %4815 = vmatprep.subr.mxu0 0.0
      %4816 = vmatpush1.msra.mxu0 %v4526
      %4817 = vmatprep.subr.mxu0 0.0
      %4818 = vmatpush1.msra.mxu0 %v4525
      %4819 = vmatprep.subr.mxu0 0.0
      %4820 = vmatpush1.msra.mxu0 %v4524
      %4821 = vmatprep.subr.mxu0 0.0
      %4822 = vmatpush1.msra.mxu0 %v4523
      %4823 = vmatprep.subr.mxu0 0.0
      %4824 = vmatpush1.msra.mxu0 %v4522
      %4825 = vmatprep.subr.mxu0 0.0
      %4826 = vmatpush1.msra.mxu0 %v4521
      %4827 = vmatprep.subr.mxu0 0.0
      %4828 = vmatpush1.msra.mxu0 %v4520
      %4829 = vmatprep.subr.mxu0 0.0
      %4830 = vmatpush2.msra.mxu0 0.0
      %4831 = vmatprep.subr.mxu0 0.0
      %4832 = vmatpush2.msra.mxu0 0.0
      %4833 = vmatprep.subr.mxu0 0.0
      %4834 = vmatpush2.msra.mxu0 %v4549
      %4835 = vmatprep.subr.mxu0 0.0
      %4836 = vmatpush2.msra.mxu0 %v4548
      %4837 = vmatprep.subr.mxu0 0.0
      %4838 = vmatpush2.msra.mxu0 %v4547
      %4839 = vmatprep.subr.mxu0 0.0
      %4840 = vmatpush2.msra.mxu0 %v4546
      %4841 = vmatprep.subr.mxu0 0.0
      %4842 = vmatpush2.msra.mxu0 %v4545
      %4843 = vmatprep.subr.mxu0 0.0
      %4844 = vmatpush2.msra.mxu0 %v4544
      %4845 = vmatprep.subr.mxu0 0.0
      %4846 = vmatpush2.msra.mxu0 %v4543
      %4847 = vmatprep.subr.mxu0 0.0
      %4848 = vmatpush2.msra.mxu0 %v4542
      %4849 = vmatprep.subr.mxu0 0.0
      %4850 = vmatpush2.msra.mxu0 %v4541
      %4851 = vmatprep.subr.mxu0 0.0
      %4852 = vmatpush2.msra.mxu0 %v4540
      %4853 = vmatprep.subr.mxu0 0.0
      %4854 = vmatpush2.msra.mxu0 %v4539
      %4855 = vmatprep.subr.mxu0 0.0
      %4856 = vmatpush2.msra.mxu0 %v4538
      %4857 = vmatprep.subr.mxu0 0.0
      %4858 = vmatpush2.msra.mxu0 %v4537
      %4859 = vmatprep.subr.mxu0 0.0
      %4860 = vmatpush2.msra.mxu0 %v4536
      %4861 = vmatprep.mubr.f32.mxu0 %v4786
      %4862 = vmatmul.mubr.f32.gmra.mxu0 %v4498
      %v4863 = vpop.f32.mrf.mxu0
      %v4864 = vadd.f32 %v4767, %v4863
      %v4865 = vpop.f32.mrf.mxu0
      %4866 = vmatprep.mubr.f32.mxu0 %v4789
      %4867 = vmatmul.mubr.f32.gmra.mxu0 %v4504
      %v4868 = vpop.f32.mrf.mxu0
      %v4869 = vadd.f32 %v4772, %v4868
      %v4870 = vpop.f32.mrf.mxu0
      %4871 = vmatprep.mubr.f32.mxu0 %v4792
      %4872 = vmatmul.mubr.f32.gmra.mxu0 %v4510
      %v4873 = vpop.f32.mrf.mxu0
      %v4874 = vadd.f32 %v4777, %v4873
      %v4875 = vpop.f32.mrf.mxu0
      %4876 = vmatprep.mubr.f32.mxu0 %v4795
      %4877 = vmatmul.mubr.f32.gmra.mxu0 %v4516
      %v4878 = vpop.f32.mrf.mxu0
      %v4879 = vadd.f32 %v4782, %v4878
      %v4880 = vpop.f32.mrf.mxu0
      %4881 = vdwg.mxu0
      %v4882 = vld [vmem:[%s15] sm:$0x1]
      %v4884 = vlaneseq
      %v4885 = vshrl.u32 %v4884, 7
      %v4886 = vsub.s32 0, %v4885
      %v4887 = vrot.slane %v4882, %v4886
      %v4889 = vadd.f32 %v4864, %v4887
      %v4890 = vadd.f32 %v4869, %v4887
      %v4891 = vadd.f32 %v4874, %v4887
      %v4892 = vadd.f32 %v4879, %v4887
      %v4893 = vtanh.pop %v4889
      %v4894 = vtanh.pop %v4890
      %v4895 = vtanh.pop %v4891
      %v4896 = vtanh.pop %v4892
      %vm4897 = vcmask 687104
      %4898 = vst.msk [vmem:[%s521] sm:$0xff] %vm4897, %v4893
      %4899 = vst.msk [vmem:[%s521 + $0x8] sm:$0xff] %vm4897, %v4894
      %4900 = vst.msk [vmem:[%s521 + $0x10] sm:$0xff] %vm4897, %v4895
      %vm4901 = vcmask 683008
      %4902 = vst.msk [vmem:[%s521 + $0x18] sm:$0xf] %vm4901, %v4896
      %p4903 = scmp.lt.s32.totalorder %s27, 1
      %s4904 = scalar_select %p4903, %s27, 1
      %s4905 = smul.addr %s4904, 4
      %s4906 = smul.addr %s4905, 8
      %s4907 = scalar_lea.vmem %s16, %s4906
      // Predicated region
      $region85: #{autoencoder_forward.1} parent=83 // pred_check
        %p4908 = pneg %p386
      $region86: #{autoencoder_forward.1} parent=83 // pred_check_branch
        %4910 = sbr.rel (%p4908) target = $region88
      $region87: #{autoencoder_forward.1} parent=83 // pred_region
        _
      $region88: #{autoencoder_forward.1} parent=83 // pred_fallthru
        _
    $region84: #{autoencoder_forward.1} parent=5 // pred_fallthru
      _
    %p4911 = scmp.le.s32.totalorder 2, %s22
    // Predicated region
    $region89: #{autoencoder_forward.1} parent=5 // pred_check
      %p4912 = pneg %p4911
    $region90: #{autoencoder_forward.1} parent=5 // pred_check_branch
      %4914 = sbr.rel (%p4912) target = $region92
    $region91: #{autoencoder_forward.1} parent=5 // pred_region
      %s4915 = ssub.s32 %s22, 2
      // Predicated region
      $region93: #{autoencoder_forward.1} parent=91 // pred_check
        %p4916 = pneg %p392
      $region94: #{autoencoder_forward.1} parent=91 // pred_check_branch
        %4918 = sbr.rel (%p4916) target = $region96
      $region95: #{autoencoder_forward.1} parent=91 // pred_region
        %p4919 = scmp.lt.s32.totalorder %s28, 1
        %s4920 = scalar_select %p4919, %s28, 1
        %s4921 = smul.addr %s4920, 4
        %s4922 = smul.addr %s4921, 8
        %s4923 = scalar_lea.vmem %s16, %s4922
      $region96: #{autoencoder_forward.1} parent=91 // pred_fallthru
        _
    $region92: #{autoencoder_forward.1} parent=5 // pred_fallthru
      _
  $region6: #{autoencoder_forward.1} parent=0 // loop_footer
    %s26 = sadd.s32 1, %s22
  $region7: #{autoencoder_forward.1} parent=0 // loop_footer_branch
    %21 = sbr.rel target = $region3
  $region8: #{autoencoder_forward.1} parent=0 // loop_exit
    _

</llo_original>
